<compile_context>
chip_gen: v7x
topology: tpu7x:2x2x1
jax: 0.10.0
libtpu: 0.0.40
codegen_flags: <defaults>
</compile_context>

<pallas_src>
import functools

import jax
import jax.numpy as jnp
from jax.experimental import pallas as pl
from jax.experimental.pallas import tpu as pltpu


def _fused_kernel(x_ref, w_ref, s_ref, b_ref, o_ref, *, th, f, w_in, wp, c_out):
    """One (batch, row-band) step of fused PixelUnshuffle + 1x1 conv.

    x_ref: (c_in, th*f*w_in)   contiguous band of input rows, lane-dense
    w_ref: (f*f, c_out, c_in)  per-tap weight matrices, (fh, fw) order
    s_ref: (f, w_in, wp)       0/1 column de-interleave matrices (per fw)
    b_ref: (c_out, 1)          bias (f32)
    o_ref: (c_out, th*wp)      lane-dense output band
    """
    bias = b_ref[...]                                   # (c_out, 1), f32
    # Resident, tiny: load all f*f weight taps and f selection matrices once.
    wk = [w_ref[i] for i in range(f * f)]               # each (c_out, c_in), f32
    sel = [s_ref[i] for i in range(f)]                  # each (w_in, wp), x.dtype

    for oh in range(th):                                # static unroll (th is small)
        acc = jnp.zeros((c_out, wp), jnp.float32)
        for fh in range(f):
            # Input row (oh*f + fh) of this band: a static contiguous lane slice.
            row = x_ref[:, pl.ds((oh * f + fh) * w_in, w_in)]        # (c_in, w_in)
            for fw in range(f):
                # De-interleave columns ow*f + fw -> ow on the MXU.
                z = jnp.dot(row, sel[fw],
                            preferred_element_type=jnp.float32)       # (c_in, wp)
                # Apply the (c_out, c_in) weight tap for (fh, fw).
                acc = acc + jnp.dot(wk[fh * f + fw], z,
                                    preferred_element_type=jnp.float32)
        o_ref[:, pl.ds(oh * wp, wp)] = (acc + bias).astype(o_ref.dtype)


def _pick_rows_per_band(hp, wp, w_in, c_in, f, itemsize, band_budget_bytes,
                        max_unroll=32, min_bands=2):
    """Output rows per grid step: legal block shapes, sized against the budget."""
    s_in_full = hp * f * w_in        # = H*W
    s_out_full = hp * wp
    legal = []
    for th in range(1, hp + 1):
        if hp % th:
            continue
        band = th * f * w_in
        ob = th * wp
        in_ok = (band % 128 == 0) or (band == s_in_full)
        out_ok = (ob % 128 == 0) or (ob == s_out_full)
        if in_ok and out_ok:
            legal.append(th)
    # Non-empty: th == hp is always legal (full-array blocks on both sides).
    fits = [th for th in legal
            if th <= max_unroll and c_in * th * f * w_in * itemsize <= band_budget_bytes]
    if fits:
        # Prefer >=min_bands steps along the band axis (keeps both v7x TCs and
        # the DMA double-buffer busy); otherwise take the biggest fitting band.
        multi = [th for th in fits if hp // th >= min_bands]
        return max(multi) if multi else max(fits)
    return min(legal)


def _vmem_limit_bytes(in_block, out_block, resident, phys_vmem):
    # <=56 MiB scoped on v7x (64 MiB physical), up to ~100 MiB on v5e/v6e.
    cap = (56 << 20) if phys_vmem <= (64 << 20) else (100 << 20)
    need = 2 * (in_block + out_block) + resident + (8 << 20)
    return int(min(max(need, 32 << 20), cap))


@functools.partial(jax.jit, static_argnames=("factor",))
def downsample_forward(x, weight, bias, *, factor=2):
    """x: (N, C_in, H, W); weight: (c_out, C_in*f^2, 1, 1); bias: (c_out,)."""
    n, c_in, h, w_in = x.shape
    f = factor
    hp, wp = h // f, w_in // f
    c_out = weight.shape[0]
    s_out = hp * wp
    itemsize = jnp.dtype(x.dtype).itemsize

    try:
        phys_vmem = int(getattr(pltpu.get_tpu_info(), "vmem_capacity_bytes", 128 << 20))
    except Exception:
        phys_vmem = 128 << 20
    # ~2-4 MiB of input per grid step amortizes the ~0.35us fixed step cost.
    band_budget = (2 << 20) if phys_vmem <= (64 << 20) else (4 << 20)

    th = _pick_rows_per_band(hp, wp, w_in, c_in, f, itemsize, band_budget)
    n_bands = hp // th
    band = th * f * w_in

    # Free, contiguous view: NO HBM rearrangement before the kernel.
    x3 = x.reshape(n, c_in, h * w_in)

    # Tiny host-side weight prep: per-tap (c_out, c_in) matrices, in the
    # (fh, fw) order matching PixelUnshuffle's channel order c*f^2 + fh*f + fw.
    w_taps = jnp.transpose(weight.reshape(c_out, c_in, f, f), (2, 3, 0, 1))
    w_taps = w_taps.reshape(f * f, c_out, c_in).astype(jnp.float32)
    b2 = bias.reshape(c_out, 1).astype(jnp.float32)

    # Per-fw de-interleave matrices: sel[fw, wi, ow] = (wi == ow*f + fw).
    wi_idx = jax.lax.broadcasted_iota(jnp.int32, (f, w_in, wp), 1)
    ow_idx = jax.lax.broadcasted_iota(jnp.int32, (f, w_in, wp), 2)
    fw_idx = jax.lax.broadcasted_iota(jnp.int32, (f, w_in, wp), 0)
    sel = (wi_idx == ow_idx * f + fw_idx).astype(x.dtype)

    in_block = c_in * band * itemsize
    out_block = c_out * th * wp * itemsize
    resident = (w_taps.size + b2.size) * 4 + sel.size * itemsize
    vmem_limit = _vmem_limit_bytes(in_block, out_block, resident, phys_vmem)

    kernel = functools.partial(
        _fused_kernel, th=th, f=f, w_in=w_in, wp=wp, c_out=c_out)

    y = pl.pallas_call(
        kernel,
        out_shape=jax.ShapeDtypeStruct((n, c_out, s_out), x.dtype),
        grid_spec=pltpu.PrefetchScalarGridSpec(
            num_scalar_prefetch=0,
            grid=(n, n_bands),
            in_specs=[
                pl.BlockSpec((None, c_in, band), lambda ni, bi: (ni, 0, bi)),
                pl.BlockSpec((f * f, c_out, c_in), lambda ni, bi: (0, 0, 0)),
                pl.BlockSpec((f, w_in, wp), lambda ni, bi: (0, 0, 0)),
                pl.BlockSpec((c_out, 1), lambda ni, bi: (0, 0)),
            ],
            out_specs=pl.BlockSpec((None, c_out, th * wp),
                                   lambda ni, bi: (ni, 0, bi)),
        ),
        compiler_params=pltpu.CompilerParams(
            dimension_semantics=("parallel", "parallel"),
            vmem_limit_bytes=vmem_limit,
        ),
    )(x3, w_taps, sel, b2)

    # (N, c_out, H'*W') -> (N, c_out, H', W') is a free, contiguous reshape.
    return y.reshape(n, c_out, hp, wp)


# ----------------------------- reference path ------------------------------

def pixel_unshuffle(x, factor):
    n, c, h, w = x.shape
    f = factor
    x = x.reshape(n, c, h // f, f, w // f, f)
    x = jnp.transpose(x, (0, 1, 3, 5, 2, 4))
    return x.reshape(n, c * f * f, h // f, w // f)


def downsample_reference(x, weight, bias, factor=2):
    xu = pixel_unshuffle(x, factor)                  # (N, K, H', W')
    wk = weight.reshape(weight.shape[0], -1)         # (c_out, K)
    return jnp.einsum("nkhw,ok->nohw", xu, wk) + bias[None, :, None, None]


if __name__ == "__main__":
    key = jax.random.PRNGKey(0)
    k_x, k_w, k_b = jax.random.split(key, 3)

    N, C_IN, H, W = 2, 4, 16, 16
    FACTOR = 2
    C_OUT = 8
    K = C_IN * FACTOR * FACTOR

    x = jax.random.normal(k_x, (N, C_IN, H, W), dtype=jnp.float32)
    # Deterministic synthetic conv params (shapes from nn.Conv2d(C_IN*f^2, C_OUT, 1)).
    weight = jax.random.normal(k_w, (C_OUT, K, 1, 1), dtype=jnp.float32) * 0.1
    bias = jax.random.normal(k_b, (C_OUT,), dtype=jnp.float32) * 0.1

    out = downsample_forward(x, weight, bias, factor=FACTOR)
    out = jax.block_until_ready(out)

    ref = downsample_reference(x, weight, bias, factor=FACTOR)
    assert out.shape == (N, C_OUT, H // FACTOR, W // FACTOR)
    assert jnp.allclose(out, ref, atol=1e-5, rtol=1e-5)

    print("KERNEL_OK")
</pallas_src>

<mosaic_0001>
module attributes {stable_mosaic.version = 11 : i64} {
  func.func @_fused_kernel(%arg0: i32, %arg1: i32, %arg2: memref<1x4x256xf32, #tpu.memory_space<vmem>>, %arg3: memref<4x8x4xf32, #tpu.memory_space<vmem>>, %arg4: memref<2x16x8xf32, #tpu.memory_space<vmem>>, %arg5: memref<8x1xf32, #tpu.memory_space<vmem>>, %arg6: memref<1x8x64xf32, #tpu.memory_space<vmem>>) attributes {dimension_semantics = [#tpu.dimension_semantics<parallel>, #tpu.dimension_semantics<parallel>], iteration_bounds = array<i64: 2, 1>, scalar_prefetch = 0 : i64, scratch_operands = 0 : i64, tpu.core_type = #tpu.core_type<tc>, window_params = [{transform_indices = @transform_0, window_bounds = array<i64: 1, 4, 256>}, {pipeline_mode = #tpu.pipeline_mode<synchronous>, transform_indices = @transform_1, window_bounds = array<i64: 4, 8, 4>}, {pipeline_mode = #tpu.pipeline_mode<synchronous>, transform_indices = @transform_2, window_bounds = array<i64: 2, 16, 8>}, {pipeline_mode = #tpu.pipeline_mode<synchronous>, transform_indices = @transform_3, window_bounds = array<i64: 8, 1>}, {transform_indices = @transform_4, window_bounds = array<i64: 1, 8, 64>}]} {
    %c0 = arith.constant 0 : index
    %c0_0 = arith.constant 0 : index
    %0 = vector.load %arg5[%c0, %c0_0] : memref<8x1xf32, #tpu.memory_space<vmem>>, vector<8x1xf32>
    %c0_1 = arith.constant 0 : index
    %c0_2 = arith.constant 0 : index
    %c0_3 = arith.constant 0 : index
    %1 = vector.load %arg3[%c0_1, %c0_2, %c0_3] : memref<4x8x4xf32, #tpu.memory_space<vmem>>, vector<1x8x4xf32>
    %2 = vector.shape_cast %1 : vector<1x8x4xf32> to vector<8x4xf32>
    %c1 = arith.constant 1 : index
    %c0_4 = arith.constant 0 : index
    %c0_5 = arith.constant 0 : index
    %3 = vector.load %arg3[%c1, %c0_4, %c0_5] : memref<4x8x4xf32, #tpu.memory_space<vmem>>, vector<1x8x4xf32>
    %4 = vector.shape_cast %3 : vector<1x8x4xf32> to vector<8x4xf32>
    %c2 = arith.constant 2 : index
    %c0_6 = arith.constant 0 : index
    %c0_7 = arith.constant 0 : index
    %5 = vector.load %arg3[%c2, %c0_6, %c0_7] : memref<4x8x4xf32, #tpu.memory_space<vmem>>, vector<1x8x4xf32>
    %6 = vector.shape_cast %5 : vector<1x8x4xf32> to vector<8x4xf32>
    %c3 = arith.constant 3 : index
    %c0_8 = arith.constant 0 : index
    %c0_9 = arith.constant 0 : index
    %7 = vector.load %arg3[%c3, %c0_8, %c0_9] : memref<4x8x4xf32, #tpu.memory_space<vmem>>, vector<1x8x4xf32>
    %8 = vector.shape_cast %7 : vector<1x8x4xf32> to vector<8x4xf32>
    %c0_10 = arith.constant 0 : index
    %c0_11 = arith.constant 0 : index
    %c0_12 = arith.constant 0 : index
    %9 = vector.load %arg4[%c0_10, %c0_11, %c0_12] : memref<2x16x8xf32, #tpu.memory_space<vmem>>, vector<1x16x8xf32>
    %10 = vector.shape_cast %9 : vector<1x16x8xf32> to vector<16x8xf32>
    %c1_13 = arith.constant 1 : index
    %c0_14 = arith.constant 0 : index
    %c0_15 = arith.constant 0 : index
    %11 = vector.load %arg4[%c1_13, %c0_14, %c0_15] : memref<2x16x8xf32, #tpu.memory_space<vmem>>, vector<1x16x8xf32>
    %12 = vector.shape_cast %11 : vector<1x16x8xf32> to vector<16x8xf32>
    %cst = arith.constant 0.000000e+00 : f32
    %13 = vector.broadcast %cst : f32 to vector<8x8xf32>
    %c0_16 = arith.constant 0 : index
    %c0_17 = arith.constant 0 : index
    %c0_18 = arith.constant 0 : index
    %14 = vector.load %arg2[%c0_16, %c0_17, %c0_18] : memref<1x4x256xf32, #tpu.memory_space<vmem>>, vector<1x4x16xf32>
    %15 = vector.shape_cast %14 : vector<1x4x16xf32> to vector<4x16xf32>
    %cst_19 = arith.constant dense<0.000000e+00> : vector<4x8xf32>
    %16 = tpu.matmul %15, %10, %cst_19 {dimension_numbers = #tpu.dot_dimension_numbers<[1], [0], [0], [1], [0, 0, 1, 1], [], []>} : vector<4x16xf32>, vector<16x8xf32>, vector<4x8xf32> -> vector<4x8xf32>
    %cst_20 = arith.constant dense<0.000000e+00> : vector<8x8xf32>
    %17 = tpu.matmul %2, %16, %cst_20 {dimension_numbers = #tpu.dot_dimension_numbers<[1], [0], [0], [1], [0, 0, 1, 1], [], []>} : vector<8x4xf32>, vector<4x8xf32>, vector<8x8xf32> -> vector<8x8xf32>
    %18 = arith.addf %13, %17 : vector<8x8xf32>
    %cst_21 = arith.constant dense<0.000000e+00> : vector<4x8xf32>
    %19 = tpu.matmul %15, %12, %cst_21 {dimension_numbers = #tpu.dot_dimension_numbers<[1], [0], [0], [1], [0, 0, 1, 1], [], []>} : vector<4x16xf32>, vector<16x8xf32>, vector<4x8xf32> -> vector<4x8xf32>
    %cst_22 = arith.constant dense<0.000000e+00> : vector<8x8xf32>
    %20 = tpu.matmul %4, %19, %cst_22 {dimension_numbers = #tpu.dot_dimension_numbers<[1], [0], [0], [1], [0, 0, 1, 1], [], []>} : vector<8x4xf32>, vector<4x8xf32>, vector<8x8xf32> -> vector<8x8xf32>
    %21 = arith.addf %18, %20 : vector<8x8xf32>
    %c0_23 = arith.constant 0 : index
    %c0_24 = arith.constant 0 : index
    %c16 = arith.constant 16 : index
    %22 = vector.load %arg2[%c0_23, %c0_24, %c16] : memref<1x4x256xf32, #tpu.memory_space<vmem>>, vector<1x4x16xf32>
    %23 = vector.shape_cast %22 : vector<1x4x16xf32> to vector<4x16xf32>
    %cst_25 = arith.constant dense<0.000000e+00> : vector<4x8xf32>
    %24 = tpu.matmul %23, %10, %cst_25 {dimension_numbers = #tpu.dot_dimension_numbers<[1], [0], [0], [1], [0, 0, 1, 1], [], []>} : vector<4x16xf32>, vector<16x8xf32>, vector<4x8xf32> -> vector<4x8xf32>
    %cst_26 = arith.constant dense<0.000000e+00> : vector<8x8xf32>
    %25 = tpu.matmul %6, %24, %cst_26 {dimension_numbers = #tpu.dot_dimension_numbers<[1], [0], [0], [1], [0, 0, 1, 1], [], []>} : vector<8x4xf32>, vector<4x8xf32>, vector<8x8xf32> -> vector<8x8xf32>
    %26 = arith.addf %21, %25 : vector<8x8xf32>
    %cst_27 = arith.constant dense<0.000000e+00> : vector<4x8xf32>
    %27 = tpu.matmul %23, %12, %cst_27 {dimension_numbers = #tpu.dot_dimension_numbers<[1], [0], [0], [1], [0, 0, 1, 1], [], []>} : vector<4x16xf32>, vector<16x8xf32>, vector<4x8xf32> -> vector<4x8xf32>
    %cst_28 = arith.constant dense<0.000000e+00> : vector<8x8xf32>
    %28 = tpu.matmul %8, %27, %cst_28 {dimension_numbers = #tpu.dot_dimension_numbers<[1], [0], [0], [1], [0, 0, 1, 1], [], []>} : vector<8x4xf32>, vector<4x8xf32>, vector<8x8xf32> -> vector<8x8xf32>
    %29 = arith.addf %26, %28 : vector<8x8xf32>
    %30 = vector.broadcast %0 : vector<8x1xf32> to vector<8x8xf32>
    %31 = arith.addf %29, %30 : vector<8x8xf32>
    %c0_29 = arith.constant 0 : index
    %c0_30 = arith.constant 0 : index
    %c0_31 = arith.constant 0 : index
    %32 = vector.load %arg6[%c0_29, %c0_30, %c0_31] : memref<1x8x64xf32, #tpu.memory_space<vmem>>, vector<1x8x8xf32>
    %33 = vector.shape_cast %32 : vector<1x8x8xf32> to vector<8x8xf32>
    %34 = vector.shape_cast %31 : vector<8x8xf32> to vector<1x8x8xf32>
    tpu.vector_store %arg6[%c0_29, %c0_30, %c0_31], %34 {strides = array<i32>} : memref<1x8x64xf32, #tpu.memory_space<vmem>>, vector<1x8x8xf32>,
    %cst_32 = arith.constant 0.000000e+00 : f32
    %35 = vector.broadcast %cst_32 : f32 to vector<8x8xf32>
    %c0_33 = arith.constant 0 : index
    %c0_34 = arith.constant 0 : index
    %c32 = arith.constant 32 : index
    %36 = vector.load %arg2[%c0_33, %c0_34, %c32] : memref<1x4x256xf32, #tpu.memory_space<vmem>>, vector<1x4x16xf32>
    %37 = vector.shape_cast %36 : vector<1x4x16xf32> to vector<4x16xf32>
    %cst_35 = arith.constant dense<0.000000e+00> : vector<4x8xf32>
    %38 = tpu.matmul %37, %10, %cst_35 {dimension_numbers = #tpu.dot_dimension_numbers<[1], [0], [0], [1], [0, 0, 1, 1], [], []>} : vector<4x16xf32>, vector<16x8xf32>, vector<4x8xf32> -> vector<4x8xf32>
    %cst_36 = arith.constant dense<0.000000e+00> : vector<8x8xf32>
    %39 = tpu.matmul %2, %38, %cst_36 {dimension_numbers = #tpu.dot_dimension_numbers<[1], [0], [0], [1], [0, 0, 1, 1], [], []>} : vector<8x4xf32>, vector<4x8xf32>, vector<8x8xf32> -> vector<8x8xf32>
    %40 = arith.addf %35, %39 : vector<8x8xf32>
    %cst_37 = arith.constant dense<0.000000e+00> : vector<4x8xf32>
    %41 = tpu.matmul %37, %12, %cst_37 {dimension_numbers = #tpu.dot_dimension_numbers<[1], [0], [0], [1], [0, 0, 1, 1], [], []>} : vector<4x16xf32>, vector<16x8xf32>, vector<4x8xf32> -> vector<4x8xf32>
    %cst_38 = arith.constant dense<0.000000e+00> : vector<8x8xf32>
    %42 = tpu.matmul %4, %41, %cst_38 {dimension_numbers = #tpu.dot_dimension_numbers<[1], [0], [0], [1], [0, 0, 1, 1], [], []>} : vector<8x4xf32>, vector<4x8xf32>, vector<8x8xf32> -> vector<8x8xf32>
    %43 = arith.addf %40, %42 : vector<8x8xf32>
    %c0_39 = arith.constant 0 : index
    %c0_40 = arith.constant 0 : index
    %c48 = arith.constant 48 : index
    %44 = vector.load %arg2[%c0_39, %c0_40, %c48] : memref<1x4x256xf32, #tpu.memory_space<vmem>>, vector<1x4x16xf32>
    %45 = vector.shape_cast %44 : vector<1x4x16xf32> to vector<4x16xf32>
    %cst_41 = arith.constant dense<0.000000e+00> : vector<4x8xf32>
    %46 = tpu.matmul %45, %10, %cst_41 {dimension_numbers = #tpu.dot_dimension_numbers<[1], [0], [0], [1], [0, 0, 1, 1], [], []>} : vector<4x16xf32>, vector<16x8xf32>, vector<4x8xf32> -> vector<4x8xf32>
    %cst_42 = arith.constant dense<0.000000e+00> : vector<8x8xf32>
    %47 = tpu.matmul %6, %46, %cst_42 {dimension_numbers = #tpu.dot_dimension_numbers<[1], [0], [0], [1], [0, 0, 1, 1], [], []>} : vector<8x4xf32>, vector<4x8xf32>, vector<8x8xf32> -> vector<8x8xf32>
    %48 = arith.addf %43, %47 : vector<8x8xf32>
    %cst_43 = arith.constant dense<0.000000e+00> : vector<4x8xf32>
    %49 = tpu.matmul %45, %12, %cst_43 {dimension_numbers = #tpu.dot_dimension_numbers<[1], [0], [0], [1], [0, 0, 1, 1], [], []>} : vector<4x16xf32>, vector<16x8xf32>, vector<4x8xf32> -> vector<4x8xf32>
    %cst_44 = arith.constant dense<0.000000e+00> : vector<8x8xf32>
    %50 = tpu.matmul %8, %49, %cst_44 {dimension_numbers = #tpu.dot_dimension_numbers<[1], [0], [0], [1], [0, 0, 1, 1], [], []>} : vector<8x4xf32>, vector<4x8xf32>, vector<8x8xf32> -> vector<8x8xf32>
    %51 = arith.addf %48, %50 : vector<8x8xf32>
    %52 = vector.broadcast %0 : vector<8x1xf32> to vector<8x8xf32>
    %53 = arith.addf %51, %52 : vector<8x8xf32>
    %c0_45 = arith.constant 0 : index
    %c0_46 = arith.constant 0 : index
    %c8 = arith.constant 8 : index
    %54 = vector.load %arg6[%c0_45, %c0_46, %c8] : memref<1x8x64xf32, #tpu.memory_space<vmem>>, vector<1x8x8xf32>
    %55 = vector.shape_cast %54 : vector<1x8x8xf32> to vector<8x8xf32>
    %56 = vector.shape_cast %53 : vector<8x8xf32> to vector<1x8x8xf32>
    tpu.vector_store %arg6[%c0_45, %c0_46, %c8], %56 {strides = array<i32>} : memref<1x8x64xf32, #tpu.memory_space<vmem>>, vector<1x8x8xf32>,
    %cst_47 = arith.constant 0.000000e+00 : f32
    %57 = vector.broadcast %cst_47 : f32 to vector<8x8xf32>
    %c0_48 = arith.constant 0 : index
    %c0_49 = arith.constant 0 : index
    %c64 = arith.constant 64 : index
    %58 = vector.load %arg2[%c0_48, %c0_49, %c64] : memref<1x4x256xf32, #tpu.memory_space<vmem>>, vector<1x4x16xf32>
    %59 = vector.shape_cast %58 : vector<1x4x16xf32> to vector<4x16xf32>
    %cst_50 = arith.constant dense<0.000000e+00> : vector<4x8xf32>
    %60 = tpu.matmul %59, %10, %cst_50 {dimension_numbers = #tpu.dot_dimension_numbers<[1], [0], [0], [1], [0, 0, 1, 1], [], []>} : vector<4x16xf32>, vector<16x8xf32>, vector<4x8xf32> -> vector<4x8xf32>
    %cst_51 = arith.constant dense<0.000000e+00> : vector<8x8xf32>
    %61 = tpu.matmul %2, %60, %cst_51 {dimension_numbers = #tpu.dot_dimension_numbers<[1], [0], [0], [1], [0, 0, 1, 1], [], []>} : vector<8x4xf32>, vector<4x8xf32>, vector<8x8xf32> -> vector<8x8xf32>
    %62 = arith.addf %57, %61 : vector<8x8xf32>
    %cst_52 = arith.constant dense<0.000000e+00> : vector<4x8xf32>
    %63 = tpu.matmul %59, %12, %cst_52 {dimension_numbers = #tpu.dot_dimension_numbers<[1], [0], [0], [1], [0, 0, 1, 1], [], []>} : vector<4x16xf32>, vector<16x8xf32>, vector<4x8xf32> -> vector<4x8xf32>
    %cst_53 = arith.constant dense<0.000000e+00> : vector<8x8xf32>
    %64 = tpu.matmul %4, %63, %cst_53 {dimension_numbers = #tpu.dot_dimension_numbers<[1], [0], [0], [1], [0, 0, 1, 1], [], []>} : vector<8x4xf32>, vector<4x8xf32>, vector<8x8xf32> -> vector<8x8xf32>
    %65 = arith.addf %62, %64 : vector<8x8xf32>
    %c0_54 = arith.constant 0 : index
    %c0_55 = arith.constant 0 : index
    %c80 = arith.constant 80 : index
    %66 = vector.load %arg2[%c0_54, %c0_55, %c80] : memref<1x4x256xf32, #tpu.memory_space<vmem>>, vector<1x4x16xf32>
    %67 = vector.shape_cast %66 : vector<1x4x16xf32> to vector<4x16xf32>
    %cst_56 = arith.constant dense<0.000000e+00> : vector<4x8xf32>
    %68 = tpu.matmul %67, %10, %cst_56 {dimension_numbers = #tpu.dot_dimension_numbers<[1], [0], [0], [1], [0, 0, 1, 1], [], []>} : vector<4x16xf32>, vector<16x8xf32>, vector<4x8xf32> -> vector<4x8xf32>
    %cst_57 = arith.constant dense<0.000000e+00> : vector<8x8xf32>
    %69 = tpu.matmul %6, %68, %cst_57 {dimension_numbers = #tpu.dot_dimension_numbers<[1], [0], [0], [1], [0, 0, 1, 1], [], []>} : vector<8x4xf32>, vector<4x8xf32>, vector<8x8xf32> -> vector<8x8xf32>
    %70 = arith.addf %65, %69 : vector<8x8xf32>
    %cst_58 = arith.constant dense<0.000000e+00> : vector<4x8xf32>
    %71 = tpu.matmul %67, %12, %cst_58 {dimension_numbers = #tpu.dot_dimension_numbers<[1], [0], [0], [1], [0, 0, 1, 1], [], []>} : vector<4x16xf32>, vector<16x8xf32>, vector<4x8xf32> -> vector<4x8xf32>
    %cst_59 = arith.constant dense<0.000000e+00> : vector<8x8xf32>
    %72 = tpu.matmul %8, %71, %cst_59 {dimension_numbers = #tpu.dot_dimension_numbers<[1], [0], [0], [1], [0, 0, 1, 1], [], []>} : vector<8x4xf32>, vector<4x8xf32>, vector<8x8xf32> -> vector<8x8xf32>
    %73 = arith.addf %70, %72 : vector<8x8xf32>
    %74 = vector.broadcast %0 : vector<8x1xf32> to vector<8x8xf32>
    %75 = arith.addf %73, %74 : vector<8x8xf32>
    %c0_60 = arith.constant 0 : index
    %c0_61 = arith.constant 0 : index
    %c16_62 = arith.constant 16 : index
    %76 = vector.load %arg6[%c0_60, %c0_61, %c16_62] : memref<1x8x64xf32, #tpu.memory_space<vmem>>, vector<1x8x8xf32>
    %77 = vector.shape_cast %76 : vector<1x8x8xf32> to vector<8x8xf32>
    %78 = vector.shape_cast %75 : vector<8x8xf32> to vector<1x8x8xf32>
    tpu.vector_store %arg6[%c0_60, %c0_61, %c16_62], %78 {strides = array<i32>} : memref<1x8x64xf32, #tpu.memory_space<vmem>>, vector<1x8x8xf32>,
    %cst_63 = arith.constant 0.000000e+00 : f32
    %79 = vector.broadcast %cst_63 : f32 to vector<8x8xf32>
    %c0_64 = arith.constant 0 : index
    %c0_65 = arith.constant 0 : index
    %c96 = arith.constant 96 : index
    %80 = vector.load %arg2[%c0_64, %c0_65, %c96] : memref<1x4x256xf32, #tpu.memory_space<vmem>>, vector<1x4x16xf32>
    %81 = vector.shape_cast %80 : vector<1x4x16xf32> to vector<4x16xf32>
    %cst_66 = arith.constant dense<0.000000e+00> : vector<4x8xf32>
    %82 = tpu.matmul %81, %10, %cst_66 {dimension_numbers = #tpu.dot_dimension_numbers<[1], [0], [0], [1], [0, 0, 1, 1], [], []>} : vector<4x16xf32>, vector<16x8xf32>, vector<4x8xf32> -> vector<4x8xf32>
    %cst_67 = arith.constant dense<0.000000e+00> : vector<8x8xf32>
    %83 = tpu.matmul %2, %82, %cst_67 {dimension_numbers = #tpu.dot_dimension_numbers<[1], [0], [0], [1], [0, 0, 1, 1], [], []>} : vector<8x4xf32>, vector<4x8xf32>, vector<8x8xf32> -> vector<8x8xf32>
    %84 = arith.addf %79, %83 : vector<8x8xf32>
    %cst_68 = arith.constant dense<0.000000e+00> : vector<4x8xf32>
    %85 = tpu.matmul %81, %12, %cst_68 {dimension_numbers = #tpu.dot_dimension_numbers<[1], [0], [0], [1], [0, 0, 1, 1], [], []>} : vector<4x16xf32>, vector<16x8xf32>, vector<4x8xf32> -> vector<4x8xf32>
    %cst_69 = arith.constant dense<0.000000e+00> : vector<8x8xf32>
    %86 = tpu.matmul %4, %85, %cst_69 {dimension_numbers = #tpu.dot_dimension_numbers<[1], [0], [0], [1], [0, 0, 1, 1], [], []>} : vector<8x4xf32>, vector<4x8xf32>, vector<8x8xf32> -> vector<8x8xf32>
    %87 = arith.addf %84, %86 : vector<8x8xf32>
    %c0_70 = arith.constant 0 : index
    %c0_71 = arith.constant 0 : index
    %c112 = arith.constant 112 : index
    %88 = vector.load %arg2[%c0_70, %c0_71, %c112] : memref<1x4x256xf32, #tpu.memory_space<vmem>>, vector<1x4x16xf32>
    %89 = vector.shape_cast %88 : vector<1x4x16xf32> to vector<4x16xf32>
    %cst_72 = arith.constant dense<0.000000e+00> : vector<4x8xf32>
    %90 = tpu.matmul %89, %10, %cst_72 {dimension_numbers = #tpu.dot_dimension_numbers<[1], [0], [0], [1], [0, 0, 1, 1], [], []>} : vector<4x16xf32>, vector<16x8xf32>, vector<4x8xf32> -> vector<4x8xf32>
    %cst_73 = arith.constant dense<0.000000e+00> : vector<8x8xf32>
    %91 = tpu.matmul %6, %90, %cst_73 {dimension_numbers = #tpu.dot_dimension_numbers<[1], [0], [0], [1], [0, 0, 1, 1], [], []>} : vector<8x4xf32>, vector<4x8xf32>, vector<8x8xf32> -> vector<8x8xf32>
    %92 = arith.addf %87, %91 : vector<8x8xf32>
    %cst_74 = arith.constant dense<0.000000e+00> : vector<4x8xf32>
    %93 = tpu.matmul %89, %12, %cst_74 {dimension_numbers = #tpu.dot_dimension_numbers<[1], [0], [0], [1], [0, 0, 1, 1], [], []>} : vector<4x16xf32>, vector<16x8xf32>, vector<4x8xf32> -> vector<4x8xf32>
    %cst_75 = arith.constant dense<0.000000e+00> : vector<8x8xf32>
    %94 = tpu.matmul %8, %93, %cst_75 {dimension_numbers = #tpu.dot_dimension_numbers<[1], [0], [0], [1], [0, 0, 1, 1], [], []>} : vector<8x4xf32>, vector<4x8xf32>, vector<8x8xf32> -> vector<8x8xf32>
    %95 = arith.addf %92, %94 : vector<8x8xf32>
    %96 = vector.broadcast %0 : vector<8x1xf32> to vector<8x8xf32>
    %97 = arith.addf %95, %96 : vector<8x8xf32>
    %c0_76 = arith.constant 0 : index
    %c0_77 = arith.constant 0 : index
    %c24 = arith.constant 24 : index
    %98 = vector.load %arg6[%c0_76, %c0_77, %c24] : memref<1x8x64xf32, #tpu.memory_space<vmem>>, vector<1x8x8xf32>
    %99 = vector.shape_cast %98 : vector<1x8x8xf32> to vector<8x8xf32>
    %100 = vector.shape_cast %97 : vector<8x8xf32> to vector<1x8x8xf32>
    tpu.vector_store %arg6[%c0_76, %c0_77, %c24], %100 {strides = array<i32>} : memref<1x8x64xf32, #tpu.memory_space<vmem>>, vector<1x8x8xf32>,
    %cst_78 = arith.constant 0.000000e+00 : f32
    %101 = vector.broadcast %cst_78 : f32 to vector<8x8xf32>
    %c0_79 = arith.constant 0 : index
    %c0_80 = arith.constant 0 : index
    %c128 = arith.constant 128 : index
    %102 = vector.load %arg2[%c0_79, %c0_80, %c128] : memref<1x4x256xf32, #tpu.memory_space<vmem>>, vector<1x4x16xf32>
    %103 = vector.shape_cast %102 : vector<1x4x16xf32> to vector<4x16xf32>
    %cst_81 = arith.constant dense<0.000000e+00> : vector<4x8xf32>
    %104 = tpu.matmul %103, %10, %cst_81 {dimension_numbers = #tpu.dot_dimension_numbers<[1], [0], [0], [1], [0, 0, 1, 1], [], []>} : vector<4x16xf32>, vector<16x8xf32>, vector<4x8xf32> -> vector<4x8xf32>
    %cst_82 = arith.constant dense<0.000000e+00> : vector<8x8xf32>
    %105 = tpu.matmul %2, %104, %cst_82 {dimension_numbers = #tpu.dot_dimension_numbers<[1], [0], [0], [1], [0, 0, 1, 1], [], []>} : vector<8x4xf32>, vector<4x8xf32>, vector<8x8xf32> -> vector<8x8xf32>
    %106 = arith.addf %101, %105 : vector<8x8xf32>
    %cst_83 = arith.constant dense<0.000000e+00> : vector<4x8xf32>
    %107 = tpu.matmul %103, %12, %cst_83 {dimension_numbers = #tpu.dot_dimension_numbers<[1], [0], [0], [1], [0, 0, 1, 1], [], []>} : vector<4x16xf32>, vector<16x8xf32>, vector<4x8xf32> -> vector<4x8xf32>
    %cst_84 = arith.constant dense<0.000000e+00> : vector<8x8xf32>
    %108 = tpu.matmul %4, %107, %cst_84 {dimension_numbers = #tpu.dot_dimension_numbers<[1], [0], [0], [1], [0, 0, 1, 1], [], []>} : vector<8x4xf32>, vector<4x8xf32>, vector<8x8xf32> -> vector<8x8xf32>
    %109 = arith.addf %106, %108 : vector<8x8xf32>
    %c0_85 = arith.constant 0 : index
    %c0_86 = arith.constant 0 : index
    %c144 = arith.constant 144 : index
    %110 = vector.load %arg2[%c0_85, %c0_86, %c144] : memref<1x4x256xf32, #tpu.memory_space<vmem>>, vector<1x4x16xf32>
    %111 = vector.shape_cast %110 : vector<1x4x16xf32> to vector<4x16xf32>
    %cst_87 = arith.constant dense<0.000000e+00> : vector<4x8xf32>
    %112 = tpu.matmul %111, %10, %cst_87 {dimension_numbers = #tpu.dot_dimension_numbers<[1], [0], [0], [1], [0, 0, 1, 1], [], []>} : vector<4x16xf32>, vector<16x8xf32>, vector<4x8xf32> -> vector<4x8xf32>
    %cst_88 = arith.constant dense<0.000000e+00> : vector<8x8xf32>
    %113 = tpu.matmul %6, %112, %cst_88 {dimension_numbers = #tpu.dot_dimension_numbers<[1], [0], [0], [1], [0, 0, 1, 1], [], []>} : vector<8x4xf32>, vector<4x8xf32>, vector<8x8xf32> -> vector<8x8xf32>
    %114 = arith.addf %109, %113 : vector<8x8xf32>
    %cst_89 = arith.constant dense<0.000000e+00> : vector<4x8xf32>
    %115 = tpu.matmul %111, %12, %cst_89 {dimension_numbers = #tpu.dot_dimension_numbers<[1], [0], [0], [1], [0, 0, 1, 1], [], []>} : vector<4x16xf32>, vector<16x8xf32>, vector<4x8xf32> -> vector<4x8xf32>
    %cst_90 = arith.constant dense<0.000000e+00> : vector<8x8xf32>
    %116 = tpu.matmul %8, %115, %cst_90 {dimension_numbers = #tpu.dot_dimension_numbers<[1], [0], [0], [1], [0, 0, 1, 1], [], []>} : vector<8x4xf32>, vector<4x8xf32>, vector<8x8xf32> -> vector<8x8xf32>
    %117 = arith.addf %114, %116 : vector<8x8xf32>
    %118 = vector.broadcast %0 : vector<8x1xf32> to vector<8x8xf32>
    %119 = arith.addf %117, %118 : vector<8x8xf32>
    %c0_91 = arith.constant 0 : index
    %c0_92 = arith.constant 0 : index
    %c32_93 = arith.constant 32 : index
    %120 = vector.load %arg6[%c0_91, %c0_92, %c32_93] : memref<1x8x64xf32, #tpu.memory_space<vmem>>, vector<1x8x8xf32>
    %121 = vector.shape_cast %120 : vector<1x8x8xf32> to vector<8x8xf32>
    %122 = vector.shape_cast %119 : vector<8x8xf32> to vector<1x8x8xf32>
    tpu.vector_store %arg6[%c0_91, %c0_92, %c32_93], %122 {strides = array<i32>} : memref<1x8x64xf32, #tpu.memory_space<vmem>>, vector<1x8x8xf32>,
    %cst_94 = arith.constant 0.000000e+00 : f32
    %123 = vector.broadcast %cst_94 : f32 to vector<8x8xf32>
    %c0_95 = arith.constant 0 : index
    %c0_96 = arith.constant 0 : index
    %c160 = arith.constant 160 : index
    %124 = vector.load %arg2[%c0_95, %c0_96, %c160] : memref<1x4x256xf32, #tpu.memory_space<vmem>>, vector<1x4x16xf32>
    %125 = vector.shape_cast %124 : vector<1x4x16xf32> to vector<4x16xf32>
    %cst_97 = arith.constant dense<0.000000e+00> : vector<4x8xf32>
    %126 = tpu.matmul %125, %10, %cst_97 {dimension_numbers = #tpu.dot_dimension_numbers<[1], [0], [0], [1], [0, 0, 1, 1], [], []>} : vector<4x16xf32>, vector<16x8xf32>, vector<4x8xf32> -> vector<4x8xf32>
    %cst_98 = arith.constant dense<0.000000e+00> : vector<8x8xf32>
    %127 = tpu.matmul %2, %126, %cst_98 {dimension_numbers = #tpu.dot_dimension_numbers<[1], [0], [0], [1], [0, 0, 1, 1], [], []>} : vector<8x4xf32>, vector<4x8xf32>, vector<8x8xf32> -> vector<8x8xf32>
    %128 = arith.addf %123, %127 : vector<8x8xf32>
    %cst_99 = arith.constant dense<0.000000e+00> : vector<4x8xf32>
    %129 = tpu.matmul %125, %12, %cst_99 {dimension_numbers = #tpu.dot_dimension_numbers<[1], [0], [0], [1], [0, 0, 1, 1], [], []>} : vector<4x16xf32>, vector<16x8xf32>, vector<4x8xf32> -> vector<4x8xf32>
    %cst_100 = arith.constant dense<0.000000e+00> : vector<8x8xf32>
    %130 = tpu.matmul %4, %129, %cst_100 {dimension_numbers = #tpu.dot_dimension_numbers<[1], [0], [0], [1], [0, 0, 1, 1], [], []>} : vector<8x4xf32>, vector<4x8xf32>, vector<8x8xf32> -> vector<8x8xf32>
    %131 = arith.addf %128, %130 : vector<8x8xf32>
    %c0_101 = arith.constant 0 : index
    %c0_102 = arith.constant 0 : index
    %c176 = arith.constant 176 : index
    %132 = vector.load %arg2[%c0_101, %c0_102, %c176] : memref<1x4x256xf32, #tpu.memory_space<vmem>>, vector<1x4x16xf32>
    %133 = vector.shape_cast %132 : vector<1x4x16xf32> to vector<4x16xf32>
    %cst_103 = arith.constant dense<0.000000e+00> : vector<4x8xf32>
    %134 = tpu.matmul %133, %10, %cst_103 {dimension_numbers = #tpu.dot_dimension_numbers<[1], [0], [0], [1], [0, 0, 1, 1], [], []>} : vector<4x16xf32>, vector<16x8xf32>, vector<4x8xf32> -> vector<4x8xf32>
    %cst_104 = arith.constant dense<0.000000e+00> : vector<8x8xf32>
    %135 = tpu.matmul %6, %134, %cst_104 {dimension_numbers = #tpu.dot_dimension_numbers<[1], [0], [0], [1], [0, 0, 1, 1], [], []>} : vector<8x4xf32>, vector<4x8xf32>, vector<8x8xf32> -> vector<8x8xf32>
    %136 = arith.addf %131, %135 : vector<8x8xf32>
    %cst_105 = arith.constant dense<0.000000e+00> : vector<4x8xf32>
    %137 = tpu.matmul %133, %12, %cst_105 {dimension_numbers = #tpu.dot_dimension_numbers<[1], [0], [0], [1], [0, 0, 1, 1], [], []>} : vector<4x16xf32>, vector<16x8xf32>, vector<4x8xf32> -> vector<4x8xf32>
    %cst_106 = arith.constant dense<0.000000e+00> : vector<8x8xf32>
    %138 = tpu.matmul %8, %137, %cst_106 {dimension_numbers = #tpu.dot_dimension_numbers<[1], [0], [0], [1], [0, 0, 1, 1], [], []>} : vector<8x4xf32>, vector<4x8xf32>, vector<8x8xf32> -> vector<8x8xf32>
    %139 = arith.addf %136, %138 : vector<8x8xf32>
    %140 = vector.broadcast %0 : vector<8x1xf32> to vector<8x8xf32>
    %141 = arith.addf %139, %140 : vector<8x8xf32>
    %c0_107 = arith.constant 0 : index
    %c0_108 = arith.constant 0 : index
    %c40 = arith.constant 40 : index
    %142 = vector.load %arg6[%c0_107, %c0_108, %c40] : memref<1x8x64xf32, #tpu.memory_space<vmem>>, vector<1x8x8xf32>
    %143 = vector.shape_cast %142 : vector<1x8x8xf32> to vector<8x8xf32>
    %144 = vector.shape_cast %141 : vector<8x8xf32> to vector<1x8x8xf32>
    tpu.vector_store %arg6[%c0_107, %c0_108, %c40], %144 {strides = array<i32>} : memref<1x8x64xf32, #tpu.memory_space<vmem>>, vector<1x8x8xf32>,
    %cst_109 = arith.constant 0.000000e+00 : f32
    %145 = vector.broadcast %cst_109 : f32 to vector<8x8xf32>
    %c0_110 = arith.constant 0 : index
    %c0_111 = arith.constant 0 : index
    %c192 = arith.constant 192 : index
    %146 = vector.load %arg2[%c0_110, %c0_111, %c192] : memref<1x4x256xf32, #tpu.memory_space<vmem>>, vector<1x4x16xf32>
    %147 = vector.shape_cast %146 : vector<1x4x16xf32> to vector<4x16xf32>
    %cst_112 = arith.constant dense<0.000000e+00> : vector<4x8xf32>
    %148 = tpu.matmul %147, %10, %cst_112 {dimension_numbers = #tpu.dot_dimension_numbers<[1], [0], [0], [1], [0, 0, 1, 1], [], []>} : vector<4x16xf32>, vector<16x8xf32>, vector<4x8xf32> -> vector<4x8xf32>
    %cst_113 = arith.constant dense<0.000000e+00> : vector<8x8xf32>
    %149 = tpu.matmul %2, %148, %cst_113 {dimension_numbers = #tpu.dot_dimension_numbers<[1], [0], [0], [1], [0, 0, 1, 1], [], []>} : vector<8x4xf32>, vector<4x8xf32>, vector<8x8xf32> -> vector<8x8xf32>
    %150 = arith.addf %145, %149 : vector<8x8xf32>
    %cst_114 = arith.constant dense<0.000000e+00> : vector<4x8xf32>
    %151 = tpu.matmul %147, %12, %cst_114 {dimension_numbers = #tpu.dot_dimension_numbers<[1], [0], [0], [1], [0, 0, 1, 1], [], []>} : vector<4x16xf32>, vector<16x8xf32>, vector<4x8xf32> -> vector<4x8xf32>
    %cst_115 = arith.constant dense<0.000000e+00> : vector<8x8xf32>
    %152 = tpu.matmul %4, %151, %cst_115 {dimension_numbers = #tpu.dot_dimension_numbers<[1], [0], [0], [1], [0, 0, 1, 1], [], []>} : vector<8x4xf32>, vector<4x8xf32>, vector<8x8xf32> -> vector<8x8xf32>
    %153 = arith.addf %150, %152 : vector<8x8xf32>
    %c0_116 = arith.constant 0 : index
    %c0_117 = arith.constant 0 : index
    %c208 = arith.constant 208 : index
    %154 = vector.load %arg2[%c0_116, %c0_117, %c208] : memref<1x4x256xf32, #tpu.memory_space<vmem>>, vector<1x4x16xf32>
    %155 = vector.shape_cast %154 : vector<1x4x16xf32> to vector<4x16xf32>
    %cst_118 = arith.constant dense<0.000000e+00> : vector<4x8xf32>
    %156 = tpu.matmul %155, %10, %cst_118 {dimension_numbers = #tpu.dot_dimension_numbers<[1], [0], [0], [1], [0, 0, 1, 1], [], []>} : vector<4x16xf32>, vector<16x8xf32>, vector<4x8xf32> -> vector<4x8xf32>
    %cst_119 = arith.constant dense<0.000000e+00> : vector<8x8xf32>
    %157 = tpu.matmul %6, %156, %cst_119 {dimension_numbers = #tpu.dot_dimension_numbers<[1], [0], [0], [1], [0, 0, 1, 1], [], []>} : vector<8x4xf32>, vector<4x8xf32>, vector<8x8xf32> -> vector<8x8xf32>
    %158 = arith.addf %153, %157 : vector<8x8xf32>
    %cst_120 = arith.constant dense<0.000000e+00> : vector<4x8xf32>
    %159 = tpu.matmul %155, %12, %cst_120 {dimension_numbers = #tpu.dot_dimension_numbers<[1], [0], [0], [1], [0, 0, 1, 1], [], []>} : vector<4x16xf32>, vector<16x8xf32>, vector<4x8xf32> -> vector<4x8xf32>
    %cst_121 = arith.constant dense<0.000000e+00> : vector<8x8xf32>
    %160 = tpu.matmul %8, %159, %cst_121 {dimension_numbers = #tpu.dot_dimension_numbers<[1], [0], [0], [1], [0, 0, 1, 1], [], []>} : vector<8x4xf32>, vector<4x8xf32>, vector<8x8xf32> -> vector<8x8xf32>
    %161 = arith.addf %158, %160 : vector<8x8xf32>
    %162 = vector.broadcast %0 : vector<8x1xf32> to vector<8x8xf32>
    %163 = arith.addf %161, %162 : vector<8x8xf32>
    %c0_122 = arith.constant 0 : index
    %c0_123 = arith.constant 0 : index
    %c48_124 = arith.constant 48 : index
    %164 = vector.load %arg6[%c0_122, %c0_123, %c48_124] : memref<1x8x64xf32, #tpu.memory_space<vmem>>, vector<1x8x8xf32>
    %165 = vector.shape_cast %164 : vector<1x8x8xf32> to vector<8x8xf32>
    %166 = vector.shape_cast %163 : vector<8x8xf32> to vector<1x8x8xf32>
    tpu.vector_store %arg6[%c0_122, %c0_123, %c48_124], %166 {strides = array<i32>} : memref<1x8x64xf32, #tpu.memory_space<vmem>>, vector<1x8x8xf32>,
    %cst_125 = arith.constant 0.000000e+00 : f32
    %167 = vector.broadcast %cst_125 : f32 to vector<8x8xf32>
    %c0_126 = arith.constant 0 : index
    %c0_127 = arith.constant 0 : index
    %c224 = arith.constant 224 : index
    %168 = vector.load %arg2[%c0_126, %c0_127, %c224] : memref<1x4x256xf32, #tpu.memory_space<vmem>>, vector<1x4x16xf32>
    %169 = vector.shape_cast %168 : vector<1x4x16xf32> to vector<4x16xf32>
    %cst_128 = arith.constant dense<0.000000e+00> : vector<4x8xf32>
    %170 = tpu.matmul %169, %10, %cst_128 {dimension_numbers = #tpu.dot_dimension_numbers<[1], [0], [0], [1], [0, 0, 1, 1], [], []>} : vector<4x16xf32>, vector<16x8xf32>, vector<4x8xf32> -> vector<4x8xf32>
    %cst_129 = arith.constant dense<0.000000e+00> : vector<8x8xf32>
    %171 = tpu.matmul %2, %170, %cst_129 {dimension_numbers = #tpu.dot_dimension_numbers<[1], [0], [0], [1], [0, 0, 1, 1], [], []>} : vector<8x4xf32>, vector<4x8xf32>, vector<8x8xf32> -> vector<8x8xf32>
    %172 = arith.addf %167, %171 : vector<8x8xf32>
    %cst_130 = arith.constant dense<0.000000e+00> : vector<4x8xf32>
    %173 = tpu.matmul %169, %12, %cst_130 {dimension_numbers = #tpu.dot_dimension_numbers<[1], [0], [0], [1], [0, 0, 1, 1], [], []>} : vector<4x16xf32>, vector<16x8xf32>, vector<4x8xf32> -> vector<4x8xf32>
    %cst_131 = arith.constant dense<0.000000e+00> : vector<8x8xf32>
    %174 = tpu.matmul %4, %173, %cst_131 {dimension_numbers = #tpu.dot_dimension_numbers<[1], [0], [0], [1], [0, 0, 1, 1], [], []>} : vector<8x4xf32>, vector<4x8xf32>, vector<8x8xf32> -> vector<8x8xf32>
    %175 = arith.addf %172, %174 : vector<8x8xf32>
    %c0_132 = arith.constant 0 : index
    %c0_133 = arith.constant 0 : index
    %c240 = arith.constant 240 : index
    %176 = vector.load %arg2[%c0_132, %c0_133, %c240] : memref<1x4x256xf32, #tpu.memory_space<vmem>>, vector<1x4x16xf32>
    %177 = vector.shape_cast %176 : vector<1x4x16xf32> to vector<4x16xf32>
    %cst_134 = arith.constant dense<0.000000e+00> : vector<4x8xf32>
    %178 = tpu.matmul %177, %10, %cst_134 {dimension_numbers = #tpu.dot_dimension_numbers<[1], [0], [0], [1], [0, 0, 1, 1], [], []>} : vector<4x16xf32>, vector<16x8xf32>, vector<4x8xf32> -> vector<4x8xf32>
    %cst_135 = arith.constant dense<0.000000e+00> : vector<8x8xf32>
    %179 = tpu.matmul %6, %178, %cst_135 {dimension_numbers = #tpu.dot_dimension_numbers<[1], [0], [0], [1], [0, 0, 1, 1], [], []>} : vector<8x4xf32>, vector<4x8xf32>, vector<8x8xf32> -> vector<8x8xf32>
    %180 = arith.addf %175, %179 : vector<8x8xf32>
    %cst_136 = arith.constant dense<0.000000e+00> : vector<4x8xf32>
    %181 = tpu.matmul %177, %12, %cst_136 {dimension_numbers = #tpu.dot_dimension_numbers<[1], [0], [0], [1], [0, 0, 1, 1], [], []>} : vector<4x16xf32>, vector<16x8xf32>, vector<4x8xf32> -> vector<4x8xf32>
    %cst_137 = arith.constant dense<0.000000e+00> : vector<8x8xf32>
    %182 = tpu.matmul %8, %181, %cst_137 {dimension_numbers = #tpu.dot_dimension_numbers<[1], [0], [0], [1], [0, 0, 1, 1], [], []>} : vector<8x4xf32>, vector<4x8xf32>, vector<8x8xf32> -> vector<8x8xf32>
    %183 = arith.addf %180, %182 : vector<8x8xf32>
    %184 = vector.broadcast %0 : vector<8x1xf32> to vector<8x8xf32>
    %185 = arith.addf %183, %184 : vector<8x8xf32>
    %c0_138 = arith.constant 0 : index
    %c0_139 = arith.constant 0 : index
    %c56 = arith.constant 56 : index
    %186 = vector.load %arg6[%c0_138, %c0_139, %c56] : memref<1x8x64xf32, #tpu.memory_space<vmem>>, vector<1x8x8xf32>
    %187 = vector.shape_cast %186 : vector<1x8x8xf32> to vector<8x8xf32>
    %188 = vector.shape_cast %185 : vector<8x8xf32> to vector<1x8x8xf32>
    tpu.vector_store %arg6[%c0_138, %c0_139, %c56], %188 {strides = array<i32>} : memref<1x8x64xf32, #tpu.memory_space<vmem>>, vector<1x8x8xf32>,
    return
  }
  func.func @transform_0(%arg0: i32, %arg1: i32) -> (i32, i32, i32) {
    %c0_i32 = arith.constant 0 : i32
    %c0_i32_0 = arith.constant 0 : i32
    return %arg0, %c0_i32, %arg1 : i32, i32, i32
  }
  func.func @transform_1(%arg0: i32, %arg1: i32) -> (i32, i32, i32) {
    %c0_i32 = arith.constant 0 : i32
    %c0_i32_0 = arith.constant 0 : i32
    %c0_i32_1 = arith.constant 0 : i32
    %c0_i32_2 = arith.constant 0 : i32
    return %c0_i32, %c0_i32_0, %c0_i32_1 : i32, i32, i32
  }
  func.func @transform_2(%arg0: i32, %arg1: i32) -> (i32, i32, i32) {
    %c0_i32 = arith.constant 0 : i32
    %c0_i32_0 = arith.constant 0 : i32
    %c0_i32_1 = arith.constant 0 : i32
    %c0_i32_2 = arith.constant 0 : i32
    return %c0_i32, %c0_i32_0, %c0_i32_1 : i32, i32, i32
  }
  func.func @transform_3(%arg0: i32, %arg1: i32) -> (i32, i32) {
    %c0_i32 = arith.constant 0 : i32
    %c0_i32_0 = arith.constant 0 : i32
    %c0_i32_1 = arith.constant 0 : i32
    return %c0_i32, %c0_i32_0 : i32, i32
  }
  func.func @transform_4(%arg0: i32, %arg1: i32) -> (i32, i32, i32) {
    %c0_i32 = arith.constant 0 : i32
    %c0_i32_0 = arith.constant 0 : i32
    return %arg0, %c0_i32, %arg1 : i32, i32, i32
  }
}

</mosaic_0001>

<llo_original>
// kernel: downsample_forward.1
$region0: #{downsample_forward.1}
  #allocation0 [shape = 'u32[]', space=smem, size = 0x4, offset = 0x4, fixed_abs, tag = 'smem constant byte address 0x4 - core index']
  #allocation1 [shape = 'u32[144,128]{1,0:T(1,128)}', space=vmem, size = 0x12000, scoped, tag = 'internal scratch']
  %s0 = inlined_call_operand.vmem [shape: f32[2,4,256], index: 0, kind: input, shape index: {}]
  %s1 = inlined_call_operand.vmem [shape: f32[4,8,4], index: 1, kind: input, shape index: {}]
  %s2 = inlined_call_operand.vmem [shape: f32[2,16,8], index: 2, kind: input, shape index: {}]
  %s3 = inlined_call_operand.vmem [shape: f32[8,1], index: 3, kind: input, shape index: {}]
  %s4 = inlined_call_operand.vmem [shape: f32[2,8,64], index: 4, kind: output, shape index: {}]
  %s5 = sld [smem:[#allocation0]]
  $region49: #{downsample_forward.1} parent=0
    _
  %s7 = ssub.s32 1, %s5
  %s8 = scalar_select 0, %s7, %s5
  loop: start=0, step=1, limit=4
  $region2: #{downsample_forward.1} parent=0 // loop_pre_header
    _
  $region3: #{downsample_forward.1} parent=0 // loop_header
    %s10 = sphi 0, %s14
    %p11 = scmp.ge.s32.totalorder %s10, 4
    %s17 = sphi 0, %s29
    %s18 = sphi 0, %s25
    %s19 = sphi 0, %s17
    %s20 = sphi 0, %s18
    %s21 = sphi 0, %s19
    %s22 = sphi 0, %s20
    %s34 = sphi 0, %s36
    %s37 = sphi 0, %s34
    %s38 = sphi 0, %s37
    %s54 = sphi 0, %s38
    %s58 = sphi 0, %s58
    %s60 = sphi 0, %s58
    %s61 = sphi 0, %s60
    %s75 = sphi 0, %s61
    %s79 = sphi 0, %s79
    %s81 = sphi 0, %s79
    %s82 = sphi 0, %s81
    %s96 = sphi 0, %s82
    %s100 = sphi 0, %s100
    %s102 = sphi 0, %s100
    %s103 = sphi 0, %s102
    %s117 = sphi 0, %s103
    %s125 = sphi 0, %s127
    %s128 = sphi 0, %s125
    %s129 = sphi 0, %s128
    %s145 = sphi 0, %s129
  $region4: #{downsample_forward.1} parent=0 // loop_header_branch
    %13 = sbr.rel (%p11) target = $region8
  $region5: #{downsample_forward.1} parent=0 // loop_body
    %s15 = ssub.s32 %s10, 1
    %s16 = ssub.s32 %s10, 2
    %s23 = sadd.s32 1, %s18
    %p24 = scmp.ge.s32.totalorder %s23, 1
    %s25 = scalar_select %p24, 0, %s23
    %s26 = sadd.s32 1, %s17
    %s27 = scalar_select %p24, %s26, %s17
    %p28 = scmp.ge.s32.totalorder %s27, 2
    %s29 = scalar_select %p28, 0, %s27
    %s30 = ssub.s32 %s17, %s29
    %s31 = ssub.s32 %s18, %s25
    %s32 = sor.u32 %s30, %s31
    %p33 = scmp.eq.s32.totalorder %s32, 0
    %s35 = sadd.s32 %s34, 1
    %s36 = scalar_select %p33, %s34, %s35
    %p39 = pneg %p33
    %p40 = scmp.eq.s32.totalorder %s10, 1
    %p41 = por %p39, %p40
    %p42 = scmp.ne.s32.totalorder %s34, %s37
    %p43 = scmp.eq.s32.totalorder %s10, 0
    %p44 = por %p42, %p43
    %p45 = scmp.ne.s32.totalorder %s34, %s37
    %p46 = scmp.eq.s32.totalorder %s15, 1
    %p47 = por %p45, %p46
    %p48 = scmp.ne.s32.totalorder %s37, %s38
    %p49 = scmp.eq.s32.totalorder %s15, 0
    %p50 = por %p48, %p49
    %p51 = scmp.ne.s32.totalorder %s37, %s38
    %p52 = scmp.eq.s32.totalorder %s16, 1
    %p53 = por %p51, %p52
    %p55 = scmp.ne.s32.totalorder %s38, %s54
    %p56 = scmp.eq.s32.totalorder %s16, 0
    %p57 = por %p55, %p56
    %s59 = sadd.s32 %s58, 1
    %p62 = scmp.eq.s32.totalorder %s10, 1
    %p63 = scmp.ne.s32.totalorder %s58, %s60
    %p64 = scmp.eq.s32.totalorder %s10, 0
    %p65 = por %p63, %p64
    %p66 = scmp.ne.s32.totalorder %s58, %s60
    %p67 = scmp.eq.s32.totalorder %s15, 1
    %p68 = por %p66, %p67
    %p69 = scmp.ne.s32.totalorder %s60, %s61
    %p70 = scmp.eq.s32.totalorder %s15, 0
    %p71 = por %p69, %p70
    %p72 = scmp.ne.s32.totalorder %s60, %s61
    %p73 = scmp.eq.s32.totalorder %s16, 1
    %p74 = por %p72, %p73
    %p76 = scmp.ne.s32.totalorder %s61, %s75
    %p77 = scmp.eq.s32.totalorder %s16, 0
    %p78 = por %p76, %p77
    %s80 = sadd.s32 %s79, 1
    %p83 = scmp.eq.s32.totalorder %s10, 1
    %p84 = scmp.ne.s32.totalorder %s79, %s81
    %p85 = scmp.eq.s32.totalorder %s10, 0
    %p86 = por %p84, %p85
    %p87 = scmp.ne.s32.totalorder %s79, %s81
    %p88 = scmp.eq.s32.totalorder %s15, 1
    %p89 = por %p87, %p88
    %p90 = scmp.ne.s32.totalorder %s81, %s82
    %p91 = scmp.eq.s32.totalorder %s15, 0
    %p92 = por %p90, %p91
    %p93 = scmp.ne.s32.totalorder %s81, %s82
    %p94 = scmp.eq.s32.totalorder %s16, 1
    %p95 = por %p93, %p94
    %p97 = scmp.ne.s32.totalorder %s82, %s96
    %p98 = scmp.eq.s32.totalorder %s16, 0
    %p99 = por %p97, %p98
    %s101 = sadd.s32 %s100, 1
    %p104 = scmp.eq.s32.totalorder %s10, 1
    %p105 = scmp.ne.s32.totalorder %s100, %s102
    %p106 = scmp.eq.s32.totalorder %s10, 0
    %p107 = por %p105, %p106
    %p108 = scmp.ne.s32.totalorder %s100, %s102
    %p109 = scmp.eq.s32.totalorder %s15, 1
    %p110 = por %p108, %p109
    %p111 = scmp.ne.s32.totalorder %s102, %s103
    %p112 = scmp.eq.s32.totalorder %s15, 0
    %p113 = por %p111, %p112
    %p114 = scmp.ne.s32.totalorder %s102, %s103
    %p115 = scmp.eq.s32.totalorder %s16, 1
    %p116 = por %p114, %p115
    %p118 = scmp.ne.s32.totalorder %s103, %s117
    %p119 = scmp.eq.s32.totalorder %s16, 0
    %p120 = por %p118, %p119
    %s121 = ssub.s32 %s17, %s29
    %s122 = ssub.s32 %s18, %s25
    %s123 = sor.u32 %s121, %s122
    %p124 = scmp.eq.s32.totalorder %s123, 0
    %s126 = sadd.s32 %s125, 1
    %s127 = scalar_select %p124, %s125, %s126
    %p130 = pneg %p124
    %p131 = scmp.eq.s32.totalorder %s10, 1
    %p132 = por %p130, %p131
    %p133 = scmp.ne.s32.totalorder %s125, %s128
    %p134 = scmp.eq.s32.totalorder %s10, 0
    %p135 = por %p133, %p134
    %p136 = scmp.ne.s32.totalorder %s125, %s128
    %p137 = scmp.eq.s32.totalorder %s15, 1
    %p138 = por %p136, %p137
    %p139 = scmp.ne.s32.totalorder %s128, %s129
    %p140 = scmp.eq.s32.totalorder %s15, 0
    %p141 = por %p139, %p140
    %p142 = scmp.ne.s32.totalorder %s128, %s129
    %p143 = scmp.eq.s32.totalorder %s16, 1
    %p144 = por %p142, %p143
    %p146 = scmp.ne.s32.totalorder %s129, %s145
    %p147 = scmp.eq.s32.totalorder %s16, 0
    %p148 = por %p146, %p147
    %p149 = scmp.le.s32.totalorder 1, %s10
    %p150 = scmp.lt.s32.totalorder %s10, 3
    %p151 = pnand %p149, %p150
    %p152 = pneg %p151
    // Predicated region
    $region9: #{downsample_forward.1} parent=5 // pred_check
      _
    $region10: #{downsample_forward.1} parent=5 // pred_check_branch
      %154 = sbr.rel (%p151) target = $region12
    $region11: #{downsample_forward.1} parent=5 // pred_region
      %s155 = ssub.s32 %s10, 1
      // Predicated region
      $region13: #{downsample_forward.1} parent=11 // pred_check
        %p156 = pneg %p71
      $region14: #{downsample_forward.1} parent=11 // pred_check_branch
        %158 = sbr.rel (%p156) target = $region16
      $region15: #{downsample_forward.1} parent=11 // pred_region
        _
      $region16: #{downsample_forward.1} parent=11 // pred_fallthru
        _
      // Predicated region
      $region17: #{downsample_forward.1} parent=11 // pred_check
        %p159 = pneg %p92
      $region18: #{downsample_forward.1} parent=11 // pred_check_branch
        %161 = sbr.rel (%p159) target = $region20
      $region19: #{downsample_forward.1} parent=11 // pred_region
        _
      $region20: #{downsample_forward.1} parent=11 // pred_fallthru
        _
      // Predicated region
      $region21: #{downsample_forward.1} parent=11 // pred_check
        %p162 = pneg %p113
      $region22: #{downsample_forward.1} parent=11 // pred_check_branch
        %164 = sbr.rel (%p162) target = $region24
      $region23: #{downsample_forward.1} parent=11 // pred_region
        _
      $region24: #{downsample_forward.1} parent=11 // pred_fallthru
        _
    $region12: #{downsample_forward.1} parent=5 // pred_fallthru
      _
    %p165 = scmp.lt.s32.totalorder %s10, 2
    // Predicated region
    $region25: #{downsample_forward.1} parent=5 // pred_check
      %p166 = pneg %p165
    $region26: #{downsample_forward.1} parent=5 // pred_check_branch
      %168 = sbr.rel (%p166) target = $region28
    $region27: #{downsample_forward.1} parent=5 // pred_region
      // Predicated region
      $region29: #{downsample_forward.1} parent=27 // pred_check
        %p169 = pneg %p44
      $region30: #{downsample_forward.1} parent=27 // pred_check_branch
        %171 = sbr.rel (%p169) target = $region32
      $region31: #{downsample_forward.1} parent=27 // pred_region
        %s172 = smul.u32 2, %s18
        %p173 = scmp.lt.s32.totalorder %s17, 1
        %s174 = scalar_select %p173, %s17, 1
        %p175 = scmp.lt.s32.totalorder %s172, 1
        %s176 = scalar_select %p175, %s172, 1
        %s177 = smul.addr %s174, 2
        %s178 = sadd.s32 %s176, %s177
        %s179 = smul.addr %s178, 4
        %s180 = scalar_lea.vmem %s0, %s179
        %s181 = smul.u32 2, %s18
      $region32: #{downsample_forward.1} parent=27 // pred_fallthru
        _
    $region28: #{downsample_forward.1} parent=5 // pred_fallthru
      _
    %p182 = scmp.le.s32.totalorder 1, %s10
    %p183 = scmp.lt.s32.totalorder %s10, 3
    %p184 = pnand %p182, %p183
    %p185 = pneg %p184
    // Predicated region
    $region33: #{downsample_forward.1} parent=5 // pred_check
      _
    $region34: #{downsample_forward.1} parent=5 // pred_check_branch
      %187 = sbr.rel (%p184) target = $region36
    $region35: #{downsample_forward.1} parent=5 // pred_region
      %s188 = ssub.s32 %s10, 1
      %s189 = smul.u32 2, %s20
      %p190 = scmp.lt.s32.totalorder %s19, 1
      %s191 = scalar_select %p190, %s19, 1
      %p192 = scmp.lt.s32.totalorder %s189, 1
      %s193 = scalar_select %p192, %s189, 1
      %s194 = smul.addr %s191, 2
      %s195 = sadd.s32 %s193, %s194
      %s196 = smul.addr %s195, 4
      %s197 = scalar_lea.vmem %s0, %s196
      %p198 = pneg %p50
      %p199 = pneg %p47
      %p200 = pneg %p71
      %p201 = pneg %p68
      %p202 = pneg %p92
      %p203 = pneg %p89
      %p204 = pneg %p113
      %p205 = pneg %p110
      %p206 = pneg %p141
      %p207 = pneg %p138
      %p208 = scmp.lt.s32.totalorder %s19, 1
      %s209 = scalar_select %p208, %s19, 1
      %p210 = scmp.lt.s32.totalorder %s20, 0
      %s211 = scalar_select %p210, %s20, 0
      %s212 = sadd.s32 %s211, %s209
      %s213 = smul.addr %s212, 8
      %s214 = scalar_lea.vmem %s4, %s213
      %s215 = smul.u32 2, %s20
      %p216 = scmp.lt.s32.totalorder %s19, 1
      %s217 = scalar_select %p216, %s19, 1
      %p218 = scmp.lt.s32.totalorder %s215, 1
      %s219 = scalar_select %p218, %s215, 1
      %s220 = smul.addr %s217, 2
      %s221 = sadd.s32 %s219, %s220
      %s222 = smul.addr %s221, 4
      %s223 = scalar_lea.vmem %s0, %s222
      %s224 = smul.u32 2, %s20
      %p225 = scmp.lt.s32.totalorder %s19, 1
      %s226 = scalar_select %p225, %s19, 1
      %p227 = scmp.lt.s32.totalorder %s20, 0
      %s228 = scalar_select %p227, %s20, 0
      %s229 = sadd.s32 %s228, %s226
      %s230 = smul.addr %s229, 8
      %s231 = scalar_lea.vmem %s4, %s230
      %v232 = vld [vmem:[%s3] sm:$0xff]
      %v233 = vld [vmem:[%s1] sm:$0xff]
      %s234 = scalar_lea.vmem %s1, 8
      %v235 = vld [vmem:[%s234] sm:$0xff]
      %s236 = scalar_lea.vmem %s1, 16
      %v237 = vld [vmem:[%s236] sm:$0xff]
      %s238 = scalar_lea.vmem %s1, 24
      %v239 = vld [vmem:[%s238] sm:$0xff]
      %v240 = vld [vmem:[%s2] sm:$0xff]
      %v241 = vld [vmem:[%s2 + $0x8] sm:$0xff]
      %s242 = scalar_lea.vmem %s2, 16
      %v243 = vld [vmem:[%s242] sm:$0xff]
      %v244 = vld [vmem:[%s242 + $0x8] sm:$0xff]
      %v245 = vld [vmem:[%s223] sm:$0xf]
      %vm246 = vcmask 130048
      %v248 = vsel %vm246, %v245, 0
      %250 = vmatprep.subr.mxu0 0.0
      %251 = vmatpush1.msra.mxu0 %v240
      %252 = vmatprep.subr.mxu0 0.0
      %253 = vmatpush1.msra.mxu0 %v241
      %254 = vmatprep.subr.mxu0 0.0
      %255 = vmatpush1.msra.mxu0 0.0
      %256 = vmatprep.subr.mxu0 0.0
      %257 = vmatpush1.msra.mxu0 0.0
      %258 = vmatprep.subr.mxu0 0.0
      %259 = vmatpush1.msra.mxu0 0.0
      %260 = vmatprep.subr.mxu0 0.0
      %261 = vmatpush1.msra.mxu0 0.0
      %262 = vmatprep.subr.mxu0 0.0
      %263 = vmatpush1.msra.mxu0 0.0
      %264 = vmatprep.subr.mxu0 0.0
      %265 = vmatpush1.msra.mxu0 0.0
      %266 = vmatprep.subr.mxu0 0.0
      %267 = vmatpush1.msra.mxu0 0.0
      %268 = vmatprep.subr.mxu0 0.0
      %269 = vmatpush1.msra.mxu0 0.0
      %270 = vmatprep.subr.mxu0 0.0
      %271 = vmatpush1.msra.mxu0 0.0
      %272 = vmatprep.subr.mxu0 0.0
      %273 = vmatpush1.msra.mxu0 0.0
      %274 = vmatprep.subr.mxu0 0.0
      %275 = vmatpush1.msra.mxu0 0.0
      %276 = vmatprep.subr.mxu0 0.0
      %277 = vmatpush1.msra.mxu0 0.0
      %278 = vmatprep.subr.mxu0 0.0
      %279 = vmatpush1.msra.mxu0 0.0
      %280 = vmatprep.subr.mxu0 0.0
      %281 = vmatpush1.msra.mxu0 0.0
      %282 = vmatprep.subr.mxu0 0.0
      %283 = vmatpush1.msra.mxu0 0.0
      %284 = vmatprep.subr.mxu0 0.0
      %285 = vmatpush1.msra.mxu0 0.0
      %286 = vmatprep.subr.mxu0 0.0
      %287 = vmatpush1.msra.mxu0 0.0
      %288 = vmatprep.subr.mxu0 0.0
      %289 = vmatpush1.msra.mxu0 0.0
      %290 = vmatprep.subr.mxu0 0.0
      %291 = vmatpush1.msra.mxu0 0.0
      %292 = vmatprep.subr.mxu0 0.0
      %293 = vmatpush1.msra.mxu0 0.0
      %294 = vmatprep.subr.mxu0 0.0
      %295 = vmatpush1.msra.mxu0 0.0
      %296 = vmatprep.subr.mxu0 0.0
      %297 = vmatpush1.msra.mxu0 0.0
      %298 = vmatprep.subr.mxu0 0.0
      %299 = vmatpush1.msra.mxu0 0.0
      %300 = vmatprep.subr.mxu0 0.0
      %301 = vmatpush1.msra.mxu0 0.0
      %302 = vmatprep.subr.mxu0 0.0
      %303 = vmatpush1.msra.mxu0 0.0
      %304 = vmatprep.subr.mxu0 0.0
      %305 = vmatpush1.msra.mxu0 0.0
      %306 = vmatprep.subr.mxu0 0.0
      %307 = vmatpush1.msra.mxu0 0.0
      %308 = vmatprep.subr.mxu0 0.0
      %309 = vmatpush1.msra.mxu0 0.0
      %310 = vmatprep.subr.mxu0 0.0
      %311 = vmatpush1.msra.mxu0 0.0
      %312 = vmatprep.subr.mxu0 0.0
      %313 = vmatpush1.msra.mxu0 0.0
      %314 = vmatprep.mubr.f32.mxu0 0.0
      %315 = vmatmul.mubr.f32.gmra.mrb[0].mxu0 %v248
      %v316 = vpop.f32.mrb[0].mxu0
      %v317 = vadd.f32 0.0, %v316
      %v318 = vpop.f32.mrb[0].mxu0
      %319 = vdwg.mxu0
      %320 = vmatprep.subr.mxu0 0.0
      %321 = vmatpush1.msra.mxu0 %v243
      %322 = vmatprep.subr.mxu0 0.0
      %323 = vmatpush1.msra.mxu0 %v244
      %324 = vmatprep.subr.mxu0 0.0
      %325 = vmatpush1.msra.mxu0 0.0
      %326 = vmatprep.subr.mxu0 0.0
      %327 = vmatpush1.msra.mxu0 0.0
      %328 = vmatprep.subr.mxu0 0.0
      %329 = vmatpush1.msra.mxu0 0.0
      %330 = vmatprep.subr.mxu0 0.0
      %331 = vmatpush1.msra.mxu0 0.0
      %332 = vmatprep.subr.mxu0 0.0
      %333 = vmatpush1.msra.mxu0 0.0
      %334 = vmatprep.subr.mxu0 0.0
      %335 = vmatpush1.msra.mxu0 0.0
      %336 = vmatprep.subr.mxu0 0.0
      %337 = vmatpush1.msra.mxu0 0.0
      %338 = vmatprep.subr.mxu0 0.0
      %339 = vmatpush1.msra.mxu0 0.0
      %340 = vmatprep.subr.mxu0 0.0
      %341 = vmatpush1.msra.mxu0 0.0
      %342 = vmatprep.subr.mxu0 0.0
      %343 = vmatpush1.msra.mxu0 0.0
      %344 = vmatprep.subr.mxu0 0.0
      %345 = vmatpush1.msra.mxu0 0.0
      %346 = vmatprep.subr.mxu0 0.0
      %347 = vmatpush1.msra.mxu0 0.0
      %348 = vmatprep.subr.mxu0 0.0
      %349 = vmatpush1.msra.mxu0 0.0
      %350 = vmatprep.subr.mxu0 0.0
      %351 = vmatpush1.msra.mxu0 0.0
      %352 = vmatprep.subr.mxu0 0.0
      %353 = vmatpush1.msra.mxu0 0.0
      %354 = vmatprep.subr.mxu0 0.0
      %355 = vmatpush1.msra.mxu0 0.0
      %356 = vmatprep.subr.mxu0 0.0
      %357 = vmatpush1.msra.mxu0 0.0
      %358 = vmatprep.subr.mxu0 0.0
      %359 = vmatpush1.msra.mxu0 0.0
      %360 = vmatprep.subr.mxu0 0.0
      %361 = vmatpush1.msra.mxu0 0.0
      %362 = vmatprep.subr.mxu0 0.0
      %363 = vmatpush1.msra.mxu0 0.0
      %364 = vmatprep.subr.mxu0 0.0
      %365 = vmatpush1.msra.mxu0 0.0
      %366 = vmatprep.subr.mxu0 0.0
      %367 = vmatpush1.msra.mxu0 0.0
      %368 = vmatprep.subr.mxu0 0.0
      %369 = vmatpush1.msra.mxu0 0.0
      %370 = vmatprep.subr.mxu0 0.0
      %371 = vmatpush1.msra.mxu0 0.0
      %372 = vmatprep.subr.mxu0 0.0
      %373 = vmatpush1.msra.mxu0 0.0
      %374 = vmatprep.subr.mxu0 0.0
      %375 = vmatpush1.msra.mxu0 0.0
      %376 = vmatprep.subr.mxu0 0.0
      %377 = vmatpush1.msra.mxu0 0.0
      %378 = vmatprep.subr.mxu0 0.0
      %379 = vmatpush1.msra.mxu0 0.0
      %380 = vmatprep.subr.mxu0 0.0
      %381 = vmatpush1.msra.mxu0 0.0
      %382 = vmatprep.subr.mxu0 0.0
      %383 = vmatpush1.msra.mxu0 0.0
      %384 = vmatprep.mubr.f32.mxu0 0.0
      %385 = vmatmul.mubr.f32.gmra.mrb[0].mxu0 %v248
      %v386 = vpop.f32.mrb[0].mxu0
      %v387 = vadd.f32 0.0, %v386
      %v388 = vpop.f32.mrb[0].mxu0
      %389 = vdwg.mxu0
      %vm390 = vcmask 31744
      %v392 = vsel %vm390, %v235, 0
      %vm394 = vcmask 1043456
      %v396 = vsel %vm394, %v387, 0
      %398 = vmatprep.subr.mxu0 0.0
      %399 = vmatpush1.msra.mxu0 %v396
      %400 = vmatprep.subr.mxu0 0.0
      %401 = vmatpush1.msra.mxu0 0.0
      %402 = vmatprep.subr.mxu0 0.0
      %403 = vmatpush1.msra.mxu0 0.0
      %404 = vmatprep.subr.mxu0 0.0
      %405 = vmatpush1.msra.mxu0 0.0
      %406 = vmatprep.subr.mxu0 0.0
      %407 = vmatpush1.msra.mxu0 0.0
      %408 = vmatprep.subr.mxu0 0.0
      %409 = vmatpush1.msra.mxu0 0.0
      %410 = vmatprep.subr.mxu0 0.0
      %411 = vmatpush1.msra.mxu0 0.0
      %412 = vmatprep.subr.mxu0 0.0
      %413 = vmatpush1.msra.mxu0 0.0
      %414 = vmatprep.subr.mxu0 0.0
      %415 = vmatpush1.msra.mxu0 0.0
      %416 = vmatprep.subr.mxu0 0.0
      %417 = vmatpush1.msra.mxu0 0.0
      %418 = vmatprep.subr.mxu0 0.0
      %419 = vmatpush1.msra.mxu0 0.0
      %420 = vmatprep.subr.mxu0 0.0
      %421 = vmatpush1.msra.mxu0 0.0
      %422 = vmatprep.subr.mxu0 0.0
      %423 = vmatpush1.msra.mxu0 0.0
      %424 = vmatprep.subr.mxu0 0.0
      %425 = vmatpush1.msra.mxu0 0.0
      %426 = vmatprep.subr.mxu0 0.0
      %427 = vmatpush1.msra.mxu0 0.0
      %428 = vmatprep.subr.mxu0 0.0
      %429 = vmatpush1.msra.mxu0 0.0
      %430 = vmatprep.subr.mxu0 0.0
      %431 = vmatpush1.msra.mxu0 0.0
      %432 = vmatprep.subr.mxu0 0.0
      %433 = vmatpush1.msra.mxu0 0.0
      %434 = vmatprep.subr.mxu0 0.0
      %435 = vmatpush1.msra.mxu0 0.0
      %436 = vmatprep.subr.mxu0 0.0
      %437 = vmatpush1.msra.mxu0 0.0
      %438 = vmatprep.subr.mxu0 0.0
      %439 = vmatpush1.msra.mxu0 0.0
      %440 = vmatprep.subr.mxu0 0.0
      %441 = vmatpush1.msra.mxu0 0.0
      %442 = vmatprep.subr.mxu0 0.0
      %443 = vmatpush1.msra.mxu0 0.0
      %444 = vmatprep.subr.mxu0 0.0
      %445 = vmatpush1.msra.mxu0 0.0
      %446 = vmatprep.subr.mxu0 0.0
      %447 = vmatpush1.msra.mxu0 0.0
      %448 = vmatprep.subr.mxu0 0.0
      %449 = vmatpush1.msra.mxu0 0.0
      %450 = vmatprep.subr.mxu0 0.0
      %451 = vmatpush1.msra.mxu0 0.0
      %452 = vmatprep.subr.mxu0 0.0
      %453 = vmatpush1.msra.mxu0 0.0
      %454 = vmatprep.subr.mxu0 0.0
      %455 = vmatpush1.msra.mxu0 0.0
      %456 = vmatprep.subr.mxu0 0.0
      %457 = vmatpush1.msra.mxu0 0.0
      %458 = vmatprep.subr.mxu0 0.0
      %459 = vmatpush1.msra.mxu0 0.0
      %460 = vmatprep.subr.mxu0 0.0
      %461 = vmatpush1.msra.mxu0 0.0
      %462 = vmatprep.mubr.f32.mxu0 0.0
      %463 = vmatmul.mubr.f32.gmra.mrb[0].mxu0 %v392
      %v464 = vpop.f32.mrb[0].mxu0
      %v465 = vadd.f32 0.0, %v464
      %v466 = vpop.f32.mrb[0].mxu0
      %467 = vdwg.mxu0
      %v469 = vsel %vm390, %v233, 0
      %v472 = vsel %vm394, %v317, 0
      %474 = vmatprep.subr.mxu0 0.0
      %475 = vmatpush1.msra.mxu0 %v472
      %476 = vmatprep.subr.mxu0 0.0
      %477 = vmatpush1.msra.mxu0 0.0
      %478 = vmatprep.subr.mxu0 0.0
      %479 = vmatpush1.msra.mxu0 0.0
      %480 = vmatprep.subr.mxu0 0.0
      %481 = vmatpush1.msra.mxu0 0.0
      %482 = vmatprep.subr.mxu0 0.0
      %483 = vmatpush1.msra.mxu0 0.0
      %484 = vmatprep.subr.mxu0 0.0
      %485 = vmatpush1.msra.mxu0 0.0
      %486 = vmatprep.subr.mxu0 0.0
      %487 = vmatpush1.msra.mxu0 0.0
      %488 = vmatprep.subr.mxu0 0.0
      %489 = vmatpush1.msra.mxu0 0.0
      %490 = vmatprep.subr.mxu0 0.0
      %491 = vmatpush1.msra.mxu0 0.0
      %492 = vmatprep.subr.mxu0 0.0
      %493 = vmatpush1.msra.mxu0 0.0
      %494 = vmatprep.subr.mxu0 0.0
      %495 = vmatpush1.msra.mxu0 0.0
      %496 = vmatprep.subr.mxu0 0.0
      %497 = vmatpush1.msra.mxu0 0.0
      %498 = vmatprep.subr.mxu0 0.0
      %499 = vmatpush1.msra.mxu0 0.0
      %500 = vmatprep.subr.mxu0 0.0
      %501 = vmatpush1.msra.mxu0 0.0
      %502 = vmatprep.subr.mxu0 0.0
      %503 = vmatpush1.msra.mxu0 0.0
      %504 = vmatprep.subr.mxu0 0.0
      %505 = vmatpush1.msra.mxu0 0.0
      %506 = vmatprep.subr.mxu0 0.0
      %507 = vmatpush1.msra.mxu0 0.0
      %508 = vmatprep.subr.mxu0 0.0
      %509 = vmatpush1.msra.mxu0 0.0
      %510 = vmatprep.subr.mxu0 0.0
      %511 = vmatpush1.msra.mxu0 0.0
      %512 = vmatprep.subr.mxu0 0.0
      %513 = vmatpush1.msra.mxu0 0.0
      %514 = vmatprep.subr.mxu0 0.0
      %515 = vmatpush1.msra.mxu0 0.0
      %516 = vmatprep.subr.mxu0 0.0
      %517 = vmatpush1.msra.mxu0 0.0
      %518 = vmatprep.subr.mxu0 0.0
      %519 = vmatpush1.msra.mxu0 0.0
      %520 = vmatprep.subr.mxu0 0.0
      %521 = vmatpush1.msra.mxu0 0.0
      %522 = vmatprep.subr.mxu0 0.0
      %523 = vmatpush1.msra.mxu0 0.0
      %524 = vmatprep.subr.mxu0 0.0
      %525 = vmatpush1.msra.mxu0 0.0
      %526 = vmatprep.subr.mxu0 0.0
      %527 = vmatpush1.msra.mxu0 0.0
      %528 = vmatprep.subr.mxu0 0.0
      %529 = vmatpush1.msra.mxu0 0.0
      %530 = vmatprep.subr.mxu0 0.0
      %531 = vmatpush1.msra.mxu0 0.0
      %532 = vmatprep.subr.mxu0 0.0
      %533 = vmatpush1.msra.mxu0 0.0
      %534 = vmatprep.subr.mxu0 0.0
      %535 = vmatpush1.msra.mxu0 0.0
      %536 = vmatprep.subr.mxu0 0.0
      %537 = vmatpush1.msra.mxu0 0.0
      %538 = vmatprep.mubr.f32.mxu0 0.0
      %539 = vmatmul.mubr.f32.gmra.mrb[0].mxu0 %v469
      %v540 = vpop.f32.mrb[0].mxu0
      %v541 = vadd.f32 %v465, %v540
      %v542 = vpop.f32.mrb[0].mxu0
      %543 = vdwg.mxu0
      %544 = vrot.lane.b32.xlu0 %v245, 112
      %v545 = vpop.permute.xlu0 %544
      %v546 = vsel %vm246, %v545, 0
      %548 = vmatprep.subr.mxu0 0.0
      %549 = vmatpush1.msra.mxu0 %v240
      %550 = vmatprep.subr.mxu0 0.0
      %551 = vmatpush1.msra.mxu0 %v241
      %552 = vmatprep.subr.mxu0 0.0
      %553 = vmatpush1.msra.mxu0 0.0
      %554 = vmatprep.subr.mxu0 0.0
      %555 = vmatpush1.msra.mxu0 0.0
      %556 = vmatprep.subr.mxu0 0.0
      %557 = vmatpush1.msra.mxu0 0.0
      %558 = vmatprep.subr.mxu0 0.0
      %559 = vmatpush1.msra.mxu0 0.0
      %560 = vmatprep.subr.mxu0 0.0
      %561 = vmatpush1.msra.mxu0 0.0
      %562 = vmatprep.subr.mxu0 0.0
      %563 = vmatpush1.msra.mxu0 0.0
      %564 = vmatprep.subr.mxu0 0.0
      %565 = vmatpush1.msra.mxu0 0.0
      %566 = vmatprep.subr.mxu0 0.0
      %567 = vmatpush1.msra.mxu0 0.0
      %568 = vmatprep.subr.mxu0 0.0
      %569 = vmatpush1.msra.mxu0 0.0
      %570 = vmatprep.subr.mxu0 0.0
      %571 = vmatpush1.msra.mxu0 0.0
      %572 = vmatprep.subr.mxu0 0.0
      %573 = vmatpush1.msra.mxu0 0.0
      %574 = vmatprep.subr.mxu0 0.0
      %575 = vmatpush1.msra.mxu0 0.0
      %576 = vmatprep.subr.mxu0 0.0
      %577 = vmatpush1.msra.mxu0 0.0
      %578 = vmatprep.subr.mxu0 0.0
      %579 = vmatpush1.msra.mxu0 0.0
      %580 = vmatprep.subr.mxu0 0.0
      %581 = vmatpush1.msra.mxu0 0.0
      %582 = vmatprep.subr.mxu0 0.0
      %583 = vmatpush1.msra.mxu0 0.0
      %584 = vmatprep.subr.mxu0 0.0
      %585 = vmatpush1.msra.mxu0 0.0
      %586 = vmatprep.subr.mxu0 0.0
      %587 = vmatpush1.msra.mxu0 0.0
      %588 = vmatprep.subr.mxu0 0.0
      %589 = vmatpush1.msra.mxu0 0.0
      %590 = vmatprep.subr.mxu0 0.0
      %591 = vmatpush1.msra.mxu0 0.0
      %592 = vmatprep.subr.mxu0 0.0
      %593 = vmatpush1.msra.mxu0 0.0
      %594 = vmatprep.subr.mxu0 0.0
      %595 = vmatpush1.msra.mxu0 0.0
      %596 = vmatprep.subr.mxu0 0.0
      %597 = vmatpush1.msra.mxu0 0.0
      %598 = vmatprep.subr.mxu0 0.0
      %599 = vmatpush1.msra.mxu0 0.0
      %600 = vmatprep.subr.mxu0 0.0
      %601 = vmatpush1.msra.mxu0 0.0
      %602 = vmatprep.subr.mxu0 0.0
      %603 = vmatpush1.msra.mxu0 0.0
      %604 = vmatprep.subr.mxu0 0.0
      %605 = vmatpush1.msra.mxu0 0.0
      %606 = vmatprep.subr.mxu0 0.0
      %607 = vmatpush1.msra.mxu0 0.0
      %608 = vmatprep.subr.mxu0 0.0
      %609 = vmatpush1.msra.mxu0 0.0
      %610 = vmatprep.subr.mxu0 0.0
      %611 = vmatpush1.msra.mxu0 0.0
      %612 = vmatprep.mubr.f32.mxu0 0.0
      %613 = vmatmul.mubr.f32.gmra.mrb[0].mxu0 %v546
      %v614 = vpop.f32.mrb[0].mxu0
      %v615 = vadd.f32 0.0, %v614
      %v616 = vpop.f32.mrb[0].mxu0
      %617 = vdwg.mxu0
      %v619 = vsel %vm390, %v237, 0
      %v622 = vsel %vm394, %v615, 0
      %624 = vmatprep.subr.mxu0 0.0
      %625 = vmatpush1.msra.mxu0 %v622
      %626 = vmatprep.subr.mxu0 0.0
      %627 = vmatpush1.msra.mxu0 0.0
      %628 = vmatprep.subr.mxu0 0.0
      %629 = vmatpush1.msra.mxu0 0.0
      %630 = vmatprep.subr.mxu0 0.0
      %631 = vmatpush1.msra.mxu0 0.0
      %632 = vmatprep.subr.mxu0 0.0
      %633 = vmatpush1.msra.mxu0 0.0
      %634 = vmatprep.subr.mxu0 0.0
      %635 = vmatpush1.msra.mxu0 0.0
      %636 = vmatprep.subr.mxu0 0.0
      %637 = vmatpush1.msra.mxu0 0.0
      %638 = vmatprep.subr.mxu0 0.0
      %639 = vmatpush1.msra.mxu0 0.0
      %640 = vmatprep.subr.mxu0 0.0
      %641 = vmatpush1.msra.mxu0 0.0
      %642 = vmatprep.subr.mxu0 0.0
      %643 = vmatpush1.msra.mxu0 0.0
      %644 = vmatprep.subr.mxu0 0.0
      %645 = vmatpush1.msra.mxu0 0.0
      %646 = vmatprep.subr.mxu0 0.0
      %647 = vmatpush1.msra.mxu0 0.0
      %648 = vmatprep.subr.mxu0 0.0
      %649 = vmatpush1.msra.mxu0 0.0
      %650 = vmatprep.subr.mxu0 0.0
      %651 = vmatpush1.msra.mxu0 0.0
      %652 = vmatprep.subr.mxu0 0.0
      %653 = vmatpush1.msra.mxu0 0.0
      %654 = vmatprep.subr.mxu0 0.0
      %655 = vmatpush1.msra.mxu0 0.0
      %656 = vmatprep.subr.mxu0 0.0
      %657 = vmatpush1.msra.mxu0 0.0
      %658 = vmatprep.subr.mxu0 0.0
      %659 = vmatpush1.msra.mxu0 0.0
      %660 = vmatprep.subr.mxu0 0.0
      %661 = vmatpush1.msra.mxu0 0.0
      %662 = vmatprep.subr.mxu0 0.0
      %663 = vmatpush1.msra.mxu0 0.0
      %664 = vmatprep.subr.mxu0 0.0
      %665 = vmatpush1.msra.mxu0 0.0
      %666 = vmatprep.subr.mxu0 0.0
      %667 = vmatpush1.msra.mxu0 0.0
      %668 = vmatprep.subr.mxu0 0.0
      %669 = vmatpush1.msra.mxu0 0.0
      %670 = vmatprep.subr.mxu0 0.0
      %671 = vmatpush1.msra.mxu0 0.0
      %672 = vmatprep.subr.mxu0 0.0
      %673 = vmatpush1.msra.mxu0 0.0
      %674 = vmatprep.subr.mxu0 0.0
      %675 = vmatpush1.msra.mxu0 0.0
      %676 = vmatprep.subr.mxu0 0.0
      %677 = vmatpush1.msra.mxu0 0.0
      %678 = vmatprep.subr.mxu0 0.0
      %679 = vmatpush1.msra.mxu0 0.0
      %680 = vmatprep.subr.mxu0 0.0
      %681 = vmatpush1.msra.mxu0 0.0
      %682 = vmatprep.subr.mxu0 0.0
      %683 = vmatpush1.msra.mxu0 0.0
      %684 = vmatprep.subr.mxu0 0.0
      %685 = vmatpush1.msra.mxu0 0.0
      %686 = vmatprep.subr.mxu0 0.0
      %687 = vmatpush1.msra.mxu0 0.0
      %688 = vmatprep.mubr.f32.mxu0 0.0
      %689 = vmatmul.mubr.f32.gmra.mrb[0].mxu0 %v619
      %v690 = vpop.f32.mrb[0].mxu0
      %v691 = vadd.f32 0.0, %v690
      %v692 = vpop.f32.mrb[0].mxu0
      %693 = vdwg.mxu0
      %v694 = vadd.f32 %v541, %v691
      %695 = vmatprep.subr.mxu0 0.0
      %696 = vmatpush1.msra.mxu0 %v243
      %697 = vmatprep.subr.mxu0 0.0
      %698 = vmatpush1.msra.mxu0 %v244
      %699 = vmatprep.subr.mxu0 0.0
      %700 = vmatpush1.msra.mxu0 0.0
      %701 = vmatprep.subr.mxu0 0.0
      %702 = vmatpush1.msra.mxu0 0.0
      %703 = vmatprep.subr.mxu0 0.0
      %704 = vmatpush1.msra.mxu0 0.0
      %705 = vmatprep.subr.mxu0 0.0
      %706 = vmatpush1.msra.mxu0 0.0
      %707 = vmatprep.subr.mxu0 0.0
      %708 = vmatpush1.msra.mxu0 0.0
      %709 = vmatprep.subr.mxu0 0.0
      %710 = vmatpush1.msra.mxu0 0.0
      %711 = vmatprep.subr.mxu0 0.0
      %712 = vmatpush1.msra.mxu0 0.0
      %713 = vmatprep.subr.mxu0 0.0
      %714 = vmatpush1.msra.mxu0 0.0
      %715 = vmatprep.subr.mxu0 0.0
      %716 = vmatpush1.msra.mxu0 0.0
      %717 = vmatprep.subr.mxu0 0.0
      %718 = vmatpush1.msra.mxu0 0.0
      %719 = vmatprep.subr.mxu0 0.0
      %720 = vmatpush1.msra.mxu0 0.0
      %721 = vmatprep.subr.mxu0 0.0
      %722 = vmatpush1.msra.mxu0 0.0
      %723 = vmatprep.subr.mxu0 0.0
      %724 = vmatpush1.msra.mxu0 0.0
      %725 = vmatprep.subr.mxu0 0.0
      %726 = vmatpush1.msra.mxu0 0.0
      %727 = vmatprep.subr.mxu0 0.0
      %728 = vmatpush1.msra.mxu0 0.0
      %729 = vmatprep.subr.mxu0 0.0
      %730 = vmatpush1.msra.mxu0 0.0
      %731 = vmatprep.subr.mxu0 0.0
      %732 = vmatpush1.msra.mxu0 0.0
      %733 = vmatprep.subr.mxu0 0.0
      %734 = vmatpush1.msra.mxu0 0.0
      %735 = vmatprep.subr.mxu0 0.0
      %736 = vmatpush1.msra.mxu0 0.0
      %737 = vmatprep.subr.mxu0 0.0
      %738 = vmatpush1.msra.mxu0 0.0
      %739 = vmatprep.subr.mxu0 0.0
      %740 = vmatpush1.msra.mxu0 0.0
      %741 = vmatprep.subr.mxu0 0.0
      %742 = vmatpush1.msra.mxu0 0.0
      %743 = vmatprep.subr.mxu0 0.0
      %744 = vmatpush1.msra.mxu0 0.0
      %745 = vmatprep.subr.mxu0 0.0
      %746 = vmatpush1.msra.mxu0 0.0
      %747 = vmatprep.subr.mxu0 0.0
      %748 = vmatpush1.msra.mxu0 0.0
      %749 = vmatprep.subr.mxu0 0.0
      %750 = vmatpush1.msra.mxu0 0.0
      %751 = vmatprep.subr.mxu0 0.0
      %752 = vmatpush1.msra.mxu0 0.0
      %753 = vmatprep.subr.mxu0 0.0
      %754 = vmatpush1.msra.mxu0 0.0
      %755 = vmatprep.subr.mxu0 0.0
      %756 = vmatpush1.msra.mxu0 0.0
      %757 = vmatprep.subr.mxu0 0.0
      %758 = vmatpush1.msra.mxu0 0.0
      %759 = vmatprep.mubr.f32.mxu0 0.0
      %760 = vmatmul.mubr.f32.gmra.mrb[0].mxu0 %v546
      %v761 = vpop.f32.mrb[0].mxu0
      %v762 = vadd.f32 0.0, %v761
      %v763 = vpop.f32.mrb[0].mxu0
      %764 = vdwg.mxu0
      %v766 = vsel %vm390, %v239, 0
      %v769 = vsel %vm394, %v762, 0
      %771 = vmatprep.subr.mxu0 0.0
      %772 = vmatpush1.msra.mxu0 %v769
      %773 = vmatprep.subr.mxu0 0.0
      %774 = vmatpush1.msra.mxu0 0.0
      %775 = vmatprep.subr.mxu0 0.0
      %776 = vmatpush1.msra.mxu0 0.0
      %777 = vmatprep.subr.mxu0 0.0
      %778 = vmatpush1.msra.mxu0 0.0
      %779 = vmatprep.subr.mxu0 0.0
      %780 = vmatpush1.msra.mxu0 0.0
      %781 = vmatprep.subr.mxu0 0.0
      %782 = vmatpush1.msra.mxu0 0.0
      %783 = vmatprep.subr.mxu0 0.0
      %784 = vmatpush1.msra.mxu0 0.0
      %785 = vmatprep.subr.mxu0 0.0
      %786 = vmatpush1.msra.mxu0 0.0
      %787 = vmatprep.subr.mxu0 0.0
      %788 = vmatpush1.msra.mxu0 0.0
      %789 = vmatprep.subr.mxu0 0.0
      %790 = vmatpush1.msra.mxu0 0.0
      %791 = vmatprep.subr.mxu0 0.0
      %792 = vmatpush1.msra.mxu0 0.0
      %793 = vmatprep.subr.mxu0 0.0
      %794 = vmatpush1.msra.mxu0 0.0
      %795 = vmatprep.subr.mxu0 0.0
      %796 = vmatpush1.msra.mxu0 0.0
      %797 = vmatprep.subr.mxu0 0.0
      %798 = vmatpush1.msra.mxu0 0.0
      %799 = vmatprep.subr.mxu0 0.0
      %800 = vmatpush1.msra.mxu0 0.0
      %801 = vmatprep.subr.mxu0 0.0
      %802 = vmatpush1.msra.mxu0 0.0
      %803 = vmatprep.subr.mxu0 0.0
      %804 = vmatpush1.msra.mxu0 0.0
      %805 = vmatprep.subr.mxu0 0.0
      %806 = vmatpush1.msra.mxu0 0.0
      %807 = vmatprep.subr.mxu0 0.0
      %808 = vmatpush1.msra.mxu0 0.0
      %809 = vmatprep.subr.mxu0 0.0
      %810 = vmatpush1.msra.mxu0 0.0
      %811 = vmatprep.subr.mxu0 0.0
      %812 = vmatpush1.msra.mxu0 0.0
      %813 = vmatprep.subr.mxu0 0.0
      %814 = vmatpush1.msra.mxu0 0.0
      %815 = vmatprep.subr.mxu0 0.0
      %816 = vmatpush1.msra.mxu0 0.0
      %817 = vmatprep.subr.mxu0 0.0
      %818 = vmatpush1.msra.mxu0 0.0
      %819 = vmatprep.subr.mxu0 0.0
      %820 = vmatpush1.msra.mxu0 0.0
      %821 = vmatprep.subr.mxu0 0.0
      %822 = vmatpush1.msra.mxu0 0.0
      %823 = vmatprep.subr.mxu0 0.0
      %824 = vmatpush1.msra.mxu0 0.0
      %825 = vmatprep.subr.mxu0 0.0
      %826 = vmatpush1.msra.mxu0 0.0
      %827 = vmatprep.subr.mxu0 0.0
      %828 = vmatpush1.msra.mxu0 0.0
      %829 = vmatprep.subr.mxu0 0.0
      %830 = vmatpush1.msra.mxu0 0.0
      %831 = vmatprep.subr.mxu0 0.0
      %832 = vmatpush1.msra.mxu0 0.0
      %833 = vmatprep.subr.mxu0 0.0
      %834 = vmatpush1.msra.mxu0 0.0
      %835 = vmatprep.mubr.f32.mxu0 0.0
      %836 = vmatmul.mubr.f32.gmra.mrb[0].mxu0 %v766
      %v837 = vpop.f32.mrb[0].mxu0
      %v838 = vadd.f32 0.0, %v837
      %v839 = vpop.f32.mrb[0].mxu0
      %840 = vdwg.mxu0
      %v841 = vadd.f32 %v694, %v838
      %843 = vset.pattern.permute.xlu0 0
      %844 = vperm.xlu0 %843, %v232
      %v845 = vpop.permute.xlu0 %844
      %v847 = vadd.f32 %v841, %v845
      %vm848 = vcmask 64512
      %849 = vst.msk [vmem:[%s231] sm:$0xff] %vm848, %v847
      %v850 = vld [vmem:[%s223] sm:$0xf]
      %852 = vrot.lane.b32.xlu0 %v850, 96
      %v853 = vpop.permute.xlu0 %852
      %v854 = vsel %vm246, %v853, 0
      %856 = vmatprep.subr.mxu0 0.0
      %857 = vmatpush1.msra.mxu0 %v240
      %858 = vmatprep.subr.mxu0 0.0
      %859 = vmatpush1.msra.mxu0 %v241
      %860 = vmatprep.subr.mxu0 0.0
      %861 = vmatpush1.msra.mxu0 0.0
      %862 = vmatprep.subr.mxu0 0.0
      %863 = vmatpush1.msra.mxu0 0.0
      %864 = vmatprep.subr.mxu0 0.0
      %865 = vmatpush1.msra.mxu0 0.0
      %866 = vmatprep.subr.mxu0 0.0
      %867 = vmatpush1.msra.mxu0 0.0
      %868 = vmatprep.subr.mxu0 0.0
      %869 = vmatpush1.msra.mxu0 0.0
      %870 = vmatprep.subr.mxu0 0.0
      %871 = vmatpush1.msra.mxu0 0.0
      %872 = vmatprep.subr.mxu0 0.0
      %873 = vmatpush1.msra.mxu0 0.0
      %874 = vmatprep.subr.mxu0 0.0
      %875 = vmatpush1.msra.mxu0 0.0
      %876 = vmatprep.subr.mxu0 0.0
      %877 = vmatpush1.msra.mxu0 0.0
      %878 = vmatprep.subr.mxu0 0.0
      %879 = vmatpush1.msra.mxu0 0.0
      %880 = vmatprep.subr.mxu0 0.0
      %881 = vmatpush1.msra.mxu0 0.0
      %882 = vmatprep.subr.mxu0 0.0
      %883 = vmatpush1.msra.mxu0 0.0
      %884 = vmatprep.subr.mxu0 0.0
      %885 = vmatpush1.msra.mxu0 0.0
      %886 = vmatprep.subr.mxu0 0.0
      %887 = vmatpush1.msra.mxu0 0.0
      %888 = vmatprep.subr.mxu0 0.0
      %889 = vmatpush1.msra.mxu0 0.0
      %890 = vmatprep.subr.mxu0 0.0
      %891 = vmatpush1.msra.mxu0 0.0
      %892 = vmatprep.subr.mxu0 0.0
      %893 = vmatpush1.msra.mxu0 0.0
      %894 = vmatprep.subr.mxu0 0.0
      %895 = vmatpush1.msra.mxu0 0.0
      %896 = vmatprep.subr.mxu0 0.0
      %897 = vmatpush1.msra.mxu0 0.0
      %898 = vmatprep.subr.mxu0 0.0
      %899 = vmatpush1.msra.mxu0 0.0
      %900 = vmatprep.subr.mxu0 0.0
      %901 = vmatpush1.msra.mxu0 0.0
      %902 = vmatprep.subr.mxu0 0.0
      %903 = vmatpush1.msra.mxu0 0.0
      %904 = vmatprep.subr.mxu0 0.0
      %905 = vmatpush1.msra.mxu0 0.0
      %906 = vmatprep.subr.mxu0 0.0
      %907 = vmatpush1.msra.mxu0 0.0
      %908 = vmatprep.subr.mxu0 0.0
      %909 = vmatpush1.msra.mxu0 0.0
      %910 = vmatprep.subr.mxu0 0.0
      %911 = vmatpush1.msra.mxu0 0.0
      %912 = vmatprep.subr.mxu0 0.0
      %913 = vmatpush1.msra.mxu0 0.0
      %914 = vmatprep.subr.mxu0 0.0
      %915 = vmatpush1.msra.mxu0 0.0
      %916 = vmatprep.subr.mxu0 0.0
      %917 = vmatpush1.msra.mxu0 0.0
      %918 = vmatprep.subr.mxu0 0.0
      %919 = vmatpush1.msra.mxu0 0.0
      %920 = vmatprep.mubr.f32.mxu0 0.0
      %921 = vmatmul.mubr.f32.gmra.mrb[0].mxu0 %v854
      %v922 = vpop.f32.mrb[0].mxu0
      %v923 = vadd.f32 0.0, %v922
      %v924 = vpop.f32.mrb[0].mxu0
      %925 = vdwg.mxu0
      %926 = vmatprep.subr.mxu0 0.0
      %927 = vmatpush1.msra.mxu0 %v243
      %928 = vmatprep.subr.mxu0 0.0
      %929 = vmatpush1.msra.mxu0 %v244
      %930 = vmatprep.subr.mxu0 0.0
      %931 = vmatpush1.msra.mxu0 0.0
      %932 = vmatprep.subr.mxu0 0.0
      %933 = vmatpush1.msra.mxu0 0.0
      %934 = vmatprep.subr.mxu0 0.0
      %935 = vmatpush1.msra.mxu0 0.0
      %936 = vmatprep.subr.mxu0 0.0
      %937 = vmatpush1.msra.mxu0 0.0
      %938 = vmatprep.subr.mxu0 0.0
      %939 = vmatpush1.msra.mxu0 0.0
      %940 = vmatprep.subr.mxu0 0.0
      %941 = vmatpush1.msra.mxu0 0.0
      %942 = vmatprep.subr.mxu0 0.0
      %943 = vmatpush1.msra.mxu0 0.0
      %944 = vmatprep.subr.mxu0 0.0
      %945 = vmatpush1.msra.mxu0 0.0
      %946 = vmatprep.subr.mxu0 0.0
      %947 = vmatpush1.msra.mxu0 0.0
      %948 = vmatprep.subr.mxu0 0.0
      %949 = vmatpush1.msra.mxu0 0.0
      %950 = vmatprep.subr.mxu0 0.0
      %951 = vmatpush1.msra.mxu0 0.0
      %952 = vmatprep.subr.mxu0 0.0
      %953 = vmatpush1.msra.mxu0 0.0
      %954 = vmatprep.subr.mxu0 0.0
      %955 = vmatpush1.msra.mxu0 0.0
      %956 = vmatprep.subr.mxu0 0.0
      %957 = vmatpush1.msra.mxu0 0.0
      %958 = vmatprep.subr.mxu0 0.0
      %959 = vmatpush1.msra.mxu0 0.0
      %960 = vmatprep.subr.mxu0 0.0
      %961 = vmatpush1.msra.mxu0 0.0
      %962 = vmatprep.subr.mxu0 0.0
      %963 = vmatpush1.msra.mxu0 0.0
      %964 = vmatprep.subr.mxu0 0.0
      %965 = vmatpush1.msra.mxu0 0.0
      %966 = vmatprep.subr.mxu0 0.0
      %967 = vmatpush1.msra.mxu0 0.0
      %968 = vmatprep.subr.mxu0 0.0
      %969 = vmatpush1.msra.mxu0 0.0
      %970 = vmatprep.subr.mxu0 0.0
      %971 = vmatpush1.msra.mxu0 0.0
      %972 = vmatprep.subr.mxu0 0.0
      %973 = vmatpush1.msra.mxu0 0.0
      %974 = vmatprep.subr.mxu0 0.0
      %975 = vmatpush1.msra.mxu0 0.0
      %976 = vmatprep.subr.mxu0 0.0
      %977 = vmatpush1.msra.mxu0 0.0
      %978 = vmatprep.subr.mxu0 0.0
      %979 = vmatpush1.msra.mxu0 0.0
      %980 = vmatprep.subr.mxu0 0.0
      %981 = vmatpush1.msra.mxu0 0.0
      %982 = vmatprep.subr.mxu0 0.0
      %983 = vmatpush1.msra.mxu0 0.0
      %984 = vmatprep.subr.mxu0 0.0
      %985 = vmatpush1.msra.mxu0 0.0
      %986 = vmatprep.subr.mxu0 0.0
      %987 = vmatpush1.msra.mxu0 0.0
      %988 = vmatprep.subr.mxu0 0.0
      %989 = vmatpush1.msra.mxu0 0.0
      %990 = vmatprep.mubr.f32.mxu0 0.0
      %991 = vmatmul.mubr.f32.gmra.mrb[0].mxu0 %v854
      %v992 = vpop.f32.mrb[0].mxu0
      %v993 = vadd.f32 0.0, %v992
      %v994 = vpop.f32.mrb[0].mxu0
      %995 = vdwg.mxu0
      %v997 = vsel %vm394, %v993, 0
      %999 = vmatprep.subr.mxu0 0.0
      %1000 = vmatpush1.msra.mxu0 %v997
      %1001 = vmatprep.subr.mxu0 0.0
      %1002 = vmatpush1.msra.mxu0 0.0
      %1003 = vmatprep.subr.mxu0 0.0
      %1004 = vmatpush1.msra.mxu0 0.0
      %1005 = vmatprep.subr.mxu0 0.0
      %1006 = vmatpush1.msra.mxu0 0.0
      %1007 = vmatprep.subr.mxu0 0.0
      %1008 = vmatpush1.msra.mxu0 0.0
      %1009 = vmatprep.subr.mxu0 0.0
      %1010 = vmatpush1.msra.mxu0 0.0
      %1011 = vmatprep.subr.mxu0 0.0
      %1012 = vmatpush1.msra.mxu0 0.0
      %1013 = vmatprep.subr.mxu0 0.0
      %1014 = vmatpush1.msra.mxu0 0.0
      %1015 = vmatprep.subr.mxu0 0.0
      %1016 = vmatpush1.msra.mxu0 0.0
      %1017 = vmatprep.subr.mxu0 0.0
      %1018 = vmatpush1.msra.mxu0 0.0
      %1019 = vmatprep.subr.mxu0 0.0
      %1020 = vmatpush1.msra.mxu0 0.0
      %1021 = vmatprep.subr.mxu0 0.0
      %1022 = vmatpush1.msra.mxu0 0.0
      %1023 = vmatprep.subr.mxu0 0.0
      %1024 = vmatpush1.msra.mxu0 0.0
      %1025 = vmatprep.subr.mxu0 0.0
      %1026 = vmatpush1.msra.mxu0 0.0
      %1027 = vmatprep.subr.mxu0 0.0
      %1028 = vmatpush1.msra.mxu0 0.0
      %1029 = vmatprep.subr.mxu0 0.0
      %1030 = vmatpush1.msra.mxu0 0.0
      %1031 = vmatprep.subr.mxu0 0.0
      %1032 = vmatpush1.msra.mxu0 0.0
      %1033 = vmatprep.subr.mxu0 0.0
      %1034 = vmatpush1.msra.mxu0 0.0
      %1035 = vmatprep.subr.mxu0 0.0
      %1036 = vmatpush1.msra.mxu0 0.0
      %1037 = vmatprep.subr.mxu0 0.0
      %1038 = vmatpush1.msra.mxu0 0.0
      %1039 = vmatprep.subr.mxu0 0.0
      %1040 = vmatpush1.msra.mxu0 0.0
      %1041 = vmatprep.subr.mxu0 0.0
      %1042 = vmatpush1.msra.mxu0 0.0
      %1043 = vmatprep.subr.mxu0 0.0
      %1044 = vmatpush1.msra.mxu0 0.0
      %1045 = vmatprep.subr.mxu0 0.0
      %1046 = vmatpush1.msra.mxu0 0.0
      %1047 = vmatprep.subr.mxu0 0.0
      %1048 = vmatpush1.msra.mxu0 0.0
      %1049 = vmatprep.subr.mxu0 0.0
      %1050 = vmatpush1.msra.mxu0 0.0
      %1051 = vmatprep.subr.mxu0 0.0
      %1052 = vmatpush1.msra.mxu0 0.0
      %1053 = vmatprep.subr.mxu0 0.0
      %1054 = vmatpush1.msra.mxu0 0.0
      %1055 = vmatprep.subr.mxu0 0.0
      %1056 = vmatpush1.msra.mxu0 0.0
      %1057 = vmatprep.subr.mxu0 0.0
      %1058 = vmatpush1.msra.mxu0 0.0
      %1059 = vmatprep.subr.mxu0 0.0
      %1060 = vmatpush1.msra.mxu0 0.0
      %1061 = vmatprep.subr.mxu0 0.0
      %1062 = vmatpush1.msra.mxu0 0.0
      %1063 = vmatprep.mubr.f32.mxu0 0.0
      %1064 = vmatmul.mubr.f32.gmra.mrb[0].mxu0 %v392
      %v1065 = vpop.f32.mrb[0].mxu0
      %v1066 = vadd.f32 0.0, %v1065
      %v1067 = vpop.f32.mrb[0].mxu0
      %1068 = vdwg.mxu0
      %v1070 = vsel %vm394, %v923, 0
      %1072 = vmatprep.subr.mxu0 0.0
      %1073 = vmatpush1.msra.mxu0 %v1070
      %1074 = vmatprep.subr.mxu0 0.0
      %1075 = vmatpush1.msra.mxu0 0.0
      %1076 = vmatprep.subr.mxu0 0.0
      %1077 = vmatpush1.msra.mxu0 0.0
      %1078 = vmatprep.subr.mxu0 0.0
      %1079 = vmatpush1.msra.mxu0 0.0
      %1080 = vmatprep.subr.mxu0 0.0
      %1081 = vmatpush1.msra.mxu0 0.0
      %1082 = vmatprep.subr.mxu0 0.0
      %1083 = vmatpush1.msra.mxu0 0.0
      %1084 = vmatprep.subr.mxu0 0.0
      %1085 = vmatpush1.msra.mxu0 0.0
      %1086 = vmatprep.subr.mxu0 0.0
      %1087 = vmatpush1.msra.mxu0 0.0
      %1088 = vmatprep.subr.mxu0 0.0
      %1089 = vmatpush1.msra.mxu0 0.0
      %1090 = vmatprep.subr.mxu0 0.0
      %1091 = vmatpush1.msra.mxu0 0.0
      %1092 = vmatprep.subr.mxu0 0.0
      %1093 = vmatpush1.msra.mxu0 0.0
      %1094 = vmatprep.subr.mxu0 0.0
      %1095 = vmatpush1.msra.mxu0 0.0
      %1096 = vmatprep.subr.mxu0 0.0
      %1097 = vmatpush1.msra.mxu0 0.0
      %1098 = vmatprep.subr.mxu0 0.0
      %1099 = vmatpush1.msra.mxu0 0.0
      %1100 = vmatprep.subr.mxu0 0.0
      %1101 = vmatpush1.msra.mxu0 0.0
      %1102 = vmatprep.subr.mxu0 0.0
      %1103 = vmatpush1.msra.mxu0 0.0
      %1104 = vmatprep.subr.mxu0 0.0
      %1105 = vmatpush1.msra.mxu0 0.0
      %1106 = vmatprep.subr.mxu0 0.0
      %1107 = vmatpush1.msra.mxu0 0.0
      %1108 = vmatprep.subr.mxu0 0.0
      %1109 = vmatpush1.msra.mxu0 0.0
      %1110 = vmatprep.subr.mxu0 0.0
      %1111 = vmatpush1.msra.mxu0 0.0
      %1112 = vmatprep.subr.mxu0 0.0
      %1113 = vmatpush1.msra.mxu0 0.0
      %1114 = vmatprep.subr.mxu0 0.0
      %1115 = vmatpush1.msra.mxu0 0.0
      %1116 = vmatprep.subr.mxu0 0.0
      %1117 = vmatpush1.msra.mxu0 0.0
      %1118 = vmatprep.subr.mxu0 0.0
      %1119 = vmatpush1.msra.mxu0 0.0
      %1120 = vmatprep.subr.mxu0 0.0
      %1121 = vmatpush1.msra.mxu0 0.0
      %1122 = vmatprep.subr.mxu0 0.0
      %1123 = vmatpush1.msra.mxu0 0.0
      %1124 = vmatprep.subr.mxu0 0.0
      %1125 = vmatpush1.msra.mxu0 0.0
      %1126 = vmatprep.subr.mxu0 0.0
      %1127 = vmatpush1.msra.mxu0 0.0
      %1128 = vmatprep.subr.mxu0 0.0
      %1129 = vmatpush1.msra.mxu0 0.0
      %1130 = vmatprep.subr.mxu0 0.0
      %1131 = vmatpush1.msra.mxu0 0.0
      %1132 = vmatprep.subr.mxu0 0.0
      %1133 = vmatpush1.msra.mxu0 0.0
      %1134 = vmatprep.subr.mxu0 0.0
      %1135 = vmatpush1.msra.mxu0 0.0
      %1136 = vmatprep.mubr.f32.mxu0 0.0
      %1137 = vmatmul.mubr.f32.gmra.mrb[0].mxu0 %v469
      %v1138 = vpop.f32.mrb[0].mxu0
      %v1139 = vadd.f32 %v1066, %v1138
      %v1140 = vpop.f32.mrb[0].mxu0
      %1141 = vdwg.mxu0
      %v1142 = vld [vmem:[%s223] sm:$0xf]
      %1144 = vrot.lane.b32.xlu0 %v1142, 80
      %v1145 = vpop.permute.xlu0 %1144
      %v1146 = vsel %vm246, %v1145, 0
      %1148 = vmatprep.subr.mxu0 0.0
      %1149 = vmatpush1.msra.mxu0 %v240
      %1150 = vmatprep.subr.mxu0 0.0
      %1151 = vmatpush1.msra.mxu0 %v241
      %1152 = vmatprep.subr.mxu0 0.0
      %1153 = vmatpush1.msra.mxu0 0.0
      %1154 = vmatprep.subr.mxu0 0.0
      %1155 = vmatpush1.msra.mxu0 0.0
      %1156 = vmatprep.subr.mxu0 0.0
      %1157 = vmatpush1.msra.mxu0 0.0
      %1158 = vmatprep.subr.mxu0 0.0
      %1159 = vmatpush1.msra.mxu0 0.0
      %1160 = vmatprep.subr.mxu0 0.0
      %1161 = vmatpush1.msra.mxu0 0.0
      %1162 = vmatprep.subr.mxu0 0.0
      %1163 = vmatpush1.msra.mxu0 0.0
      %1164 = vmatprep.subr.mxu0 0.0
      %1165 = vmatpush1.msra.mxu0 0.0
      %1166 = vmatprep.subr.mxu0 0.0
      %1167 = vmatpush1.msra.mxu0 0.0
      %1168 = vmatprep.subr.mxu0 0.0
      %1169 = vmatpush1.msra.mxu0 0.0
      %1170 = vmatprep.subr.mxu0 0.0
      %1171 = vmatpush1.msra.mxu0 0.0
      %1172 = vmatprep.subr.mxu0 0.0
      %1173 = vmatpush1.msra.mxu0 0.0
      %1174 = vmatprep.subr.mxu0 0.0
      %1175 = vmatpush1.msra.mxu0 0.0
      %1176 = vmatprep.subr.mxu0 0.0
      %1177 = vmatpush1.msra.mxu0 0.0
      %1178 = vmatprep.subr.mxu0 0.0
      %1179 = vmatpush1.msra.mxu0 0.0
      %1180 = vmatprep.subr.mxu0 0.0
      %1181 = vmatpush1.msra.mxu0 0.0
      %1182 = vmatprep.subr.mxu0 0.0
      %1183 = vmatpush1.msra.mxu0 0.0
      %1184 = vmatprep.subr.mxu0 0.0
      %1185 = vmatpush1.msra.mxu0 0.0
      %1186 = vmatprep.subr.mxu0 0.0
      %1187 = vmatpush1.msra.mxu0 0.0
      %1188 = vmatprep.subr.mxu0 0.0
      %1189 = vmatpush1.msra.mxu0 0.0
      %1190 = vmatprep.subr.mxu0 0.0
      %1191 = vmatpush1.msra.mxu0 0.0
      %1192 = vmatprep.subr.mxu0 0.0
      %1193 = vmatpush1.msra.mxu0 0.0
      %1194 = vmatprep.subr.mxu0 0.0
      %1195 = vmatpush1.msra.mxu0 0.0
      %1196 = vmatprep.subr.mxu0 0.0
      %1197 = vmatpush1.msra.mxu0 0.0
      %1198 = vmatprep.subr.mxu0 0.0
      %1199 = vmatpush1.msra.mxu0 0.0
      %1200 = vmatprep.subr.mxu0 0.0
      %1201 = vmatpush1.msra.mxu0 0.0
      %1202 = vmatprep.subr.mxu0 0.0
      %1203 = vmatpush1.msra.mxu0 0.0
      %1204 = vmatprep.subr.mxu0 0.0
      %1205 = vmatpush1.msra.mxu0 0.0
      %1206 = vmatprep.subr.mxu0 0.0
      %1207 = vmatpush1.msra.mxu0 0.0
      %1208 = vmatprep.subr.mxu0 0.0
      %1209 = vmatpush1.msra.mxu0 0.0
      %1210 = vmatprep.subr.mxu0 0.0
      %1211 = vmatpush1.msra.mxu0 0.0
      %1212 = vmatprep.mubr.f32.mxu0 0.0
      %1213 = vmatmul.mubr.f32.gmra.mrb[0].mxu0 %v1146
      %v1214 = vpop.f32.mrb[0].mxu0
      %v1215 = vadd.f32 0.0, %v1214
      %v1216 = vpop.f32.mrb[0].mxu0
      %1217 = vdwg.mxu0
      %v1219 = vsel %vm394, %v1215, 0
      %1221 = vmatprep.subr.mxu0 0.0
      %1222 = vmatpush1.msra.mxu0 %v1219
      %1223 = vmatprep.subr.mxu0 0.0
      %1224 = vmatpush1.msra.mxu0 0.0
      %1225 = vmatprep.subr.mxu0 0.0
      %1226 = vmatpush1.msra.mxu0 0.0
      %1227 = vmatprep.subr.mxu0 0.0
      %1228 = vmatpush1.msra.mxu0 0.0
      %1229 = vmatprep.subr.mxu0 0.0
      %1230 = vmatpush1.msra.mxu0 0.0
      %1231 = vmatprep.subr.mxu0 0.0
      %1232 = vmatpush1.msra.mxu0 0.0
      %1233 = vmatprep.subr.mxu0 0.0
      %1234 = vmatpush1.msra.mxu0 0.0
      %1235 = vmatprep.subr.mxu0 0.0
      %1236 = vmatpush1.msra.mxu0 0.0
      %1237 = vmatprep.subr.mxu0 0.0
      %1238 = vmatpush1.msra.mxu0 0.0
      %1239 = vmatprep.subr.mxu0 0.0
      %1240 = vmatpush1.msra.mxu0 0.0
      %1241 = vmatprep.subr.mxu0 0.0
      %1242 = vmatpush1.msra.mxu0 0.0
      %1243 = vmatprep.subr.mxu0 0.0
      %1244 = vmatpush1.msra.mxu0 0.0
      %1245 = vmatprep.subr.mxu0 0.0
      %1246 = vmatpush1.msra.mxu0 0.0
      %1247 = vmatprep.subr.mxu0 0.0
      %1248 = vmatpush1.msra.mxu0 0.0
      %1249 = vmatprep.subr.mxu0 0.0
      %1250 = vmatpush1.msra.mxu0 0.0
      %1251 = vmatprep.subr.mxu0 0.0
      %1252 = vmatpush1.msra.mxu0 0.0
      %1253 = vmatprep.subr.mxu0 0.0
      %1254 = vmatpush1.msra.mxu0 0.0
      %1255 = vmatprep.subr.mxu0 0.0
      %1256 = vmatpush1.msra.mxu0 0.0
      %1257 = vmatprep.subr.mxu0 0.0
      %1258 = vmatpush1.msra.mxu0 0.0
      %1259 = vmatprep.subr.mxu0 0.0
      %1260 = vmatpush1.msra.mxu0 0.0
      %1261 = vmatprep.subr.mxu0 0.0
      %1262 = vmatpush1.msra.mxu0 0.0
      %1263 = vmatprep.subr.mxu0 0.0
      %1264 = vmatpush1.msra.mxu0 0.0
      %1265 = vmatprep.subr.mxu0 0.0
      %1266 = vmatpush1.msra.mxu0 0.0
      %1267 = vmatprep.subr.mxu0 0.0
      %1268 = vmatpush1.msra.mxu0 0.0
      %1269 = vmatprep.subr.mxu0 0.0
      %1270 = vmatpush1.msra.mxu0 0.0
      %1271 = vmatprep.subr.mxu0 0.0
      %1272 = vmatpush1.msra.mxu0 0.0
      %1273 = vmatprep.subr.mxu0 0.0
      %1274 = vmatpush1.msra.mxu0 0.0
      %1275 = vmatprep.subr.mxu0 0.0
      %1276 = vmatpush1.msra.mxu0 0.0
      %1277 = vmatprep.subr.mxu0 0.0
      %1278 = vmatpush1.msra.mxu0 0.0
      %1279 = vmatprep.subr.mxu0 0.0
      %1280 = vmatpush1.msra.mxu0 0.0
      %1281 = vmatprep.subr.mxu0 0.0
      %1282 = vmatpush1.msra.mxu0 0.0
      %1283 = vmatprep.subr.mxu0 0.0
      %1284 = vmatpush1.msra.mxu0 0.0
      %1285 = vmatprep.mubr.f32.mxu0 0.0
      %1286 = vmatmul.mubr.f32.gmra.mrb[0].mxu0 %v619
      %v1287 = vpop.f32.mrb[0].mxu0
      %v1288 = vadd.f32 0.0, %v1287
      %v1289 = vpop.f32.mrb[0].mxu0
      %1290 = vdwg.mxu0
      %v1291 = vadd.f32 %v1139, %v1288
      %1292 = vmatprep.subr.mxu0 0.0
      %1293 = vmatpush1.msra.mxu0 %v243
      %1294 = vmatprep.subr.mxu0 0.0
      %1295 = vmatpush1.msra.mxu0 %v244
      %1296 = vmatprep.subr.mxu0 0.0
      %1297 = vmatpush1.msra.mxu0 0.0
      %1298 = vmatprep.subr.mxu0 0.0
      %1299 = vmatpush1.msra.mxu0 0.0
      %1300 = vmatprep.subr.mxu0 0.0
      %1301 = vmatpush1.msra.mxu0 0.0
      %1302 = vmatprep.subr.mxu0 0.0
      %1303 = vmatpush1.msra.mxu0 0.0
      %1304 = vmatprep.subr.mxu0 0.0
      %1305 = vmatpush1.msra.mxu0 0.0
      %1306 = vmatprep.subr.mxu0 0.0
      %1307 = vmatpush1.msra.mxu0 0.0
      %1308 = vmatprep.subr.mxu0 0.0
      %1309 = vmatpush1.msra.mxu0 0.0
      %1310 = vmatprep.subr.mxu0 0.0
      %1311 = vmatpush1.msra.mxu0 0.0
      %1312 = vmatprep.subr.mxu0 0.0
      %1313 = vmatpush1.msra.mxu0 0.0
      %1314 = vmatprep.subr.mxu0 0.0
      %1315 = vmatpush1.msra.mxu0 0.0
      %1316 = vmatprep.subr.mxu0 0.0
      %1317 = vmatpush1.msra.mxu0 0.0
      %1318 = vmatprep.subr.mxu0 0.0
      %1319 = vmatpush1.msra.mxu0 0.0
      %1320 = vmatprep.subr.mxu0 0.0
      %1321 = vmatpush1.msra.mxu0 0.0
      %1322 = vmatprep.subr.mxu0 0.0
      %1323 = vmatpush1.msra.mxu0 0.0
      %1324 = vmatprep.subr.mxu0 0.0
      %1325 = vmatpush1.msra.mxu0 0.0
      %1326 = vmatprep.subr.mxu0 0.0
      %1327 = vmatpush1.msra.mxu0 0.0
      %1328 = vmatprep.subr.mxu0 0.0
      %1329 = vmatpush1.msra.mxu0 0.0
      %1330 = vmatprep.subr.mxu0 0.0
      %1331 = vmatpush1.msra.mxu0 0.0
      %1332 = vmatprep.subr.mxu0 0.0
      %1333 = vmatpush1.msra.mxu0 0.0
      %1334 = vmatprep.subr.mxu0 0.0
      %1335 = vmatpush1.msra.mxu0 0.0
      %1336 = vmatprep.subr.mxu0 0.0
      %1337 = vmatpush1.msra.mxu0 0.0
      %1338 = vmatprep.subr.mxu0 0.0
      %1339 = vmatpush1.msra.mxu0 0.0
      %1340 = vmatprep.subr.mxu0 0.0
      %1341 = vmatpush1.msra.mxu0 0.0
      %1342 = vmatprep.subr.mxu0 0.0
      %1343 = vmatpush1.msra.mxu0 0.0
      %1344 = vmatprep.subr.mxu0 0.0
      %1345 = vmatpush1.msra.mxu0 0.0
      %1346 = vmatprep.subr.mxu0 0.0
      %1347 = vmatpush1.msra.mxu0 0.0
      %1348 = vmatprep.subr.mxu0 0.0
      %1349 = vmatpush1.msra.mxu0 0.0
      %1350 = vmatprep.subr.mxu0 0.0
      %1351 = vmatpush1.msra.mxu0 0.0
      %1352 = vmatprep.subr.mxu0 0.0
      %1353 = vmatpush1.msra.mxu0 0.0
      %1354 = vmatprep.subr.mxu0 0.0
      %1355 = vmatpush1.msra.mxu0 0.0
      %1356 = vmatprep.mubr.f32.mxu0 0.0
      %1357 = vmatmul.mubr.f32.gmra.mrb[0].mxu0 %v1146
      %v1358 = vpop.f32.mrb[0].mxu0
      %v1359 = vadd.f32 0.0, %v1358
      %v1360 = vpop.f32.mrb[0].mxu0
      %1361 = vdwg.mxu0
      %v1363 = vsel %vm394, %v1359, 0
      %1365 = vmatprep.subr.mxu0 0.0
      %1366 = vmatpush1.msra.mxu0 %v1363
      %1367 = vmatprep.subr.mxu0 0.0
      %1368 = vmatpush1.msra.mxu0 0.0
      %1369 = vmatprep.subr.mxu0 0.0
      %1370 = vmatpush1.msra.mxu0 0.0
      %1371 = vmatprep.subr.mxu0 0.0
      %1372 = vmatpush1.msra.mxu0 0.0
      %1373 = vmatprep.subr.mxu0 0.0
      %1374 = vmatpush1.msra.mxu0 0.0
      %1375 = vmatprep.subr.mxu0 0.0
      %1376 = vmatpush1.msra.mxu0 0.0
      %1377 = vmatprep.subr.mxu0 0.0
      %1378 = vmatpush1.msra.mxu0 0.0
      %1379 = vmatprep.subr.mxu0 0.0
      %1380 = vmatpush1.msra.mxu0 0.0
      %1381 = vmatprep.subr.mxu0 0.0
      %1382 = vmatpush1.msra.mxu0 0.0
      %1383 = vmatprep.subr.mxu0 0.0
      %1384 = vmatpush1.msra.mxu0 0.0
      %1385 = vmatprep.subr.mxu0 0.0
      %1386 = vmatpush1.msra.mxu0 0.0
      %1387 = vmatprep.subr.mxu0 0.0
      %1388 = vmatpush1.msra.mxu0 0.0
      %1389 = vmatprep.subr.mxu0 0.0
      %1390 = vmatpush1.msra.mxu0 0.0
      %1391 = vmatprep.subr.mxu0 0.0
      %1392 = vmatpush1.msra.mxu0 0.0
      %1393 = vmatprep.subr.mxu0 0.0
      %1394 = vmatpush1.msra.mxu0 0.0
      %1395 = vmatprep.subr.mxu0 0.0
      %1396 = vmatpush1.msra.mxu0 0.0
      %1397 = vmatprep.subr.mxu0 0.0
      %1398 = vmatpush1.msra.mxu0 0.0
      %1399 = vmatprep.subr.mxu0 0.0
      %1400 = vmatpush1.msra.mxu0 0.0
      %1401 = vmatprep.subr.mxu0 0.0
      %1402 = vmatpush1.msra.mxu0 0.0
      %1403 = vmatprep.subr.mxu0 0.0
      %1404 = vmatpush1.msra.mxu0 0.0
      %1405 = vmatprep.subr.mxu0 0.0
      %1406 = vmatpush1.msra.mxu0 0.0
      %1407 = vmatprep.subr.mxu0 0.0
      %1408 = vmatpush1.msra.mxu0 0.0
      %1409 = vmatprep.subr.mxu0 0.0
      %1410 = vmatpush1.msra.mxu0 0.0
      %1411 = vmatprep.subr.mxu0 0.0
      %1412 = vmatpush1.msra.mxu0 0.0
      %1413 = vmatprep.subr.mxu0 0.0
      %1414 = vmatpush1.msra.mxu0 0.0
      %1415 = vmatprep.subr.mxu0 0.0
      %1416 = vmatpush1.msra.mxu0 0.0
      %1417 = vmatprep.subr.mxu0 0.0
      %1418 = vmatpush1.msra.mxu0 0.0
      %1419 = vmatprep.subr.mxu0 0.0
      %1420 = vmatpush1.msra.mxu0 0.0
      %1421 = vmatprep.subr.mxu0 0.0
      %1422 = vmatpush1.msra.mxu0 0.0
      %1423 = vmatprep.subr.mxu0 0.0
      %1424 = vmatpush1.msra.mxu0 0.0
      %1425 = vmatprep.subr.mxu0 0.0
      %1426 = vmatpush1.msra.mxu0 0.0
      %1427 = vmatprep.subr.mxu0 0.0
      %1428 = vmatpush1.msra.mxu0 0.0
      %1429 = vmatprep.mubr.f32.mxu0 0.0
      %1430 = vmatmul.mubr.f32.gmra.mrb[0].mxu0 %v766
      %v1431 = vpop.f32.mrb[0].mxu0
      %v1432 = vadd.f32 0.0, %v1431
      %v1433 = vpop.f32.mrb[0].mxu0
      %1434 = vdwg.mxu0
      %v1435 = vadd.f32 %v1291, %v1432
      %v1436 = vadd.f32 %v1435, %v845
      %1438 = vrot.lane.b32.xlu0 %v1436, 8
      %v1439 = vpop.permute.xlu0 %1438
      %vm1441 = vcmask 130112
      %1442 = vst.msk [vmem:[%s231] sm:$0xff] %vm1441, %v1439
      %v1443 = vld [vmem:[%s223] sm:$0xf]
      %1445 = vrot.lane.b32.xlu0 %v1443, 64
      %v1446 = vpop.permute.xlu0 %1445
      %v1447 = vsel %vm246, %v1446, 0
      %1449 = vmatprep.subr.mxu0 0.0
      %1450 = vmatpush1.msra.mxu0 %v240
      %1451 = vmatprep.subr.mxu0 0.0
      %1452 = vmatpush1.msra.mxu0 %v241
      %1453 = vmatprep.subr.mxu0 0.0
      %1454 = vmatpush1.msra.mxu0 0.0
      %1455 = vmatprep.subr.mxu0 0.0
      %1456 = vmatpush1.msra.mxu0 0.0
      %1457 = vmatprep.subr.mxu0 0.0
      %1458 = vmatpush1.msra.mxu0 0.0
      %1459 = vmatprep.subr.mxu0 0.0
      %1460 = vmatpush1.msra.mxu0 0.0
      %1461 = vmatprep.subr.mxu0 0.0
      %1462 = vmatpush1.msra.mxu0 0.0
      %1463 = vmatprep.subr.mxu0 0.0
      %1464 = vmatpush1.msra.mxu0 0.0
      %1465 = vmatprep.subr.mxu0 0.0
      %1466 = vmatpush1.msra.mxu0 0.0
      %1467 = vmatprep.subr.mxu0 0.0
      %1468 = vmatpush1.msra.mxu0 0.0
      %1469 = vmatprep.subr.mxu0 0.0
      %1470 = vmatpush1.msra.mxu0 0.0
      %1471 = vmatprep.subr.mxu0 0.0
      %1472 = vmatpush1.msra.mxu0 0.0
      %1473 = vmatprep.subr.mxu0 0.0
      %1474 = vmatpush1.msra.mxu0 0.0
      %1475 = vmatprep.subr.mxu0 0.0
      %1476 = vmatpush1.msra.mxu0 0.0
      %1477 = vmatprep.subr.mxu0 0.0
      %1478 = vmatpush1.msra.mxu0 0.0
      %1479 = vmatprep.subr.mxu0 0.0
      %1480 = vmatpush1.msra.mxu0 0.0
      %1481 = vmatprep.subr.mxu0 0.0
      %1482 = vmatpush1.msra.mxu0 0.0
      %1483 = vmatprep.subr.mxu0 0.0
      %1484 = vmatpush1.msra.mxu0 0.0
      %1485 = vmatprep.subr.mxu0 0.0
      %1486 = vmatpush1.msra.mxu0 0.0
      %1487 = vmatprep.subr.mxu0 0.0
      %1488 = vmatpush1.msra.mxu0 0.0
      %1489 = vmatprep.subr.mxu0 0.0
      %1490 = vmatpush1.msra.mxu0 0.0
      %1491 = vmatprep.subr.mxu0 0.0
      %1492 = vmatpush1.msra.mxu0 0.0
      %1493 = vmatprep.subr.mxu0 0.0
      %1494 = vmatpush1.msra.mxu0 0.0
      %1495 = vmatprep.subr.mxu0 0.0
      %1496 = vmatpush1.msra.mxu0 0.0
      %1497 = vmatprep.subr.mxu0 0.0
      %1498 = vmatpush1.msra.mxu0 0.0
      %1499 = vmatprep.subr.mxu0 0.0
      %1500 = vmatpush1.msra.mxu0 0.0
      %1501 = vmatprep.subr.mxu0 0.0
      %1502 = vmatpush1.msra.mxu0 0.0
      %1503 = vmatprep.subr.mxu0 0.0
      %1504 = vmatpush1.msra.mxu0 0.0
      %1505 = vmatprep.subr.mxu0 0.0
      %1506 = vmatpush1.msra.mxu0 0.0
      %1507 = vmatprep.subr.mxu0 0.0
      %1508 = vmatpush1.msra.mxu0 0.0
      %1509 = vmatprep.subr.mxu0 0.0
      %1510 = vmatpush1.msra.mxu0 0.0
      %1511 = vmatprep.subr.mxu0 0.0
      %1512 = vmatpush1.msra.mxu0 0.0
      %1513 = vmatprep.mubr.f32.mxu0 0.0
      %1514 = vmatmul.mubr.f32.gmra.mrb[0].mxu0 %v1447
      %v1515 = vpop.f32.mrb[0].mxu0
      %v1516 = vadd.f32 0.0, %v1515
      %v1517 = vpop.f32.mrb[0].mxu0
      %1518 = vdwg.mxu0
      %1519 = vmatprep.subr.mxu0 0.0
      %1520 = vmatpush1.msra.mxu0 %v243
      %1521 = vmatprep.subr.mxu0 0.0
      %1522 = vmatpush1.msra.mxu0 %v244
      %1523 = vmatprep.subr.mxu0 0.0
      %1524 = vmatpush1.msra.mxu0 0.0
      %1525 = vmatprep.subr.mxu0 0.0
      %1526 = vmatpush1.msra.mxu0 0.0
      %1527 = vmatprep.subr.mxu0 0.0
      %1528 = vmatpush1.msra.mxu0 0.0
      %1529 = vmatprep.subr.mxu0 0.0
      %1530 = vmatpush1.msra.mxu0 0.0
      %1531 = vmatprep.subr.mxu0 0.0
      %1532 = vmatpush1.msra.mxu0 0.0
      %1533 = vmatprep.subr.mxu0 0.0
      %1534 = vmatpush1.msra.mxu0 0.0
      %1535 = vmatprep.subr.mxu0 0.0
      %1536 = vmatpush1.msra.mxu0 0.0
      %1537 = vmatprep.subr.mxu0 0.0
      %1538 = vmatpush1.msra.mxu0 0.0
      %1539 = vmatprep.subr.mxu0 0.0
      %1540 = vmatpush1.msra.mxu0 0.0
      %1541 = vmatprep.subr.mxu0 0.0
      %1542 = vmatpush1.msra.mxu0 0.0
      %1543 = vmatprep.subr.mxu0 0.0
      %1544 = vmatpush1.msra.mxu0 0.0
      %1545 = vmatprep.subr.mxu0 0.0
      %1546 = vmatpush1.msra.mxu0 0.0
      %1547 = vmatprep.subr.mxu0 0.0
      %1548 = vmatpush1.msra.mxu0 0.0
      %1549 = vmatprep.subr.mxu0 0.0
      %1550 = vmatpush1.msra.mxu0 0.0
      %1551 = vmatprep.subr.mxu0 0.0
      %1552 = vmatpush1.msra.mxu0 0.0
      %1553 = vmatprep.subr.mxu0 0.0
      %1554 = vmatpush1.msra.mxu0 0.0
      %1555 = vmatprep.subr.mxu0 0.0
      %1556 = vmatpush1.msra.mxu0 0.0
      %1557 = vmatprep.subr.mxu0 0.0
      %1558 = vmatpush1.msra.mxu0 0.0
      %1559 = vmatprep.subr.mxu0 0.0
      %1560 = vmatpush1.msra.mxu0 0.0
      %1561 = vmatprep.subr.mxu0 0.0
      %1562 = vmatpush1.msra.mxu0 0.0
      %1563 = vmatprep.subr.mxu0 0.0
      %1564 = vmatpush1.msra.mxu0 0.0
      %1565 = vmatprep.subr.mxu0 0.0
      %1566 = vmatpush1.msra.mxu0 0.0
      %1567 = vmatprep.subr.mxu0 0.0
      %1568 = vmatpush1.msra.mxu0 0.0
      %1569 = vmatprep.subr.mxu0 0.0
      %1570 = vmatpush1.msra.mxu0 0.0
      %1571 = vmatprep.subr.mxu0 0.0
      %1572 = vmatpush1.msra.mxu0 0.0
      %1573 = vmatprep.subr.mxu0 0.0
      %1574 = vmatpush1.msra.mxu0 0.0
      %1575 = vmatprep.subr.mxu0 0.0
      %1576 = vmatpush1.msra.mxu0 0.0
      %1577 = vmatprep.subr.mxu0 0.0
      %1578 = vmatpush1.msra.mxu0 0.0
      %1579 = vmatprep.subr.mxu0 0.0
      %1580 = vmatpush1.msra.mxu0 0.0
      %1581 = vmatprep.subr.mxu0 0.0
      %1582 = vmatpush1.msra.mxu0 0.0
      %1583 = vmatprep.mubr.f32.mxu0 0.0
      %1584 = vmatmul.mubr.f32.gmra.mrb[0].mxu0 %v1447
      %v1585 = vpop.f32.mrb[0].mxu0
      %v1586 = vadd.f32 0.0, %v1585
      %v1587 = vpop.f32.mrb[0].mxu0
      %1588 = vdwg.mxu0
      %v1590 = vsel %vm394, %v1586, 0
      %1592 = vmatprep.subr.mxu0 0.0
      %1593 = vmatpush1.msra.mxu0 %v1590
      %1594 = vmatprep.subr.mxu0 0.0
      %1595 = vmatpush1.msra.mxu0 0.0
      %1596 = vmatprep.subr.mxu0 0.0
      %1597 = vmatpush1.msra.mxu0 0.0
      %1598 = vmatprep.subr.mxu0 0.0
      %1599 = vmatpush1.msra.mxu0 0.0
      %1600 = vmatprep.subr.mxu0 0.0
      %1601 = vmatpush1.msra.mxu0 0.0
      %1602 = vmatprep.subr.mxu0 0.0
      %1603 = vmatpush1.msra.mxu0 0.0
      %1604 = vmatprep.subr.mxu0 0.0
      %1605 = vmatpush1.msra.mxu0 0.0
      %1606 = vmatprep.subr.mxu0 0.0
      %1607 = vmatpush1.msra.mxu0 0.0
      %1608 = vmatprep.subr.mxu0 0.0
      %1609 = vmatpush1.msra.mxu0 0.0
      %1610 = vmatprep.subr.mxu0 0.0
      %1611 = vmatpush1.msra.mxu0 0.0
      %1612 = vmatprep.subr.mxu0 0.0
      %1613 = vmatpush1.msra.mxu0 0.0
      %1614 = vmatprep.subr.mxu0 0.0
      %1615 = vmatpush1.msra.mxu0 0.0
      %1616 = vmatprep.subr.mxu0 0.0
      %1617 = vmatpush1.msra.mxu0 0.0
      %1618 = vmatprep.subr.mxu0 0.0
      %1619 = vmatpush1.msra.mxu0 0.0
      %1620 = vmatprep.subr.mxu0 0.0
      %1621 = vmatpush1.msra.mxu0 0.0
      %1622 = vmatprep.subr.mxu0 0.0
      %1623 = vmatpush1.msra.mxu0 0.0
      %1624 = vmatprep.subr.mxu0 0.0
      %1625 = vmatpush1.msra.mxu0 0.0
      %1626 = vmatprep.subr.mxu0 0.0
      %1627 = vmatpush1.msra.mxu0 0.0
      %1628 = vmatprep.subr.mxu0 0.0
      %1629 = vmatpush1.msra.mxu0 0.0
      %1630 = vmatprep.subr.mxu0 0.0
      %1631 = vmatpush1.msra.mxu0 0.0
      %1632 = vmatprep.subr.mxu0 0.0
      %1633 = vmatpush1.msra.mxu0 0.0
      %1634 = vmatprep.subr.mxu0 0.0
      %1635 = vmatpush1.msra.mxu0 0.0
      %1636 = vmatprep.subr.mxu0 0.0
      %1637 = vmatpush1.msra.mxu0 0.0
      %1638 = vmatprep.subr.mxu0 0.0
      %1639 = vmatpush1.msra.mxu0 0.0
      %1640 = vmatprep.subr.mxu0 0.0
      %1641 = vmatpush1.msra.mxu0 0.0
      %1642 = vmatprep.subr.mxu0 0.0
      %1643 = vmatpush1.msra.mxu0 0.0
      %1644 = vmatprep.subr.mxu0 0.0
      %1645 = vmatpush1.msra.mxu0 0.0
      %1646 = vmatprep.subr.mxu0 0.0
      %1647 = vmatpush1.msra.mxu0 0.0
      %1648 = vmatprep.subr.mxu0 0.0
      %1649 = vmatpush1.msra.mxu0 0.0
      %1650 = vmatprep.subr.mxu0 0.0
      %1651 = vmatpush1.msra.mxu0 0.0
      %1652 = vmatprep.subr.mxu0 0.0
      %1653 = vmatpush1.msra.mxu0 0.0
      %1654 = vmatprep.subr.mxu0 0.0
      %1655 = vmatpush1.msra.mxu0 0.0
      %1656 = vmatprep.mubr.f32.mxu0 0.0
      %1657 = vmatmul.mubr.f32.gmra.mrb[0].mxu0 %v392
      %v1658 = vpop.f32.mrb[0].mxu0
      %v1659 = vadd.f32 0.0, %v1658
      %v1660 = vpop.f32.mrb[0].mxu0
      %1661 = vdwg.mxu0
      %v1663 = vsel %vm394, %v1516, 0
      %1665 = vmatprep.subr.mxu0 0.0
      %1666 = vmatpush1.msra.mxu0 %v1663
      %1667 = vmatprep.subr.mxu0 0.0
      %1668 = vmatpush1.msra.mxu0 0.0
      %1669 = vmatprep.subr.mxu0 0.0
      %1670 = vmatpush1.msra.mxu0 0.0
      %1671 = vmatprep.subr.mxu0 0.0
      %1672 = vmatpush1.msra.mxu0 0.0
      %1673 = vmatprep.subr.mxu0 0.0
      %1674 = vmatpush1.msra.mxu0 0.0
      %1675 = vmatprep.subr.mxu0 0.0
      %1676 = vmatpush1.msra.mxu0 0.0
      %1677 = vmatprep.subr.mxu0 0.0
      %1678 = vmatpush1.msra.mxu0 0.0
      %1679 = vmatprep.subr.mxu0 0.0
      %1680 = vmatpush1.msra.mxu0 0.0
      %1681 = vmatprep.subr.mxu0 0.0
      %1682 = vmatpush1.msra.mxu0 0.0
      %1683 = vmatprep.subr.mxu0 0.0
      %1684 = vmatpush1.msra.mxu0 0.0
      %1685 = vmatprep.subr.mxu0 0.0
      %1686 = vmatpush1.msra.mxu0 0.0
      %1687 = vmatprep.subr.mxu0 0.0
      %1688 = vmatpush1.msra.mxu0 0.0
      %1689 = vmatprep.subr.mxu0 0.0
      %1690 = vmatpush1.msra.mxu0 0.0
      %1691 = vmatprep.subr.mxu0 0.0
      %1692 = vmatpush1.msra.mxu0 0.0
      %1693 = vmatprep.subr.mxu0 0.0
      %1694 = vmatpush1.msra.mxu0 0.0
      %1695 = vmatprep.subr.mxu0 0.0
      %1696 = vmatpush1.msra.mxu0 0.0
      %1697 = vmatprep.subr.mxu0 0.0
      %1698 = vmatpush1.msra.mxu0 0.0
      %1699 = vmatprep.subr.mxu0 0.0
      %1700 = vmatpush1.msra.mxu0 0.0
      %1701 = vmatprep.subr.mxu0 0.0
      %1702 = vmatpush1.msra.mxu0 0.0
      %1703 = vmatprep.subr.mxu0 0.0
      %1704 = vmatpush1.msra.mxu0 0.0
      %1705 = vmatprep.subr.mxu0 0.0
      %1706 = vmatpush1.msra.mxu0 0.0
      %1707 = vmatprep.subr.mxu0 0.0
      %1708 = vmatpush1.msra.mxu0 0.0
      %1709 = vmatprep.subr.mxu0 0.0
      %1710 = vmatpush1.msra.mxu0 0.0
      %1711 = vmatprep.subr.mxu0 0.0
      %1712 = vmatpush1.msra.mxu0 0.0
      %1713 = vmatprep.subr.mxu0 0.0
      %1714 = vmatpush1.msra.mxu0 0.0
      %1715 = vmatprep.subr.mxu0 0.0
      %1716 = vmatpush1.msra.mxu0 0.0
      %1717 = vmatprep.subr.mxu0 0.0
      %1718 = vmatpush1.msra.mxu0 0.0
      %1719 = vmatprep.subr.mxu0 0.0
      %1720 = vmatpush1.msra.mxu0 0.0
      %1721 = vmatprep.subr.mxu0 0.0
      %1722 = vmatpush1.msra.mxu0 0.0
      %1723 = vmatprep.subr.mxu0 0.0
      %1724 = vmatpush1.msra.mxu0 0.0
      %1725 = vmatprep.subr.mxu0 0.0
      %1726 = vmatpush1.msra.mxu0 0.0
      %1727 = vmatprep.subr.mxu0 0.0
      %1728 = vmatpush1.msra.mxu0 0.0
      %1729 = vmatprep.mubr.f32.mxu0 0.0
      %1730 = vmatmul.mubr.f32.gmra.mrb[0].mxu0 %v469
      %v1731 = vpop.f32.mrb[0].mxu0
      %v1732 = vadd.f32 %v1659, %v1731
      %v1733 = vpop.f32.mrb[0].mxu0
      %1734 = vdwg.mxu0
      %v1735 = vld [vmem:[%s223] sm:$0xf]
      %1737 = vrot.lane.b32.xlu0 %v1735, 48
      %v1738 = vpop.permute.xlu0 %1737
      %v1739 = vsel %vm246, %v1738, 0
      %1741 = vmatprep.subr.mxu0 0.0
      %1742 = vmatpush1.msra.mxu0 %v240
      %1743 = vmatprep.subr.mxu0 0.0
      %1744 = vmatpush1.msra.mxu0 %v241
      %1745 = vmatprep.subr.mxu0 0.0
      %1746 = vmatpush1.msra.mxu0 0.0
      %1747 = vmatprep.subr.mxu0 0.0
      %1748 = vmatpush1.msra.mxu0 0.0
      %1749 = vmatprep.subr.mxu0 0.0
      %1750 = vmatpush1.msra.mxu0 0.0
      %1751 = vmatprep.subr.mxu0 0.0
      %1752 = vmatpush1.msra.mxu0 0.0
      %1753 = vmatprep.subr.mxu0 0.0
      %1754 = vmatpush1.msra.mxu0 0.0
      %1755 = vmatprep.subr.mxu0 0.0
      %1756 = vmatpush1.msra.mxu0 0.0
      %1757 = vmatprep.subr.mxu0 0.0
      %1758 = vmatpush1.msra.mxu0 0.0
      %1759 = vmatprep.subr.mxu0 0.0
      %1760 = vmatpush1.msra.mxu0 0.0
      %1761 = vmatprep.subr.mxu0 0.0
      %1762 = vmatpush1.msra.mxu0 0.0
      %1763 = vmatprep.subr.mxu0 0.0
      %1764 = vmatpush1.msra.mxu0 0.0
      %1765 = vmatprep.subr.mxu0 0.0
      %1766 = vmatpush1.msra.mxu0 0.0
      %1767 = vmatprep.subr.mxu0 0.0
      %1768 = vmatpush1.msra.mxu0 0.0
      %1769 = vmatprep.subr.mxu0 0.0
      %1770 = vmatpush1.msra.mxu0 0.0
      %1771 = vmatprep.subr.mxu0 0.0
      %1772 = vmatpush1.msra.mxu0 0.0
      %1773 = vmatprep.subr.mxu0 0.0
      %1774 = vmatpush1.msra.mxu0 0.0
      %1775 = vmatprep.subr.mxu0 0.0
      %1776 = vmatpush1.msra.mxu0 0.0
      %1777 = vmatprep.subr.mxu0 0.0
      %1778 = vmatpush1.msra.mxu0 0.0
      %1779 = vmatprep.subr.mxu0 0.0
      %1780 = vmatpush1.msra.mxu0 0.0
      %1781 = vmatprep.subr.mxu0 0.0
      %1782 = vmatpush1.msra.mxu0 0.0
      %1783 = vmatprep.subr.mxu0 0.0
      %1784 = vmatpush1.msra.mxu0 0.0
      %1785 = vmatprep.subr.mxu0 0.0
      %1786 = vmatpush1.msra.mxu0 0.0
      %1787 = vmatprep.subr.mxu0 0.0
      %1788 = vmatpush1.msra.mxu0 0.0
      %1789 = vmatprep.subr.mxu0 0.0
      %1790 = vmatpush1.msra.mxu0 0.0
      %1791 = vmatprep.subr.mxu0 0.0
      %1792 = vmatpush1.msra.mxu0 0.0
      %1793 = vmatprep.subr.mxu0 0.0
      %1794 = vmatpush1.msra.mxu0 0.0
      %1795 = vmatprep.subr.mxu0 0.0
      %1796 = vmatpush1.msra.mxu0 0.0
      %1797 = vmatprep.subr.mxu0 0.0
      %1798 = vmatpush1.msra.mxu0 0.0
      %1799 = vmatprep.subr.mxu0 0.0
      %1800 = vmatpush1.msra.mxu0 0.0
      %1801 = vmatprep.subr.mxu0 0.0
      %1802 = vmatpush1.msra.mxu0 0.0
      %1803 = vmatprep.subr.mxu0 0.0
      %1804 = vmatpush1.msra.mxu0 0.0
      %1805 = vmatprep.mubr.f32.mxu0 0.0
      %1806 = vmatmul.mubr.f32.gmra.mrb[0].mxu0 %v1739
      %v1807 = vpop.f32.mrb[0].mxu0
      %v1808 = vadd.f32 0.0, %v1807
      %v1809 = vpop.f32.mrb[0].mxu0
      %1810 = vdwg.mxu0
      %v1812 = vsel %vm394, %v1808, 0
      %1814 = vmatprep.subr.mxu0 0.0
      %1815 = vmatpush1.msra.mxu0 %v1812
      %1816 = vmatprep.subr.mxu0 0.0
      %1817 = vmatpush1.msra.mxu0 0.0
      %1818 = vmatprep.subr.mxu0 0.0
      %1819 = vmatpush1.msra.mxu0 0.0
      %1820 = vmatprep.subr.mxu0 0.0
      %1821 = vmatpush1.msra.mxu0 0.0
      %1822 = vmatprep.subr.mxu0 0.0
      %1823 = vmatpush1.msra.mxu0 0.0
      %1824 = vmatprep.subr.mxu0 0.0
      %1825 = vmatpush1.msra.mxu0 0.0
      %1826 = vmatprep.subr.mxu0 0.0
      %1827 = vmatpush1.msra.mxu0 0.0
      %1828 = vmatprep.subr.mxu0 0.0
      %1829 = vmatpush1.msra.mxu0 0.0
      %1830 = vmatprep.subr.mxu0 0.0
      %1831 = vmatpush1.msra.mxu0 0.0
      %1832 = vmatprep.subr.mxu0 0.0
      %1833 = vmatpush1.msra.mxu0 0.0
      %1834 = vmatprep.subr.mxu0 0.0
      %1835 = vmatpush1.msra.mxu0 0.0
      %1836 = vmatprep.subr.mxu0 0.0
      %1837 = vmatpush1.msra.mxu0 0.0
      %1838 = vmatprep.subr.mxu0 0.0
      %1839 = vmatpush1.msra.mxu0 0.0
      %1840 = vmatprep.subr.mxu0 0.0
      %1841 = vmatpush1.msra.mxu0 0.0
      %1842 = vmatprep.subr.mxu0 0.0
      %1843 = vmatpush1.msra.mxu0 0.0
      %1844 = vmatprep.subr.mxu0 0.0
      %1845 = vmatpush1.msra.mxu0 0.0
      %1846 = vmatprep.subr.mxu0 0.0
      %1847 = vmatpush1.msra.mxu0 0.0
      %1848 = vmatprep.subr.mxu0 0.0
      %1849 = vmatpush1.msra.mxu0 0.0
      %1850 = vmatprep.subr.mxu0 0.0
      %1851 = vmatpush1.msra.mxu0 0.0
      %1852 = vmatprep.subr.mxu0 0.0
      %1853 = vmatpush1.msra.mxu0 0.0
      %1854 = vmatprep.subr.mxu0 0.0
      %1855 = vmatpush1.msra.mxu0 0.0
      %1856 = vmatprep.subr.mxu0 0.0
      %1857 = vmatpush1.msra.mxu0 0.0
      %1858 = vmatprep.subr.mxu0 0.0
      %1859 = vmatpush1.msra.mxu0 0.0
      %1860 = vmatprep.subr.mxu0 0.0
      %1861 = vmatpush1.msra.mxu0 0.0
      %1862 = vmatprep.subr.mxu0 0.0
      %1863 = vmatpush1.msra.mxu0 0.0
      %1864 = vmatprep.subr.mxu0 0.0
      %1865 = vmatpush1.msra.mxu0 0.0
      %1866 = vmatprep.subr.mxu0 0.0
      %1867 = vmatpush1.msra.mxu0 0.0
      %1868 = vmatprep.subr.mxu0 0.0
      %1869 = vmatpush1.msra.mxu0 0.0
      %1870 = vmatprep.subr.mxu0 0.0
      %1871 = vmatpush1.msra.mxu0 0.0
      %1872 = vmatprep.subr.mxu0 0.0
      %1873 = vmatpush1.msra.mxu0 0.0
      %1874 = vmatprep.subr.mxu0 0.0
      %1875 = vmatpush1.msra.mxu0 0.0
      %1876 = vmatprep.subr.mxu0 0.0
      %1877 = vmatpush1.msra.mxu0 0.0
      %1878 = vmatprep.mubr.f32.mxu0 0.0
      %1879 = vmatmul.mubr.f32.gmra.mrb[0].mxu0 %v619
      %v1880 = vpop.f32.mrb[0].mxu0
      %v1881 = vadd.f32 0.0, %v1880
      %v1882 = vpop.f32.mrb[0].mxu0
      %1883 = vdwg.mxu0
      %v1884 = vadd.f32 %v1732, %v1881
      %1885 = vmatprep.subr.mxu0 0.0
      %1886 = vmatpush1.msra.mxu0 %v243
      %1887 = vmatprep.subr.mxu0 0.0
      %1888 = vmatpush1.msra.mxu0 %v244
      %1889 = vmatprep.subr.mxu0 0.0
      %1890 = vmatpush1.msra.mxu0 0.0
      %1891 = vmatprep.subr.mxu0 0.0
      %1892 = vmatpush1.msra.mxu0 0.0
      %1893 = vmatprep.subr.mxu0 0.0
      %1894 = vmatpush1.msra.mxu0 0.0
      %1895 = vmatprep.subr.mxu0 0.0
      %1896 = vmatpush1.msra.mxu0 0.0
      %1897 = vmatprep.subr.mxu0 0.0
      %1898 = vmatpush1.msra.mxu0 0.0
      %1899 = vmatprep.subr.mxu0 0.0
      %1900 = vmatpush1.msra.mxu0 0.0
      %1901 = vmatprep.subr.mxu0 0.0
      %1902 = vmatpush1.msra.mxu0 0.0
      %1903 = vmatprep.subr.mxu0 0.0
      %1904 = vmatpush1.msra.mxu0 0.0
      %1905 = vmatprep.subr.mxu0 0.0
      %1906 = vmatpush1.msra.mxu0 0.0
      %1907 = vmatprep.subr.mxu0 0.0
      %1908 = vmatpush1.msra.mxu0 0.0
      %1909 = vmatprep.subr.mxu0 0.0
      %1910 = vmatpush1.msra.mxu0 0.0
      %1911 = vmatprep.subr.mxu0 0.0
      %1912 = vmatpush1.msra.mxu0 0.0
      %1913 = vmatprep.subr.mxu0 0.0
      %1914 = vmatpush1.msra.mxu0 0.0
      %1915 = vmatprep.subr.mxu0 0.0
      %1916 = vmatpush1.msra.mxu0 0.0
      %1917 = vmatprep.subr.mxu0 0.0
      %1918 = vmatpush1.msra.mxu0 0.0
      %1919 = vmatprep.subr.mxu0 0.0
      %1920 = vmatpush1.msra.mxu0 0.0
      %1921 = vmatprep.subr.mxu0 0.0
      %1922 = vmatpush1.msra.mxu0 0.0
      %1923 = vmatprep.subr.mxu0 0.0
      %1924 = vmatpush1.msra.mxu0 0.0
      %1925 = vmatprep.subr.mxu0 0.0
      %1926 = vmatpush1.msra.mxu0 0.0
      %1927 = vmatprep.subr.mxu0 0.0
      %1928 = vmatpush1.msra.mxu0 0.0
      %1929 = vmatprep.subr.mxu0 0.0
      %1930 = vmatpush1.msra.mxu0 0.0
      %1931 = vmatprep.subr.mxu0 0.0
      %1932 = vmatpush1.msra.mxu0 0.0
      %1933 = vmatprep.subr.mxu0 0.0
      %1934 = vmatpush1.msra.mxu0 0.0
      %1935 = vmatprep.subr.mxu0 0.0
      %1936 = vmatpush1.msra.mxu0 0.0
      %1937 = vmatprep.subr.mxu0 0.0
      %1938 = vmatpush1.msra.mxu0 0.0
      %1939 = vmatprep.subr.mxu0 0.0
      %1940 = vmatpush1.msra.mxu0 0.0
      %1941 = vmatprep.subr.mxu0 0.0
      %1942 = vmatpush1.msra.mxu0 0.0
      %1943 = vmatprep.subr.mxu0 0.0
      %1944 = vmatpush1.msra.mxu0 0.0
      %1945 = vmatprep.subr.mxu0 0.0
      %1946 = vmatpush1.msra.mxu0 0.0
      %1947 = vmatprep.subr.mxu0 0.0
      %1948 = vmatpush1.msra.mxu0 0.0
      %1949 = vmatprep.mubr.f32.mxu0 0.0
      %1950 = vmatmul.mubr.f32.gmra.mrb[0].mxu0 %v1739
      %v1951 = vpop.f32.mrb[0].mxu0
      %v1952 = vadd.f32 0.0, %v1951
      %v1953 = vpop.f32.mrb[0].mxu0
      %1954 = vdwg.mxu0
      %v1956 = vsel %vm394, %v1952, 0
      %1958 = vmatprep.subr.mxu0 0.0
      %1959 = vmatpush1.msra.mxu0 %v1956
      %1960 = vmatprep.subr.mxu0 0.0
      %1961 = vmatpush1.msra.mxu0 0.0
      %1962 = vmatprep.subr.mxu0 0.0
      %1963 = vmatpush1.msra.mxu0 0.0
      %1964 = vmatprep.subr.mxu0 0.0
      %1965 = vmatpush1.msra.mxu0 0.0
      %1966 = vmatprep.subr.mxu0 0.0
      %1967 = vmatpush1.msra.mxu0 0.0
      %1968 = vmatprep.subr.mxu0 0.0
      %1969 = vmatpush1.msra.mxu0 0.0
      %1970 = vmatprep.subr.mxu0 0.0
      %1971 = vmatpush1.msra.mxu0 0.0
      %1972 = vmatprep.subr.mxu0 0.0
      %1973 = vmatpush1.msra.mxu0 0.0
      %1974 = vmatprep.subr.mxu0 0.0
      %1975 = vmatpush1.msra.mxu0 0.0
      %1976 = vmatprep.subr.mxu0 0.0
      %1977 = vmatpush1.msra.mxu0 0.0
      %1978 = vmatprep.subr.mxu0 0.0
      %1979 = vmatpush1.msra.mxu0 0.0
      %1980 = vmatprep.subr.mxu0 0.0
      %1981 = vmatpush1.msra.mxu0 0.0
      %1982 = vmatprep.subr.mxu0 0.0
      %1983 = vmatpush1.msra.mxu0 0.0
      %1984 = vmatprep.subr.mxu0 0.0
      %1985 = vmatpush1.msra.mxu0 0.0
      %1986 = vmatprep.subr.mxu0 0.0
      %1987 = vmatpush1.msra.mxu0 0.0
      %1988 = vmatprep.subr.mxu0 0.0
      %1989 = vmatpush1.msra.mxu0 0.0
      %1990 = vmatprep.subr.mxu0 0.0
      %1991 = vmatpush1.msra.mxu0 0.0
      %1992 = vmatprep.subr.mxu0 0.0
      %1993 = vmatpush1.msra.mxu0 0.0
      %1994 = vmatprep.subr.mxu0 0.0
      %1995 = vmatpush1.msra.mxu0 0.0
      %1996 = vmatprep.subr.mxu0 0.0
      %1997 = vmatpush1.msra.mxu0 0.0
      %1998 = vmatprep.subr.mxu0 0.0
      %1999 = vmatpush1.msra.mxu0 0.0
      %2000 = vmatprep.subr.mxu0 0.0
      %2001 = vmatpush1.msra.mxu0 0.0
      %2002 = vmatprep.subr.mxu0 0.0
      %2003 = vmatpush1.msra.mxu0 0.0
      %2004 = vmatprep.subr.mxu0 0.0
      %2005 = vmatpush1.msra.mxu0 0.0
      %2006 = vmatprep.subr.mxu0 0.0
      %2007 = vmatpush1.msra.mxu0 0.0
      %2008 = vmatprep.subr.mxu0 0.0
      %2009 = vmatpush1.msra.mxu0 0.0
      %2010 = vmatprep.subr.mxu0 0.0
      %2011 = vmatpush1.msra.mxu0 0.0
      %2012 = vmatprep.subr.mxu0 0.0
      %2013 = vmatpush1.msra.mxu0 0.0
      %2014 = vmatprep.subr.mxu0 0.0
      %2015 = vmatpush1.msra.mxu0 0.0
      %2016 = vmatprep.subr.mxu0 0.0
      %2017 = vmatpush1.msra.mxu0 0.0
      %2018 = vmatprep.subr.mxu0 0.0
      %2019 = vmatpush1.msra.mxu0 0.0
      %2020 = vmatprep.subr.mxu0 0.0
      %2021 = vmatpush1.msra.mxu0 0.0
      %2022 = vmatprep.mubr.f32.mxu0 0.0
      %2023 = vmatmul.mubr.f32.gmra.mrb[0].mxu0 %v766
      %v2024 = vpop.f32.mrb[0].mxu0
      %v2025 = vadd.f32 0.0, %v2024
      %v2026 = vpop.f32.mrb[0].mxu0
      %2027 = vdwg.mxu0
      %v2028 = vadd.f32 %v1884, %v2025
      %v2029 = vadd.f32 %v2028, %v845
      %2031 = vrot.lane.b32.xlu0 %v2029, 16
      %v2032 = vpop.permute.xlu0 %2031
      %vm2034 = vcmask 195712
      %2035 = vst.msk [vmem:[%s231] sm:$0xff] %vm2034, %v2032
      %v2036 = vld [vmem:[%s223] sm:$0xf]
      %2038 = vrot.lane.b32.xlu0 %v2036, 32
      %v2039 = vpop.permute.xlu0 %2038
      %v2040 = vsel %vm246, %v2039, 0
      %2042 = vmatprep.subr.mxu0 0.0
      %2043 = vmatpush1.msra.mxu0 %v240
      %2044 = vmatprep.subr.mxu0 0.0
      %2045 = vmatpush1.msra.mxu0 %v241
      %2046 = vmatprep.subr.mxu0 0.0
      %2047 = vmatpush1.msra.mxu0 0.0
      %2048 = vmatprep.subr.mxu0 0.0
      %2049 = vmatpush1.msra.mxu0 0.0
      %2050 = vmatprep.subr.mxu0 0.0
      %2051 = vmatpush1.msra.mxu0 0.0
      %2052 = vmatprep.subr.mxu0 0.0
      %2053 = vmatpush1.msra.mxu0 0.0
      %2054 = vmatprep.subr.mxu0 0.0
      %2055 = vmatpush1.msra.mxu0 0.0
      %2056 = vmatprep.subr.mxu0 0.0
      %2057 = vmatpush1.msra.mxu0 0.0
      %2058 = vmatprep.subr.mxu0 0.0
      %2059 = vmatpush1.msra.mxu0 0.0
      %2060 = vmatprep.subr.mxu0 0.0
      %2061 = vmatpush1.msra.mxu0 0.0
      %2062 = vmatprep.subr.mxu0 0.0
      %2063 = vmatpush1.msra.mxu0 0.0
      %2064 = vmatprep.subr.mxu0 0.0
      %2065 = vmatpush1.msra.mxu0 0.0
      %2066 = vmatprep.subr.mxu0 0.0
      %2067 = vmatpush1.msra.mxu0 0.0
      %2068 = vmatprep.subr.mxu0 0.0
      %2069 = vmatpush1.msra.mxu0 0.0
      %2070 = vmatprep.subr.mxu0 0.0
      %2071 = vmatpush1.msra.mxu0 0.0
      %2072 = vmatprep.subr.mxu0 0.0
      %2073 = vmatpush1.msra.mxu0 0.0
      %2074 = vmatprep.subr.mxu0 0.0
      %2075 = vmatpush1.msra.mxu0 0.0
      %2076 = vmatprep.subr.mxu0 0.0
      %2077 = vmatpush1.msra.mxu0 0.0
      %2078 = vmatprep.subr.mxu0 0.0
      %2079 = vmatpush1.msra.mxu0 0.0
      %2080 = vmatprep.subr.mxu0 0.0
      %2081 = vmatpush1.msra.mxu0 0.0
      %2082 = vmatprep.subr.mxu0 0.0
      %2083 = vmatpush1.msra.mxu0 0.0
      %2084 = vmatprep.subr.mxu0 0.0
      %2085 = vmatpush1.msra.mxu0 0.0
      %2086 = vmatprep.subr.mxu0 0.0
      %2087 = vmatpush1.msra.mxu0 0.0
      %2088 = vmatprep.subr.mxu0 0.0
      %2089 = vmatpush1.msra.mxu0 0.0
      %2090 = vmatprep.subr.mxu0 0.0
      %2091 = vmatpush1.msra.mxu0 0.0
      %2092 = vmatprep.subr.mxu0 0.0
      %2093 = vmatpush1.msra.mxu0 0.0
      %2094 = vmatprep.subr.mxu0 0.0
      %2095 = vmatpush1.msra.mxu0 0.0
      %2096 = vmatprep.subr.mxu0 0.0
      %2097 = vmatpush1.msra.mxu0 0.0
      %2098 = vmatprep.subr.mxu0 0.0
      %2099 = vmatpush1.msra.mxu0 0.0
      %2100 = vmatprep.subr.mxu0 0.0
      %2101 = vmatpush1.msra.mxu0 0.0
      %2102 = vmatprep.subr.mxu0 0.0
      %2103 = vmatpush1.msra.mxu0 0.0
      %2104 = vmatprep.subr.mxu0 0.0
      %2105 = vmatpush1.msra.mxu0 0.0
      %2106 = vmatprep.mubr.f32.mxu0 0.0
      %2107 = vmatmul.mubr.f32.gmra.mrb[0].mxu0 %v2040
      %v2108 = vpop.f32.mrb[0].mxu0
      %v2109 = vadd.f32 0.0, %v2108
      %v2110 = vpop.f32.mrb[0].mxu0
      %2111 = vdwg.mxu0
      %2112 = vmatprep.subr.mxu0 0.0
      %2113 = vmatpush1.msra.mxu0 %v243
      %2114 = vmatprep.subr.mxu0 0.0
      %2115 = vmatpush1.msra.mxu0 %v244
      %2116 = vmatprep.subr.mxu0 0.0
      %2117 = vmatpush1.msra.mxu0 0.0
      %2118 = vmatprep.subr.mxu0 0.0
      %2119 = vmatpush1.msra.mxu0 0.0
      %2120 = vmatprep.subr.mxu0 0.0
      %2121 = vmatpush1.msra.mxu0 0.0
      %2122 = vmatprep.subr.mxu0 0.0
      %2123 = vmatpush1.msra.mxu0 0.0
      %2124 = vmatprep.subr.mxu0 0.0
      %2125 = vmatpush1.msra.mxu0 0.0
      %2126 = vmatprep.subr.mxu0 0.0
      %2127 = vmatpush1.msra.mxu0 0.0
      %2128 = vmatprep.subr.mxu0 0.0
      %2129 = vmatpush1.msra.mxu0 0.0
      %2130 = vmatprep.subr.mxu0 0.0
      %2131 = vmatpush1.msra.mxu0 0.0
      %2132 = vmatprep.subr.mxu0 0.0
      %2133 = vmatpush1.msra.mxu0 0.0
      %2134 = vmatprep.subr.mxu0 0.0
      %2135 = vmatpush1.msra.mxu0 0.0
      %2136 = vmatprep.subr.mxu0 0.0
      %2137 = vmatpush1.msra.mxu0 0.0
      %2138 = vmatprep.subr.mxu0 0.0
      %2139 = vmatpush1.msra.mxu0 0.0
      %2140 = vmatprep.subr.mxu0 0.0
      %2141 = vmatpush1.msra.mxu0 0.0
      %2142 = vmatprep.subr.mxu0 0.0
      %2143 = vmatpush1.msra.mxu0 0.0
      %2144 = vmatprep.subr.mxu0 0.0
      %2145 = vmatpush1.msra.mxu0 0.0
      %2146 = vmatprep.subr.mxu0 0.0
      %2147 = vmatpush1.msra.mxu0 0.0
      %2148 = vmatprep.subr.mxu0 0.0
      %2149 = vmatpush1.msra.mxu0 0.0
      %2150 = vmatprep.subr.mxu0 0.0
      %2151 = vmatpush1.msra.mxu0 0.0
      %2152 = vmatprep.subr.mxu0 0.0
      %2153 = vmatpush1.msra.mxu0 0.0
      %2154 = vmatprep.subr.mxu0 0.0
      %2155 = vmatpush1.msra.mxu0 0.0
      %2156 = vmatprep.subr.mxu0 0.0
      %2157 = vmatpush1.msra.mxu0 0.0
      %2158 = vmatprep.subr.mxu0 0.0
      %2159 = vmatpush1.msra.mxu0 0.0
      %2160 = vmatprep.subr.mxu0 0.0
      %2161 = vmatpush1.msra.mxu0 0.0
      %2162 = vmatprep.subr.mxu0 0.0
      %2163 = vmatpush1.msra.mxu0 0.0
      %2164 = vmatprep.subr.mxu0 0.0
      %2165 = vmatpush1.msra.mxu0 0.0
      %2166 = vmatprep.subr.mxu0 0.0
      %2167 = vmatpush1.msra.mxu0 0.0
      %2168 = vmatprep.subr.mxu0 0.0
      %2169 = vmatpush1.msra.mxu0 0.0
      %2170 = vmatprep.subr.mxu0 0.0
      %2171 = vmatpush1.msra.mxu0 0.0
      %2172 = vmatprep.subr.mxu0 0.0
      %2173 = vmatpush1.msra.mxu0 0.0
      %2174 = vmatprep.subr.mxu0 0.0
      %2175 = vmatpush1.msra.mxu0 0.0
      %2176 = vmatprep.mubr.f32.mxu0 0.0
      %2177 = vmatmul.mubr.f32.gmra.mrb[0].mxu0 %v2040
      %v2178 = vpop.f32.mrb[0].mxu0
      %v2179 = vadd.f32 0.0, %v2178
      %v2180 = vpop.f32.mrb[0].mxu0
      %2181 = vdwg.mxu0
      %v2183 = vsel %vm394, %v2179, 0
      %2185 = vmatprep.subr.mxu0 0.0
      %2186 = vmatpush1.msra.mxu0 %v2183
      %2187 = vmatprep.subr.mxu0 0.0
      %2188 = vmatpush1.msra.mxu0 0.0
      %2189 = vmatprep.subr.mxu0 0.0
      %2190 = vmatpush1.msra.mxu0 0.0
      %2191 = vmatprep.subr.mxu0 0.0
      %2192 = vmatpush1.msra.mxu0 0.0
      %2193 = vmatprep.subr.mxu0 0.0
      %2194 = vmatpush1.msra.mxu0 0.0
      %2195 = vmatprep.subr.mxu0 0.0
      %2196 = vmatpush1.msra.mxu0 0.0
      %2197 = vmatprep.subr.mxu0 0.0
      %2198 = vmatpush1.msra.mxu0 0.0
      %2199 = vmatprep.subr.mxu0 0.0
      %2200 = vmatpush1.msra.mxu0 0.0
      %2201 = vmatprep.subr.mxu0 0.0
      %2202 = vmatpush1.msra.mxu0 0.0
      %2203 = vmatprep.subr.mxu0 0.0
      %2204 = vmatpush1.msra.mxu0 0.0
      %2205 = vmatprep.subr.mxu0 0.0
      %2206 = vmatpush1.msra.mxu0 0.0
      %2207 = vmatprep.subr.mxu0 0.0
      %2208 = vmatpush1.msra.mxu0 0.0
      %2209 = vmatprep.subr.mxu0 0.0
      %2210 = vmatpush1.msra.mxu0 0.0
      %2211 = vmatprep.subr.mxu0 0.0
      %2212 = vmatpush1.msra.mxu0 0.0
      %2213 = vmatprep.subr.mxu0 0.0
      %2214 = vmatpush1.msra.mxu0 0.0
      %2215 = vmatprep.subr.mxu0 0.0
      %2216 = vmatpush1.msra.mxu0 0.0
      %2217 = vmatprep.subr.mxu0 0.0
      %2218 = vmatpush1.msra.mxu0 0.0
      %2219 = vmatprep.subr.mxu0 0.0
      %2220 = vmatpush1.msra.mxu0 0.0
      %2221 = vmatprep.subr.mxu0 0.0
      %2222 = vmatpush1.msra.mxu0 0.0
      %2223 = vmatprep.subr.mxu0 0.0
      %2224 = vmatpush1.msra.mxu0 0.0
      %2225 = vmatprep.subr.mxu0 0.0
      %2226 = vmatpush1.msra.mxu0 0.0
      %2227 = vmatprep.subr.mxu0 0.0
      %2228 = vmatpush1.msra.mxu0 0.0
      %2229 = vmatprep.subr.mxu0 0.0
      %2230 = vmatpush1.msra.mxu0 0.0
      %2231 = vmatprep.subr.mxu0 0.0
      %2232 = vmatpush1.msra.mxu0 0.0
      %2233 = vmatprep.subr.mxu0 0.0
      %2234 = vmatpush1.msra.mxu0 0.0
      %2235 = vmatprep.subr.mxu0 0.0
      %2236 = vmatpush1.msra.mxu0 0.0
      %2237 = vmatprep.subr.mxu0 0.0
      %2238 = vmatpush1.msra.mxu0 0.0
      %2239 = vmatprep.subr.mxu0 0.0
      %2240 = vmatpush1.msra.mxu0 0.0
      %2241 = vmatprep.subr.mxu0 0.0
      %2242 = vmatpush1.msra.mxu0 0.0
      %2243 = vmatprep.subr.mxu0 0.0
      %2244 = vmatpush1.msra.mxu0 0.0
      %2245 = vmatprep.subr.mxu0 0.0
      %2246 = vmatpush1.msra.mxu0 0.0
      %2247 = vmatprep.subr.mxu0 0.0
      %2248 = vmatpush1.msra.mxu0 0.0
      %2249 = vmatprep.mubr.f32.mxu0 0.0
      %2250 = vmatmul.mubr.f32.gmra.mrb[0].mxu0 %v392
      %v2251 = vpop.f32.mrb[0].mxu0
      %v2252 = vadd.f32 0.0, %v2251
      %v2253 = vpop.f32.mrb[0].mxu0
      %2254 = vdwg.mxu0
      %v2256 = vsel %vm394, %v2109, 0
      %2258 = vmatprep.subr.mxu0 0.0
      %2259 = vmatpush1.msra.mxu0 %v2256
      %2260 = vmatprep.subr.mxu0 0.0
      %2261 = vmatpush1.msra.mxu0 0.0
      %2262 = vmatprep.subr.mxu0 0.0
      %2263 = vmatpush1.msra.mxu0 0.0
      %2264 = vmatprep.subr.mxu0 0.0
      %2265 = vmatpush1.msra.mxu0 0.0
      %2266 = vmatprep.subr.mxu0 0.0
      %2267 = vmatpush1.msra.mxu0 0.0
      %2268 = vmatprep.subr.mxu0 0.0
      %2269 = vmatpush1.msra.mxu0 0.0
      %2270 = vmatprep.subr.mxu0 0.0
      %2271 = vmatpush1.msra.mxu0 0.0
      %2272 = vmatprep.subr.mxu0 0.0
      %2273 = vmatpush1.msra.mxu0 0.0
      %2274 = vmatprep.subr.mxu0 0.0
      %2275 = vmatpush1.msra.mxu0 0.0
      %2276 = vmatprep.subr.mxu0 0.0
      %2277 = vmatpush1.msra.mxu0 0.0
      %2278 = vmatprep.subr.mxu0 0.0
      %2279 = vmatpush1.msra.mxu0 0.0
      %2280 = vmatprep.subr.mxu0 0.0
      %2281 = vmatpush1.msra.mxu0 0.0
      %2282 = vmatprep.subr.mxu0 0.0
      %2283 = vmatpush1.msra.mxu0 0.0
      %2284 = vmatprep.subr.mxu0 0.0
      %2285 = vmatpush1.msra.mxu0 0.0
      %2286 = vmatprep.subr.mxu0 0.0
      %2287 = vmatpush1.msra.mxu0 0.0
      %2288 = vmatprep.subr.mxu0 0.0
      %2289 = vmatpush1.msra.mxu0 0.0
      %2290 = vmatprep.subr.mxu0 0.0
      %2291 = vmatpush1.msra.mxu0 0.0
      %2292 = vmatprep.subr.mxu0 0.0
      %2293 = vmatpush1.msra.mxu0 0.0
      %2294 = vmatprep.subr.mxu0 0.0
      %2295 = vmatpush1.msra.mxu0 0.0
      %2296 = vmatprep.subr.mxu0 0.0
      %2297 = vmatpush1.msra.mxu0 0.0
      %2298 = vmatprep.subr.mxu0 0.0
      %2299 = vmatpush1.msra.mxu0 0.0
      %2300 = vmatprep.subr.mxu0 0.0
      %2301 = vmatpush1.msra.mxu0 0.0
      %2302 = vmatprep.subr.mxu0 0.0
      %2303 = vmatpush1.msra.mxu0 0.0
      %2304 = vmatprep.subr.mxu0 0.0
      %2305 = vmatpush1.msra.mxu0 0.0
      %2306 = vmatprep.subr.mxu0 0.0
      %2307 = vmatpush1.msra.mxu0 0.0
      %2308 = vmatprep.subr.mxu0 0.0
      %2309 = vmatpush1.msra.mxu0 0.0
      %2310 = vmatprep.subr.mxu0 0.0
      %2311 = vmatpush1.msra.mxu0 0.0
      %2312 = vmatprep.subr.mxu0 0.0
      %2313 = vmatpush1.msra.mxu0 0.0
      %2314 = vmatprep.subr.mxu0 0.0
      %2315 = vmatpush1.msra.mxu0 0.0
      %2316 = vmatprep.subr.mxu0 0.0
      %2317 = vmatpush1.msra.mxu0 0.0
      %2318 = vmatprep.subr.mxu0 0.0
      %2319 = vmatpush1.msra.mxu0 0.0
      %2320 = vmatprep.subr.mxu0 0.0
      %2321 = vmatpush1.msra.mxu0 0.0
      %2322 = vmatprep.mubr.f32.mxu0 0.0
      %2323 = vmatmul.mubr.f32.gmra.mrb[0].mxu0 %v469
      %v2324 = vpop.f32.mrb[0].mxu0
      %v2325 = vadd.f32 %v2252, %v2324
      %v2326 = vpop.f32.mrb[0].mxu0
      %2327 = vdwg.mxu0
      %v2328 = vld [vmem:[%s223] sm:$0xf]
      %2330 = vrot.lane.b32.xlu0 %v2328, 16
      %v2331 = vpop.permute.xlu0 %2330
      %v2332 = vsel %vm246, %v2331, 0
      %2334 = vmatprep.subr.mxu0 0.0
      %2335 = vmatpush1.msra.mxu0 %v240
      %2336 = vmatprep.subr.mxu0 0.0
      %2337 = vmatpush1.msra.mxu0 %v241
      %2338 = vmatprep.subr.mxu0 0.0
      %2339 = vmatpush1.msra.mxu0 0.0
      %2340 = vmatprep.subr.mxu0 0.0
      %2341 = vmatpush1.msra.mxu0 0.0
      %2342 = vmatprep.subr.mxu0 0.0
      %2343 = vmatpush1.msra.mxu0 0.0
      %2344 = vmatprep.subr.mxu0 0.0
      %2345 = vmatpush1.msra.mxu0 0.0
      %2346 = vmatprep.subr.mxu0 0.0
      %2347 = vmatpush1.msra.mxu0 0.0
      %2348 = vmatprep.subr.mxu0 0.0
      %2349 = vmatpush1.msra.mxu0 0.0
      %2350 = vmatprep.subr.mxu0 0.0
      %2351 = vmatpush1.msra.mxu0 0.0
      %2352 = vmatprep.subr.mxu0 0.0
      %2353 = vmatpush1.msra.mxu0 0.0
      %2354 = vmatprep.subr.mxu0 0.0
      %2355 = vmatpush1.msra.mxu0 0.0
      %2356 = vmatprep.subr.mxu0 0.0
      %2357 = vmatpush1.msra.mxu0 0.0
      %2358 = vmatprep.subr.mxu0 0.0
      %2359 = vmatpush1.msra.mxu0 0.0
      %2360 = vmatprep.subr.mxu0 0.0
      %2361 = vmatpush1.msra.mxu0 0.0
      %2362 = vmatprep.subr.mxu0 0.0
      %2363 = vmatpush1.msra.mxu0 0.0
      %2364 = vmatprep.subr.mxu0 0.0
      %2365 = vmatpush1.msra.mxu0 0.0
      %2366 = vmatprep.subr.mxu0 0.0
      %2367 = vmatpush1.msra.mxu0 0.0
      %2368 = vmatprep.subr.mxu0 0.0
      %2369 = vmatpush1.msra.mxu0 0.0
      %2370 = vmatprep.subr.mxu0 0.0
      %2371 = vmatpush1.msra.mxu0 0.0
      %2372 = vmatprep.subr.mxu0 0.0
      %2373 = vmatpush1.msra.mxu0 0.0
      %2374 = vmatprep.subr.mxu0 0.0
      %2375 = vmatpush1.msra.mxu0 0.0
      %2376 = vmatprep.subr.mxu0 0.0
      %2377 = vmatpush1.msra.mxu0 0.0
      %2378 = vmatprep.subr.mxu0 0.0
      %2379 = vmatpush1.msra.mxu0 0.0
      %2380 = vmatprep.subr.mxu0 0.0
      %2381 = vmatpush1.msra.mxu0 0.0
      %2382 = vmatprep.subr.mxu0 0.0
      %2383 = vmatpush1.msra.mxu0 0.0
      %2384 = vmatprep.subr.mxu0 0.0
      %2385 = vmatpush1.msra.mxu0 0.0
      %2386 = vmatprep.subr.mxu0 0.0
      %2387 = vmatpush1.msra.mxu0 0.0
      %2388 = vmatprep.subr.mxu0 0.0
      %2389 = vmatpush1.msra.mxu0 0.0
      %2390 = vmatprep.subr.mxu0 0.0
      %2391 = vmatpush1.msra.mxu0 0.0
      %2392 = vmatprep.subr.mxu0 0.0
      %2393 = vmatpush1.msra.mxu0 0.0
      %2394 = vmatprep.subr.mxu0 0.0
      %2395 = vmatpush1.msra.mxu0 0.0
      %2396 = vmatprep.subr.mxu0 0.0
      %2397 = vmatpush1.msra.mxu0 0.0
      %2398 = vmatprep.mubr.f32.mxu0 0.0
      %2399 = vmatmul.mubr.f32.gmra.mrb[0].mxu0 %v2332
      %v2400 = vpop.f32.mrb[0].mxu0
      %v2401 = vadd.f32 0.0, %v2400
      %v2402 = vpop.f32.mrb[0].mxu0
      %2403 = vdwg.mxu0
      %v2405 = vsel %vm394, %v2401, 0
      %2407 = vmatprep.subr.mxu0 0.0
      %2408 = vmatpush1.msra.mxu0 %v2405
      %2409 = vmatprep.subr.mxu0 0.0
      %2410 = vmatpush1.msra.mxu0 0.0
      %2411 = vmatprep.subr.mxu0 0.0
      %2412 = vmatpush1.msra.mxu0 0.0
      %2413 = vmatprep.subr.mxu0 0.0
      %2414 = vmatpush1.msra.mxu0 0.0
      %2415 = vmatprep.subr.mxu0 0.0
      %2416 = vmatpush1.msra.mxu0 0.0
      %2417 = vmatprep.subr.mxu0 0.0
      %2418 = vmatpush1.msra.mxu0 0.0
      %2419 = vmatprep.subr.mxu0 0.0
      %2420 = vmatpush1.msra.mxu0 0.0
      %2421 = vmatprep.subr.mxu0 0.0
      %2422 = vmatpush1.msra.mxu0 0.0
      %2423 = vmatprep.subr.mxu0 0.0
      %2424 = vmatpush1.msra.mxu0 0.0
      %2425 = vmatprep.subr.mxu0 0.0
      %2426 = vmatpush1.msra.mxu0 0.0
      %2427 = vmatprep.subr.mxu0 0.0
      %2428 = vmatpush1.msra.mxu0 0.0
      %2429 = vmatprep.subr.mxu0 0.0
      %2430 = vmatpush1.msra.mxu0 0.0
      %2431 = vmatprep.subr.mxu0 0.0
      %2432 = vmatpush1.msra.mxu0 0.0
      %2433 = vmatprep.subr.mxu0 0.0
      %2434 = vmatpush1.msra.mxu0 0.0
      %2435 = vmatprep.subr.mxu0 0.0
      %2436 = vmatpush1.msra.mxu0 0.0
      %2437 = vmatprep.subr.mxu0 0.0
      %2438 = vmatpush1.msra.mxu0 0.0
      %2439 = vmatprep.subr.mxu0 0.0
      %2440 = vmatpush1.msra.mxu0 0.0
      %2441 = vmatprep.subr.mxu0 0.0
      %2442 = vmatpush1.msra.mxu0 0.0
      %2443 = vmatprep.subr.mxu0 0.0
      %2444 = vmatpush1.msra.mxu0 0.0
      %2445 = vmatprep.subr.mxu0 0.0
      %2446 = vmatpush1.msra.mxu0 0.0
      %2447 = vmatprep.subr.mxu0 0.0
      %2448 = vmatpush1.msra.mxu0 0.0
      %2449 = vmatprep.subr.mxu0 0.0
      %2450 = vmatpush1.msra.mxu0 0.0
      %2451 = vmatprep.subr.mxu0 0.0
      %2452 = vmatpush1.msra.mxu0 0.0
      %2453 = vmatprep.subr.mxu0 0.0
      %2454 = vmatpush1.msra.mxu0 0.0
      %2455 = vmatprep.subr.mxu0 0.0
      %2456 = vmatpush1.msra.mxu0 0.0
      %2457 = vmatprep.subr.mxu0 0.0
      %2458 = vmatpush1.msra.mxu0 0.0
      %2459 = vmatprep.subr.mxu0 0.0
      %2460 = vmatpush1.msra.mxu0 0.0
      %2461 = vmatprep.subr.mxu0 0.0
      %2462 = vmatpush1.msra.mxu0 0.0
      %2463 = vmatprep.subr.mxu0 0.0
      %2464 = vmatpush1.msra.mxu0 0.0
      %2465 = vmatprep.subr.mxu0 0.0
      %2466 = vmatpush1.msra.mxu0 0.0
      %2467 = vmatprep.subr.mxu0 0.0
      %2468 = vmatpush1.msra.mxu0 0.0
      %2469 = vmatprep.subr.mxu0 0.0
      %2470 = vmatpush1.msra.mxu0 0.0
      %2471 = vmatprep.mubr.f32.mxu0 0.0
      %2472 = vmatmul.mubr.f32.gmra.mrb[0].mxu0 %v619
      %v2473 = vpop.f32.mrb[0].mxu0
      %v2474 = vadd.f32 0.0, %v2473
      %v2475 = vpop.f32.mrb[0].mxu0
      %2476 = vdwg.mxu0
      %v2477 = vadd.f32 %v2325, %v2474
      %2478 = vmatprep.subr.mxu0 0.0
      %2479 = vmatpush1.msra.mxu0 %v243
      %2480 = vmatprep.subr.mxu0 0.0
      %2481 = vmatpush1.msra.mxu0 %v244
      %2482 = vmatprep.subr.mxu0 0.0
      %2483 = vmatpush1.msra.mxu0 0.0
      %2484 = vmatprep.subr.mxu0 0.0
      %2485 = vmatpush1.msra.mxu0 0.0
      %2486 = vmatprep.subr.mxu0 0.0
      %2487 = vmatpush1.msra.mxu0 0.0
      %2488 = vmatprep.subr.mxu0 0.0
      %2489 = vmatpush1.msra.mxu0 0.0
      %2490 = vmatprep.subr.mxu0 0.0
      %2491 = vmatpush1.msra.mxu0 0.0
      %2492 = vmatprep.subr.mxu0 0.0
      %2493 = vmatpush1.msra.mxu0 0.0
      %2494 = vmatprep.subr.mxu0 0.0
      %2495 = vmatpush1.msra.mxu0 0.0
      %2496 = vmatprep.subr.mxu0 0.0
      %2497 = vmatpush1.msra.mxu0 0.0
      %2498 = vmatprep.subr.mxu0 0.0
      %2499 = vmatpush1.msra.mxu0 0.0
      %2500 = vmatprep.subr.mxu0 0.0
      %2501 = vmatpush1.msra.mxu0 0.0
      %2502 = vmatprep.subr.mxu0 0.0
      %2503 = vmatpush1.msra.mxu0 0.0
      %2504 = vmatprep.subr.mxu0 0.0
      %2505 = vmatpush1.msra.mxu0 0.0
      %2506 = vmatprep.subr.mxu0 0.0
      %2507 = vmatpush1.msra.mxu0 0.0
      %2508 = vmatprep.subr.mxu0 0.0
      %2509 = vmatpush1.msra.mxu0 0.0
      %2510 = vmatprep.subr.mxu0 0.0
      %2511 = vmatpush1.msra.mxu0 0.0
      %2512 = vmatprep.subr.mxu0 0.0
      %2513 = vmatpush1.msra.mxu0 0.0
      %2514 = vmatprep.subr.mxu0 0.0
      %2515 = vmatpush1.msra.mxu0 0.0
      %2516 = vmatprep.subr.mxu0 0.0
      %2517 = vmatpush1.msra.mxu0 0.0
      %2518 = vmatprep.subr.mxu0 0.0
      %2519 = vmatpush1.msra.mxu0 0.0
      %2520 = vmatprep.subr.mxu0 0.0
      %2521 = vmatpush1.msra.mxu0 0.0
      %2522 = vmatprep.subr.mxu0 0.0
      %2523 = vmatpush1.msra.mxu0 0.0
      %2524 = vmatprep.subr.mxu0 0.0
      %2525 = vmatpush1.msra.mxu0 0.0
      %2526 = vmatprep.subr.mxu0 0.0
      %2527 = vmatpush1.msra.mxu0 0.0
      %2528 = vmatprep.subr.mxu0 0.0
      %2529 = vmatpush1.msra.mxu0 0.0
      %2530 = vmatprep.subr.mxu0 0.0
      %2531 = vmatpush1.msra.mxu0 0.0
      %2532 = vmatprep.subr.mxu0 0.0
      %2533 = vmatpush1.msra.mxu0 0.0
      %2534 = vmatprep.subr.mxu0 0.0
      %2535 = vmatpush1.msra.mxu0 0.0
      %2536 = vmatprep.subr.mxu0 0.0
      %2537 = vmatpush1.msra.mxu0 0.0
      %2538 = vmatprep.subr.mxu0 0.0
      %2539 = vmatpush1.msra.mxu0 0.0
      %2540 = vmatprep.subr.mxu0 0.0
      %2541 = vmatpush1.msra.mxu0 0.0
      %2542 = vmatprep.mubr.f32.mxu0 0.0
      %2543 = vmatmul.mubr.f32.gmra.mrb[0].mxu0 %v2332
      %v2544 = vpop.f32.mrb[0].mxu0
      %v2545 = vadd.f32 0.0, %v2544
      %v2546 = vpop.f32.mrb[0].mxu0
      %2547 = vdwg.mxu0
      %v2549 = vsel %vm394, %v2545, 0
      %2551 = vmatprep.subr.mxu0 0.0
      %2552 = vmatpush1.msra.mxu0 %v2549
      %2553 = vmatprep.subr.mxu0 0.0
      %2554 = vmatpush1.msra.mxu0 0.0
      %2555 = vmatprep.subr.mxu0 0.0
      %2556 = vmatpush1.msra.mxu0 0.0
      %2557 = vmatprep.subr.mxu0 0.0
      %2558 = vmatpush1.msra.mxu0 0.0
      %2559 = vmatprep.subr.mxu0 0.0
      %2560 = vmatpush1.msra.mxu0 0.0
      %2561 = vmatprep.subr.mxu0 0.0
      %2562 = vmatpush1.msra.mxu0 0.0
      %2563 = vmatprep.subr.mxu0 0.0
      %2564 = vmatpush1.msra.mxu0 0.0
      %2565 = vmatprep.subr.mxu0 0.0
      %2566 = vmatpush1.msra.mxu0 0.0
      %2567 = vmatprep.subr.mxu0 0.0
      %2568 = vmatpush1.msra.mxu0 0.0
      %2569 = vmatprep.subr.mxu0 0.0
      %2570 = vmatpush1.msra.mxu0 0.0
      %2571 = vmatprep.subr.mxu0 0.0
      %2572 = vmatpush1.msra.mxu0 0.0
      %2573 = vmatprep.subr.mxu0 0.0
      %2574 = vmatpush1.msra.mxu0 0.0
      %2575 = vmatprep.subr.mxu0 0.0
      %2576 = vmatpush1.msra.mxu0 0.0
      %2577 = vmatprep.subr.mxu0 0.0
      %2578 = vmatpush1.msra.mxu0 0.0
      %2579 = vmatprep.subr.mxu0 0.0
      %2580 = vmatpush1.msra.mxu0 0.0
      %2581 = vmatprep.subr.mxu0 0.0
      %2582 = vmatpush1.msra.mxu0 0.0
      %2583 = vmatprep.subr.mxu0 0.0
      %2584 = vmatpush1.msra.mxu0 0.0
      %2585 = vmatprep.subr.mxu0 0.0
      %2586 = vmatpush1.msra.mxu0 0.0
      %2587 = vmatprep.subr.mxu0 0.0
      %2588 = vmatpush1.msra.mxu0 0.0
      %2589 = vmatprep.subr.mxu0 0.0
      %2590 = vmatpush1.msra.mxu0 0.0
      %2591 = vmatprep.subr.mxu0 0.0
      %2592 = vmatpush1.msra.mxu0 0.0
      %2593 = vmatprep.subr.mxu0 0.0
      %2594 = vmatpush1.msra.mxu0 0.0
      %2595 = vmatprep.subr.mxu0 0.0
      %2596 = vmatpush1.msra.mxu0 0.0
      %2597 = vmatprep.subr.mxu0 0.0
      %2598 = vmatpush1.msra.mxu0 0.0
      %2599 = vmatprep.subr.mxu0 0.0
      %2600 = vmatpush1.msra.mxu0 0.0
      %2601 = vmatprep.subr.mxu0 0.0
      %2602 = vmatpush1.msra.mxu0 0.0
      %2603 = vmatprep.subr.mxu0 0.0
      %2604 = vmatpush1.msra.mxu0 0.0
      %2605 = vmatprep.subr.mxu0 0.0
      %2606 = vmatpush1.msra.mxu0 0.0
      %2607 = vmatprep.subr.mxu0 0.0
      %2608 = vmatpush1.msra.mxu0 0.0
      %2609 = vmatprep.subr.mxu0 0.0
      %2610 = vmatpush1.msra.mxu0 0.0
      %2611 = vmatprep.subr.mxu0 0.0
      %2612 = vmatpush1.msra.mxu0 0.0
      %2613 = vmatprep.subr.mxu0 0.0
      %2614 = vmatpush1.msra.mxu0 0.0
      %2615 = vmatprep.mubr.f32.mxu0 0.0
      %2616 = vmatmul.mubr.f32.gmra.mrb[0].mxu0 %v766
      %v2617 = vpop.f32.mrb[0].mxu0
      %v2618 = vadd.f32 0.0, %v2617
      %v2619 = vpop.f32.mrb[0].mxu0
      %2620 = vdwg.mxu0
      %v2621 = vadd.f32 %v2477, %v2618
      %v2622 = vadd.f32 %v2621, %v845
      %2624 = vrot.lane.b32.xlu0 %v2622, 24
      %v2625 = vpop.permute.xlu0 %2624
      %vm2627 = vcmask 261312
      %2628 = vst.msk [vmem:[%s231] sm:$0xff] %vm2627, %v2625
      %v2629 = vld [vmem:[%s223 + $0x4] sm:$0xf]
      %v2631 = vsel %vm246, %v2629, 0
      %2633 = vmatprep.subr.mxu0 0.0
      %2634 = vmatpush1.msra.mxu0 %v240
      %2635 = vmatprep.subr.mxu0 0.0
      %2636 = vmatpush1.msra.mxu0 %v241
      %2637 = vmatprep.subr.mxu0 0.0
      %2638 = vmatpush1.msra.mxu0 0.0
      %2639 = vmatprep.subr.mxu0 0.0
      %2640 = vmatpush1.msra.mxu0 0.0
      %2641 = vmatprep.subr.mxu0 0.0
      %2642 = vmatpush1.msra.mxu0 0.0
      %2643 = vmatprep.subr.mxu0 0.0
      %2644 = vmatpush1.msra.mxu0 0.0
      %2645 = vmatprep.subr.mxu0 0.0
      %2646 = vmatpush1.msra.mxu0 0.0
      %2647 = vmatprep.subr.mxu0 0.0
      %2648 = vmatpush1.msra.mxu0 0.0
      %2649 = vmatprep.subr.mxu0 0.0
      %2650 = vmatpush1.msra.mxu0 0.0
      %2651 = vmatprep.subr.mxu0 0.0
      %2652 = vmatpush1.msra.mxu0 0.0
      %2653 = vmatprep.subr.mxu0 0.0
      %2654 = vmatpush1.msra.mxu0 0.0
      %2655 = vmatprep.subr.mxu0 0.0
      %2656 = vmatpush1.msra.mxu0 0.0
      %2657 = vmatprep.subr.mxu0 0.0
      %2658 = vmatpush1.msra.mxu0 0.0
      %2659 = vmatprep.subr.mxu0 0.0
      %2660 = vmatpush1.msra.mxu0 0.0
      %2661 = vmatprep.subr.mxu0 0.0
      %2662 = vmatpush1.msra.mxu0 0.0
      %2663 = vmatprep.subr.mxu0 0.0
      %2664 = vmatpush1.msra.mxu0 0.0
      %2665 = vmatprep.subr.mxu0 0.0
      %2666 = vmatpush1.msra.mxu0 0.0
      %2667 = vmatprep.subr.mxu0 0.0
      %2668 = vmatpush1.msra.mxu0 0.0
      %2669 = vmatprep.subr.mxu0 0.0
      %2670 = vmatpush1.msra.mxu0 0.0
      %2671 = vmatprep.subr.mxu0 0.0
      %2672 = vmatpush1.msra.mxu0 0.0
      %2673 = vmatprep.subr.mxu0 0.0
      %2674 = vmatpush1.msra.mxu0 0.0
      %2675 = vmatprep.subr.mxu0 0.0
      %2676 = vmatpush1.msra.mxu0 0.0
      %2677 = vmatprep.subr.mxu0 0.0
      %2678 = vmatpush1.msra.mxu0 0.0
      %2679 = vmatprep.subr.mxu0 0.0
      %2680 = vmatpush1.msra.mxu0 0.0
      %2681 = vmatprep.subr.mxu0 0.0
      %2682 = vmatpush1.msra.mxu0 0.0
      %2683 = vmatprep.subr.mxu0 0.0
      %2684 = vmatpush1.msra.mxu0 0.0
      %2685 = vmatprep.subr.mxu0 0.0
      %2686 = vmatpush1.msra.mxu0 0.0
      %2687 = vmatprep.subr.mxu0 0.0
      %2688 = vmatpush1.msra.mxu0 0.0
      %2689 = vmatprep.subr.mxu0 0.0
      %2690 = vmatpush1.msra.mxu0 0.0
      %2691 = vmatprep.subr.mxu0 0.0
      %2692 = vmatpush1.msra.mxu0 0.0
      %2693 = vmatprep.subr.mxu0 0.0
      %2694 = vmatpush1.msra.mxu0 0.0
      %2695 = vmatprep.subr.mxu0 0.0
      %2696 = vmatpush1.msra.mxu0 0.0
      %2697 = vmatprep.mubr.f32.mxu0 0.0
      %2698 = vmatmul.mubr.f32.gmra.mrb[0].mxu0 %v2631
      %v2699 = vpop.f32.mrb[0].mxu0
      %v2700 = vadd.f32 0.0, %v2699
      %v2701 = vpop.f32.mrb[0].mxu0
      %2702 = vdwg.mxu0
      %2703 = vmatprep.subr.mxu0 0.0
      %2704 = vmatpush1.msra.mxu0 %v243
      %2705 = vmatprep.subr.mxu0 0.0
      %2706 = vmatpush1.msra.mxu0 %v244
      %2707 = vmatprep.subr.mxu0 0.0
      %2708 = vmatpush1.msra.mxu0 0.0
      %2709 = vmatprep.subr.mxu0 0.0
      %2710 = vmatpush1.msra.mxu0 0.0
      %2711 = vmatprep.subr.mxu0 0.0
      %2712 = vmatpush1.msra.mxu0 0.0
      %2713 = vmatprep.subr.mxu0 0.0
      %2714 = vmatpush1.msra.mxu0 0.0
      %2715 = vmatprep.subr.mxu0 0.0
      %2716 = vmatpush1.msra.mxu0 0.0
      %2717 = vmatprep.subr.mxu0 0.0
      %2718 = vmatpush1.msra.mxu0 0.0
      %2719 = vmatprep.subr.mxu0 0.0
      %2720 = vmatpush1.msra.mxu0 0.0
      %2721 = vmatprep.subr.mxu0 0.0
      %2722 = vmatpush1.msra.mxu0 0.0
      %2723 = vmatprep.subr.mxu0 0.0
      %2724 = vmatpush1.msra.mxu0 0.0
      %2725 = vmatprep.subr.mxu0 0.0
      %2726 = vmatpush1.msra.mxu0 0.0
      %2727 = vmatprep.subr.mxu0 0.0
      %2728 = vmatpush1.msra.mxu0 0.0
      %2729 = vmatprep.subr.mxu0 0.0
      %2730 = vmatpush1.msra.mxu0 0.0
      %2731 = vmatprep.subr.mxu0 0.0
      %2732 = vmatpush1.msra.mxu0 0.0
      %2733 = vmatprep.subr.mxu0 0.0
      %2734 = vmatpush1.msra.mxu0 0.0
      %2735 = vmatprep.subr.mxu0 0.0
      %2736 = vmatpush1.msra.mxu0 0.0
      %2737 = vmatprep.subr.mxu0 0.0
      %2738 = vmatpush1.msra.mxu0 0.0
      %2739 = vmatprep.subr.mxu0 0.0
      %2740 = vmatpush1.msra.mxu0 0.0
      %2741 = vmatprep.subr.mxu0 0.0
      %2742 = vmatpush1.msra.mxu0 0.0
      %2743 = vmatprep.subr.mxu0 0.0
      %2744 = vmatpush1.msra.mxu0 0.0
      %2745 = vmatprep.subr.mxu0 0.0
      %2746 = vmatpush1.msra.mxu0 0.0
      %2747 = vmatprep.subr.mxu0 0.0
      %2748 = vmatpush1.msra.mxu0 0.0
      %2749 = vmatprep.subr.mxu0 0.0
      %2750 = vmatpush1.msra.mxu0 0.0
      %2751 = vmatprep.subr.mxu0 0.0
      %2752 = vmatpush1.msra.mxu0 0.0
      %2753 = vmatprep.subr.mxu0 0.0
      %2754 = vmatpush1.msra.mxu0 0.0
      %2755 = vmatprep.subr.mxu0 0.0
      %2756 = vmatpush1.msra.mxu0 0.0
      %2757 = vmatprep.subr.mxu0 0.0
      %2758 = vmatpush1.msra.mxu0 0.0
      %2759 = vmatprep.subr.mxu0 0.0
      %2760 = vmatpush1.msra.mxu0 0.0
      %2761 = vmatprep.subr.mxu0 0.0
      %2762 = vmatpush1.msra.mxu0 0.0
      %2763 = vmatprep.subr.mxu0 0.0
      %2764 = vmatpush1.msra.mxu0 0.0
      %2765 = vmatprep.subr.mxu0 0.0
      %2766 = vmatpush1.msra.mxu0 0.0
      %2767 = vmatprep.mubr.f32.mxu0 0.0
      %2768 = vmatmul.mubr.f32.gmra.mrb[0].mxu0 %v2631
      %v2769 = vpop.f32.mrb[0].mxu0
      %v2770 = vadd.f32 0.0, %v2769
      %v2771 = vpop.f32.mrb[0].mxu0
      %2772 = vdwg.mxu0
      %v2774 = vsel %vm394, %v2770, 0
      %2776 = vmatprep.subr.mxu0 0.0
      %2777 = vmatpush1.msra.mxu0 %v2774
      %2778 = vmatprep.subr.mxu0 0.0
      %2779 = vmatpush1.msra.mxu0 0.0
      %2780 = vmatprep.subr.mxu0 0.0
      %2781 = vmatpush1.msra.mxu0 0.0
      %2782 = vmatprep.subr.mxu0 0.0
      %2783 = vmatpush1.msra.mxu0 0.0
      %2784 = vmatprep.subr.mxu0 0.0
      %2785 = vmatpush1.msra.mxu0 0.0
      %2786 = vmatprep.subr.mxu0 0.0
      %2787 = vmatpush1.msra.mxu0 0.0
      %2788 = vmatprep.subr.mxu0 0.0
      %2789 = vmatpush1.msra.mxu0 0.0
      %2790 = vmatprep.subr.mxu0 0.0
      %2791 = vmatpush1.msra.mxu0 0.0
      %2792 = vmatprep.subr.mxu0 0.0
      %2793 = vmatpush1.msra.mxu0 0.0
      %2794 = vmatprep.subr.mxu0 0.0
      %2795 = vmatpush1.msra.mxu0 0.0
      %2796 = vmatprep.subr.mxu0 0.0
      %2797 = vmatpush1.msra.mxu0 0.0
      %2798 = vmatprep.subr.mxu0 0.0
      %2799 = vmatpush1.msra.mxu0 0.0
      %2800 = vmatprep.subr.mxu0 0.0
      %2801 = vmatpush1.msra.mxu0 0.0
      %2802 = vmatprep.subr.mxu0 0.0
      %2803 = vmatpush1.msra.mxu0 0.0
      %2804 = vmatprep.subr.mxu0 0.0
      %2805 = vmatpush1.msra.mxu0 0.0
      %2806 = vmatprep.subr.mxu0 0.0
      %2807 = vmatpush1.msra.mxu0 0.0
      %2808 = vmatprep.subr.mxu0 0.0
      %2809 = vmatpush1.msra.mxu0 0.0
      %2810 = vmatprep.subr.mxu0 0.0
      %2811 = vmatpush1.msra.mxu0 0.0
      %2812 = vmatprep.subr.mxu0 0.0
      %2813 = vmatpush1.msra.mxu0 0.0
      %2814 = vmatprep.subr.mxu0 0.0
      %2815 = vmatpush1.msra.mxu0 0.0
      %2816 = vmatprep.subr.mxu0 0.0
      %2817 = vmatpush1.msra.mxu0 0.0
      %2818 = vmatprep.subr.mxu0 0.0
      %2819 = vmatpush1.msra.mxu0 0.0
      %2820 = vmatprep.subr.mxu0 0.0
      %2821 = vmatpush1.msra.mxu0 0.0
      %2822 = vmatprep.subr.mxu0 0.0
      %2823 = vmatpush1.msra.mxu0 0.0
      %2824 = vmatprep.subr.mxu0 0.0
      %2825 = vmatpush1.msra.mxu0 0.0
      %2826 = vmatprep.subr.mxu0 0.0
      %2827 = vmatpush1.msra.mxu0 0.0
      %2828 = vmatprep.subr.mxu0 0.0
      %2829 = vmatpush1.msra.mxu0 0.0
      %2830 = vmatprep.subr.mxu0 0.0
      %2831 = vmatpush1.msra.mxu0 0.0
      %2832 = vmatprep.subr.mxu0 0.0
      %2833 = vmatpush1.msra.mxu0 0.0
      %2834 = vmatprep.subr.mxu0 0.0
      %2835 = vmatpush1.msra.mxu0 0.0
      %2836 = vmatprep.subr.mxu0 0.0
      %2837 = vmatpush1.msra.mxu0 0.0
      %2838 = vmatprep.subr.mxu0 0.0
      %2839 = vmatpush1.msra.mxu0 0.0
      %2840 = vmatprep.mubr.f32.mxu0 0.0
      %2841 = vmatmul.mubr.f32.gmra.mrb[0].mxu0 %v392
      %v2842 = vpop.f32.mrb[0].mxu0
      %v2843 = vadd.f32 0.0, %v2842
      %v2844 = vpop.f32.mrb[0].mxu0
      %2845 = vdwg.mxu0
      %v2847 = vsel %vm394, %v2700, 0
      %2849 = vmatprep.subr.mxu0 0.0
      %2850 = vmatpush1.msra.mxu0 %v2847
      %2851 = vmatprep.subr.mxu0 0.0
      %2852 = vmatpush1.msra.mxu0 0.0
      %2853 = vmatprep.subr.mxu0 0.0
      %2854 = vmatpush1.msra.mxu0 0.0
      %2855 = vmatprep.subr.mxu0 0.0
      %2856 = vmatpush1.msra.mxu0 0.0
      %2857 = vmatprep.subr.mxu0 0.0
      %2858 = vmatpush1.msra.mxu0 0.0
      %2859 = vmatprep.subr.mxu0 0.0
      %2860 = vmatpush1.msra.mxu0 0.0
      %2861 = vmatprep.subr.mxu0 0.0
      %2862 = vmatpush1.msra.mxu0 0.0
      %2863 = vmatprep.subr.mxu0 0.0
      %2864 = vmatpush1.msra.mxu0 0.0
      %2865 = vmatprep.subr.mxu0 0.0
      %2866 = vmatpush1.msra.mxu0 0.0
      %2867 = vmatprep.subr.mxu0 0.0
      %2868 = vmatpush1.msra.mxu0 0.0
      %2869 = vmatprep.subr.mxu0 0.0
      %2870 = vmatpush1.msra.mxu0 0.0
      %2871 = vmatprep.subr.mxu0 0.0
      %2872 = vmatpush1.msra.mxu0 0.0
      %2873 = vmatprep.subr.mxu0 0.0
      %2874 = vmatpush1.msra.mxu0 0.0
      %2875 = vmatprep.subr.mxu0 0.0
      %2876 = vmatpush1.msra.mxu0 0.0
      %2877 = vmatprep.subr.mxu0 0.0
      %2878 = vmatpush1.msra.mxu0 0.0
      %2879 = vmatprep.subr.mxu0 0.0
      %2880 = vmatpush1.msra.mxu0 0.0
      %2881 = vmatprep.subr.mxu0 0.0
      %2882 = vmatpush1.msra.mxu0 0.0
      %2883 = vmatprep.subr.mxu0 0.0
      %2884 = vmatpush1.msra.mxu0 0.0
      %2885 = vmatprep.subr.mxu0 0.0
      %2886 = vmatpush1.msra.mxu0 0.0
      %2887 = vmatprep.subr.mxu0 0.0
      %2888 = vmatpush1.msra.mxu0 0.0
      %2889 = vmatprep.subr.mxu0 0.0
      %2890 = vmatpush1.msra.mxu0 0.0
      %2891 = vmatprep.subr.mxu0 0.0
      %2892 = vmatpush1.msra.mxu0 0.0
      %2893 = vmatprep.subr.mxu0 0.0
      %2894 = vmatpush1.msra.mxu0 0.0
      %2895 = vmatprep.subr.mxu0 0.0
      %2896 = vmatpush1.msra.mxu0 0.0
      %2897 = vmatprep.subr.mxu0 0.0
      %2898 = vmatpush1.msra.mxu0 0.0
      %2899 = vmatprep.subr.mxu0 0.0
      %2900 = vmatpush1.msra.mxu0 0.0
      %2901 = vmatprep.subr.mxu0 0.0
      %2902 = vmatpush1.msra.mxu0 0.0
      %2903 = vmatprep.subr.mxu0 0.0
      %2904 = vmatpush1.msra.mxu0 0.0
      %2905 = vmatprep.subr.mxu0 0.0
      %2906 = vmatpush1.msra.mxu0 0.0
      %2907 = vmatprep.subr.mxu0 0.0
      %2908 = vmatpush1.msra.mxu0 0.0
      %2909 = vmatprep.subr.mxu0 0.0
      %2910 = vmatpush1.msra.mxu0 0.0
      %2911 = vmatprep.subr.mxu0 0.0
      %2912 = vmatpush1.msra.mxu0 0.0
      %2913 = vmatprep.mubr.f32.mxu0 0.0
      %2914 = vmatmul.mubr.f32.gmra.mrb[0].mxu0 %v469
      %v2915 = vpop.f32.mrb[0].mxu0
      %v2916 = vadd.f32 %v2843, %v2915
      %v2917 = vpop.f32.mrb[0].mxu0
      %2918 = vdwg.mxu0
      %2919 = vrot.lane.b32.xlu0 %v2629, 112
      %v2920 = vpop.permute.xlu0 %2919
      %v2921 = vsel %vm246, %v2920, 0
      %2923 = vmatprep.subr.mxu0 0.0
      %2924 = vmatpush1.msra.mxu0 %v240
      %2925 = vmatprep.subr.mxu0 0.0
      %2926 = vmatpush1.msra.mxu0 %v241
      %2927 = vmatprep.subr.mxu0 0.0
      %2928 = vmatpush1.msra.mxu0 0.0
      %2929 = vmatprep.subr.mxu0 0.0
      %2930 = vmatpush1.msra.mxu0 0.0
      %2931 = vmatprep.subr.mxu0 0.0
      %2932 = vmatpush1.msra.mxu0 0.0
      %2933 = vmatprep.subr.mxu0 0.0
      %2934 = vmatpush1.msra.mxu0 0.0
      %2935 = vmatprep.subr.mxu0 0.0
      %2936 = vmatpush1.msra.mxu0 0.0
      %2937 = vmatprep.subr.mxu0 0.0
      %2938 = vmatpush1.msra.mxu0 0.0
      %2939 = vmatprep.subr.mxu0 0.0
      %2940 = vmatpush1.msra.mxu0 0.0
      %2941 = vmatprep.subr.mxu0 0.0
      %2942 = vmatpush1.msra.mxu0 0.0
      %2943 = vmatprep.subr.mxu0 0.0
      %2944 = vmatpush1.msra.mxu0 0.0
      %2945 = vmatprep.subr.mxu0 0.0
      %2946 = vmatpush1.msra.mxu0 0.0
      %2947 = vmatprep.subr.mxu0 0.0
      %2948 = vmatpush1.msra.mxu0 0.0
      %2949 = vmatprep.subr.mxu0 0.0
      %2950 = vmatpush1.msra.mxu0 0.0
      %2951 = vmatprep.subr.mxu0 0.0
      %2952 = vmatpush1.msra.mxu0 0.0
      %2953 = vmatprep.subr.mxu0 0.0
      %2954 = vmatpush1.msra.mxu0 0.0
      %2955 = vmatprep.subr.mxu0 0.0
      %2956 = vmatpush1.msra.mxu0 0.0
      %2957 = vmatprep.subr.mxu0 0.0
      %2958 = vmatpush1.msra.mxu0 0.0
      %2959 = vmatprep.subr.mxu0 0.0
      %2960 = vmatpush1.msra.mxu0 0.0
      %2961 = vmatprep.subr.mxu0 0.0
      %2962 = vmatpush1.msra.mxu0 0.0
      %2963 = vmatprep.subr.mxu0 0.0
      %2964 = vmatpush1.msra.mxu0 0.0
      %2965 = vmatprep.subr.mxu0 0.0
      %2966 = vmatpush1.msra.mxu0 0.0
      %2967 = vmatprep.subr.mxu0 0.0
      %2968 = vmatpush1.msra.mxu0 0.0
      %2969 = vmatprep.subr.mxu0 0.0
      %2970 = vmatpush1.msra.mxu0 0.0
      %2971 = vmatprep.subr.mxu0 0.0
      %2972 = vmatpush1.msra.mxu0 0.0
      %2973 = vmatprep.subr.mxu0 0.0
      %2974 = vmatpush1.msra.mxu0 0.0
      %2975 = vmatprep.subr.mxu0 0.0
      %2976 = vmatpush1.msra.mxu0 0.0
      %2977 = vmatprep.subr.mxu0 0.0
      %2978 = vmatpush1.msra.mxu0 0.0
      %2979 = vmatprep.subr.mxu0 0.0
      %2980 = vmatpush1.msra.mxu0 0.0
      %2981 = vmatprep.subr.mxu0 0.0
      %2982 = vmatpush1.msra.mxu0 0.0
      %2983 = vmatprep.subr.mxu0 0.0
      %2984 = vmatpush1.msra.mxu0 0.0
      %2985 = vmatprep.subr.mxu0 0.0
      %2986 = vmatpush1.msra.mxu0 0.0
      %2987 = vmatprep.mubr.f32.mxu0 0.0
      %2988 = vmatmul.mubr.f32.gmra.mrb[0].mxu0 %v2921
      %v2989 = vpop.f32.mrb[0].mxu0
      %v2990 = vadd.f32 0.0, %v2989
      %v2991 = vpop.f32.mrb[0].mxu0
      %2992 = vdwg.mxu0
      %v2994 = vsel %vm394, %v2990, 0
      %2996 = vmatprep.subr.mxu0 0.0
      %2997 = vmatpush1.msra.mxu0 %v2994
      %2998 = vmatprep.subr.mxu0 0.0
      %2999 = vmatpush1.msra.mxu0 0.0
      %3000 = vmatprep.subr.mxu0 0.0
      %3001 = vmatpush1.msra.mxu0 0.0
      %3002 = vmatprep.subr.mxu0 0.0
      %3003 = vmatpush1.msra.mxu0 0.0
      %3004 = vmatprep.subr.mxu0 0.0
      %3005 = vmatpush1.msra.mxu0 0.0
      %3006 = vmatprep.subr.mxu0 0.0
      %3007 = vmatpush1.msra.mxu0 0.0
      %3008 = vmatprep.subr.mxu0 0.0
      %3009 = vmatpush1.msra.mxu0 0.0
      %3010 = vmatprep.subr.mxu0 0.0
      %3011 = vmatpush1.msra.mxu0 0.0
      %3012 = vmatprep.subr.mxu0 0.0
      %3013 = vmatpush1.msra.mxu0 0.0
      %3014 = vmatprep.subr.mxu0 0.0
      %3015 = vmatpush1.msra.mxu0 0.0
      %3016 = vmatprep.subr.mxu0 0.0
      %3017 = vmatpush1.msra.mxu0 0.0
      %3018 = vmatprep.subr.mxu0 0.0
      %3019 = vmatpush1.msra.mxu0 0.0
      %3020 = vmatprep.subr.mxu0 0.0
      %3021 = vmatpush1.msra.mxu0 0.0
      %3022 = vmatprep.subr.mxu0 0.0
      %3023 = vmatpush1.msra.mxu0 0.0
      %3024 = vmatprep.subr.mxu0 0.0
      %3025 = vmatpush1.msra.mxu0 0.0
      %3026 = vmatprep.subr.mxu0 0.0
      %3027 = vmatpush1.msra.mxu0 0.0
      %3028 = vmatprep.subr.mxu0 0.0
      %3029 = vmatpush1.msra.mxu0 0.0
      %3030 = vmatprep.subr.mxu0 0.0
      %3031 = vmatpush1.msra.mxu0 0.0
      %3032 = vmatprep.subr.mxu0 0.0
      %3033 = vmatpush1.msra.mxu0 0.0
      %3034 = vmatprep.subr.mxu0 0.0
      %3035 = vmatpush1.msra.mxu0 0.0
      %3036 = vmatprep.subr.mxu0 0.0
      %3037 = vmatpush1.msra.mxu0 0.0
      %3038 = vmatprep.subr.mxu0 0.0
      %3039 = vmatpush1.msra.mxu0 0.0
      %3040 = vmatprep.subr.mxu0 0.0
      %3041 = vmatpush1.msra.mxu0 0.0
      %3042 = vmatprep.subr.mxu0 0.0
      %3043 = vmatpush1.msra.mxu0 0.0
      %3044 = vmatprep.subr.mxu0 0.0
      %3045 = vmatpush1.msra.mxu0 0.0
      %3046 = vmatprep.subr.mxu0 0.0
      %3047 = vmatpush1.msra.mxu0 0.0
      %3048 = vmatprep.subr.mxu0 0.0
      %3049 = vmatpush1.msra.mxu0 0.0
      %3050 = vmatprep.subr.mxu0 0.0
      %3051 = vmatpush1.msra.mxu0 0.0
      %3052 = vmatprep.subr.mxu0 0.0
      %3053 = vmatpush1.msra.mxu0 0.0
      %3054 = vmatprep.subr.mxu0 0.0
      %3055 = vmatpush1.msra.mxu0 0.0
      %3056 = vmatprep.subr.mxu0 0.0
      %3057 = vmatpush1.msra.mxu0 0.0
      %3058 = vmatprep.subr.mxu0 0.0
      %3059 = vmatpush1.msra.mxu0 0.0
      %3060 = vmatprep.mubr.f32.mxu0 0.0
      %3061 = vmatmul.mubr.f32.gmra.mrb[0].mxu0 %v619
      %v3062 = vpop.f32.mrb[0].mxu0
      %v3063 = vadd.f32 0.0, %v3062
      %v3064 = vpop.f32.mrb[0].mxu0
      %3065 = vdwg.mxu0
      %v3066 = vadd.f32 %v2916, %v3063
      %3067 = vmatprep.subr.mxu0 0.0
      %3068 = vmatpush1.msra.mxu0 %v243
      %3069 = vmatprep.subr.mxu0 0.0
      %3070 = vmatpush1.msra.mxu0 %v244
      %3071 = vmatprep.subr.mxu0 0.0
      %3072 = vmatpush1.msra.mxu0 0.0
      %3073 = vmatprep.subr.mxu0 0.0
      %3074 = vmatpush1.msra.mxu0 0.0
      %3075 = vmatprep.subr.mxu0 0.0
      %3076 = vmatpush1.msra.mxu0 0.0
      %3077 = vmatprep.subr.mxu0 0.0
      %3078 = vmatpush1.msra.mxu0 0.0
      %3079 = vmatprep.subr.mxu0 0.0
      %3080 = vmatpush1.msra.mxu0 0.0
      %3081 = vmatprep.subr.mxu0 0.0
      %3082 = vmatpush1.msra.mxu0 0.0
      %3083 = vmatprep.subr.mxu0 0.0
      %3084 = vmatpush1.msra.mxu0 0.0
      %3085 = vmatprep.subr.mxu0 0.0
      %3086 = vmatpush1.msra.mxu0 0.0
      %3087 = vmatprep.subr.mxu0 0.0
      %3088 = vmatpush1.msra.mxu0 0.0
      %3089 = vmatprep.subr.mxu0 0.0
      %3090 = vmatpush1.msra.mxu0 0.0
      %3091 = vmatprep.subr.mxu0 0.0
      %3092 = vmatpush1.msra.mxu0 0.0
      %3093 = vmatprep.subr.mxu0 0.0
      %3094 = vmatpush1.msra.mxu0 0.0
      %3095 = vmatprep.subr.mxu0 0.0
      %3096 = vmatpush1.msra.mxu0 0.0
      %3097 = vmatprep.subr.mxu0 0.0
      %3098 = vmatpush1.msra.mxu0 0.0
      %3099 = vmatprep.subr.mxu0 0.0
      %3100 = vmatpush1.msra.mxu0 0.0
      %3101 = vmatprep.subr.mxu0 0.0
      %3102 = vmatpush1.msra.mxu0 0.0
      %3103 = vmatprep.subr.mxu0 0.0
      %3104 = vmatpush1.msra.mxu0 0.0
      %3105 = vmatprep.subr.mxu0 0.0
      %3106 = vmatpush1.msra.mxu0 0.0
      %3107 = vmatprep.subr.mxu0 0.0
      %3108 = vmatpush1.msra.mxu0 0.0
      %3109 = vmatprep.subr.mxu0 0.0
      %3110 = vmatpush1.msra.mxu0 0.0
      %3111 = vmatprep.subr.mxu0 0.0
      %3112 = vmatpush1.msra.mxu0 0.0
      %3113 = vmatprep.subr.mxu0 0.0
      %3114 = vmatpush1.msra.mxu0 0.0
      %3115 = vmatprep.subr.mxu0 0.0
      %3116 = vmatpush1.msra.mxu0 0.0
      %3117 = vmatprep.subr.mxu0 0.0
      %3118 = vmatpush1.msra.mxu0 0.0
      %3119 = vmatprep.subr.mxu0 0.0
      %3120 = vmatpush1.msra.mxu0 0.0
      %3121 = vmatprep.subr.mxu0 0.0
      %3122 = vmatpush1.msra.mxu0 0.0
      %3123 = vmatprep.subr.mxu0 0.0
      %3124 = vmatpush1.msra.mxu0 0.0
      %3125 = vmatprep.subr.mxu0 0.0
      %3126 = vmatpush1.msra.mxu0 0.0
      %3127 = vmatprep.subr.mxu0 0.0
      %3128 = vmatpush1.msra.mxu0 0.0
      %3129 = vmatprep.subr.mxu0 0.0
      %3130 = vmatpush1.msra.mxu0 0.0
      %3131 = vmatprep.mubr.f32.mxu0 0.0
      %3132 = vmatmul.mubr.f32.gmra.mrb[0].mxu0 %v2921
      %v3133 = vpop.f32.mrb[0].mxu0
      %v3134 = vadd.f32 0.0, %v3133
      %v3135 = vpop.f32.mrb[0].mxu0
      %3136 = vdwg.mxu0
      %v3138 = vsel %vm394, %v3134, 0
      %3140 = vmatprep.subr.mxu0 0.0
      %3141 = vmatpush1.msra.mxu0 %v3138
      %3142 = vmatprep.subr.mxu0 0.0
      %3143 = vmatpush1.msra.mxu0 0.0
      %3144 = vmatprep.subr.mxu0 0.0
      %3145 = vmatpush1.msra.mxu0 0.0
      %3146 = vmatprep.subr.mxu0 0.0
      %3147 = vmatpush1.msra.mxu0 0.0
      %3148 = vmatprep.subr.mxu0 0.0
      %3149 = vmatpush1.msra.mxu0 0.0
      %3150 = vmatprep.subr.mxu0 0.0
      %3151 = vmatpush1.msra.mxu0 0.0
      %3152 = vmatprep.subr.mxu0 0.0
      %3153 = vmatpush1.msra.mxu0 0.0
      %3154 = vmatprep.subr.mxu0 0.0
      %3155 = vmatpush1.msra.mxu0 0.0
      %3156 = vmatprep.subr.mxu0 0.0
      %3157 = vmatpush1.msra.mxu0 0.0
      %3158 = vmatprep.subr.mxu0 0.0
      %3159 = vmatpush1.msra.mxu0 0.0
      %3160 = vmatprep.subr.mxu0 0.0
      %3161 = vmatpush1.msra.mxu0 0.0
      %3162 = vmatprep.subr.mxu0 0.0
      %3163 = vmatpush1.msra.mxu0 0.0
      %3164 = vmatprep.subr.mxu0 0.0
      %3165 = vmatpush1.msra.mxu0 0.0
      %3166 = vmatprep.subr.mxu0 0.0
      %3167 = vmatpush1.msra.mxu0 0.0
      %3168 = vmatprep.subr.mxu0 0.0
      %3169 = vmatpush1.msra.mxu0 0.0
      %3170 = vmatprep.subr.mxu0 0.0
      %3171 = vmatpush1.msra.mxu0 0.0
      %3172 = vmatprep.subr.mxu0 0.0
      %3173 = vmatpush1.msra.mxu0 0.0
      %3174 = vmatprep.subr.mxu0 0.0
      %3175 = vmatpush1.msra.mxu0 0.0
      %3176 = vmatprep.subr.mxu0 0.0
      %3177 = vmatpush1.msra.mxu0 0.0
      %3178 = vmatprep.subr.mxu0 0.0
      %3179 = vmatpush1.msra.mxu0 0.0
      %3180 = vmatprep.subr.mxu0 0.0
      %3181 = vmatpush1.msra.mxu0 0.0
      %3182 = vmatprep.subr.mxu0 0.0
      %3183 = vmatpush1.msra.mxu0 0.0
      %3184 = vmatprep.subr.mxu0 0.0
      %3185 = vmatpush1.msra.mxu0 0.0
      %3186 = vmatprep.subr.mxu0 0.0
      %3187 = vmatpush1.msra.mxu0 0.0
      %3188 = vmatprep.subr.mxu0 0.0
      %3189 = vmatpush1.msra.mxu0 0.0
      %3190 = vmatprep.subr.mxu0 0.0
      %3191 = vmatpush1.msra.mxu0 0.0
      %3192 = vmatprep.subr.mxu0 0.0
      %3193 = vmatpush1.msra.mxu0 0.0
      %3194 = vmatprep.subr.mxu0 0.0
      %3195 = vmatpush1.msra.mxu0 0.0
      %3196 = vmatprep.subr.mxu0 0.0
      %3197 = vmatpush1.msra.mxu0 0.0
      %3198 = vmatprep.subr.mxu0 0.0
      %3199 = vmatpush1.msra.mxu0 0.0
      %3200 = vmatprep.subr.mxu0 0.0
      %3201 = vmatpush1.msra.mxu0 0.0
      %3202 = vmatprep.subr.mxu0 0.0
      %3203 = vmatpush1.msra.mxu0 0.0
      %3204 = vmatprep.mubr.f32.mxu0 0.0
      %3205 = vmatmul.mubr.f32.gmra.mrb[0].mxu0 %v766
      %v3206 = vpop.f32.mrb[0].mxu0
      %v3207 = vadd.f32 0.0, %v3206
      %v3208 = vpop.f32.mrb[0].mxu0
      %3209 = vdwg.mxu0
      %v3210 = vadd.f32 %v3066, %v3207
      %v3211 = vadd.f32 %v3210, %v845
      %3213 = vrot.lane.b32.xlu0 %v3211, 32
      %v3214 = vpop.permute.xlu0 %3213
      %vm3216 = vcmask 326912
      %3217 = vst.msk [vmem:[%s231] sm:$0xff] %vm3216, %v3214
      %v3218 = vld [vmem:[%s223 + $0x4] sm:$0xf]
      %3220 = vrot.lane.b32.xlu0 %v3218, 96
      %v3221 = vpop.permute.xlu0 %3220
      %v3222 = vsel %vm246, %v3221, 0
      %3224 = vmatprep.subr.mxu0 0.0
      %3225 = vmatpush1.msra.mxu0 %v240
      %3226 = vmatprep.subr.mxu0 0.0
      %3227 = vmatpush1.msra.mxu0 %v241
      %3228 = vmatprep.subr.mxu0 0.0
      %3229 = vmatpush1.msra.mxu0 0.0
      %3230 = vmatprep.subr.mxu0 0.0
      %3231 = vmatpush1.msra.mxu0 0.0
      %3232 = vmatprep.subr.mxu0 0.0
      %3233 = vmatpush1.msra.mxu0 0.0
      %3234 = vmatprep.subr.mxu0 0.0
      %3235 = vmatpush1.msra.mxu0 0.0
      %3236 = vmatprep.subr.mxu0 0.0
      %3237 = vmatpush1.msra.mxu0 0.0
      %3238 = vmatprep.subr.mxu0 0.0
      %3239 = vmatpush1.msra.mxu0 0.0
      %3240 = vmatprep.subr.mxu0 0.0
      %3241 = vmatpush1.msra.mxu0 0.0
      %3242 = vmatprep.subr.mxu0 0.0
      %3243 = vmatpush1.msra.mxu0 0.0
      %3244 = vmatprep.subr.mxu0 0.0
      %3245 = vmatpush1.msra.mxu0 0.0
      %3246 = vmatprep.subr.mxu0 0.0
      %3247 = vmatpush1.msra.mxu0 0.0
      %3248 = vmatprep.subr.mxu0 0.0
      %3249 = vmatpush1.msra.mxu0 0.0
      %3250 = vmatprep.subr.mxu0 0.0
      %3251 = vmatpush1.msra.mxu0 0.0
      %3252 = vmatprep.subr.mxu0 0.0
      %3253 = vmatpush1.msra.mxu0 0.0
      %3254 = vmatprep.subr.mxu0 0.0
      %3255 = vmatpush1.msra.mxu0 0.0
      %3256 = vmatprep.subr.mxu0 0.0
      %3257 = vmatpush1.msra.mxu0 0.0
      %3258 = vmatprep.subr.mxu0 0.0
      %3259 = vmatpush1.msra.mxu0 0.0
      %3260 = vmatprep.subr.mxu0 0.0
      %3261 = vmatpush1.msra.mxu0 0.0
      %3262 = vmatprep.subr.mxu0 0.0
      %3263 = vmatpush1.msra.mxu0 0.0
      %3264 = vmatprep.subr.mxu0 0.0
      %3265 = vmatpush1.msra.mxu0 0.0
      %3266 = vmatprep.subr.mxu0 0.0
      %3267 = vmatpush1.msra.mxu0 0.0
      %3268 = vmatprep.subr.mxu0 0.0
      %3269 = vmatpush1.msra.mxu0 0.0
      %3270 = vmatprep.subr.mxu0 0.0
      %3271 = vmatpush1.msra.mxu0 0.0
      %3272 = vmatprep.subr.mxu0 0.0
      %3273 = vmatpush1.msra.mxu0 0.0
      %3274 = vmatprep.subr.mxu0 0.0
      %3275 = vmatpush1.msra.mxu0 0.0
      %3276 = vmatprep.subr.mxu0 0.0
      %3277 = vmatpush1.msra.mxu0 0.0
      %3278 = vmatprep.subr.mxu0 0.0
      %3279 = vmatpush1.msra.mxu0 0.0
      %3280 = vmatprep.subr.mxu0 0.0
      %3281 = vmatpush1.msra.mxu0 0.0
      %3282 = vmatprep.subr.mxu0 0.0
      %3283 = vmatpush1.msra.mxu0 0.0
      %3284 = vmatprep.subr.mxu0 0.0
      %3285 = vmatpush1.msra.mxu0 0.0
      %3286 = vmatprep.subr.mxu0 0.0
      %3287 = vmatpush1.msra.mxu0 0.0
      %3288 = vmatprep.mubr.f32.mxu0 0.0
      %3289 = vmatmul.mubr.f32.gmra.mrb[0].mxu0 %v3222
      %v3290 = vpop.f32.mrb[0].mxu0
      %v3291 = vadd.f32 0.0, %v3290
      %v3292 = vpop.f32.mrb[0].mxu0
      %3293 = vdwg.mxu0
      %3294 = vmatprep.subr.mxu0 0.0
      %3295 = vmatpush1.msra.mxu0 %v243
      %3296 = vmatprep.subr.mxu0 0.0
      %3297 = vmatpush1.msra.mxu0 %v244
      %3298 = vmatprep.subr.mxu0 0.0
      %3299 = vmatpush1.msra.mxu0 0.0
      %3300 = vmatprep.subr.mxu0 0.0
      %3301 = vmatpush1.msra.mxu0 0.0
      %3302 = vmatprep.subr.mxu0 0.0
      %3303 = vmatpush1.msra.mxu0 0.0
      %3304 = vmatprep.subr.mxu0 0.0
      %3305 = vmatpush1.msra.mxu0 0.0
      %3306 = vmatprep.subr.mxu0 0.0
      %3307 = vmatpush1.msra.mxu0 0.0
      %3308 = vmatprep.subr.mxu0 0.0
      %3309 = vmatpush1.msra.mxu0 0.0
      %3310 = vmatprep.subr.mxu0 0.0
      %3311 = vmatpush1.msra.mxu0 0.0
      %3312 = vmatprep.subr.mxu0 0.0
      %3313 = vmatpush1.msra.mxu0 0.0
      %3314 = vmatprep.subr.mxu0 0.0
      %3315 = vmatpush1.msra.mxu0 0.0
      %3316 = vmatprep.subr.mxu0 0.0
      %3317 = vmatpush1.msra.mxu0 0.0
      %3318 = vmatprep.subr.mxu0 0.0
      %3319 = vmatpush1.msra.mxu0 0.0
      %3320 = vmatprep.subr.mxu0 0.0
      %3321 = vmatpush1.msra.mxu0 0.0
      %3322 = vmatprep.subr.mxu0 0.0
      %3323 = vmatpush1.msra.mxu0 0.0
      %3324 = vmatprep.subr.mxu0 0.0
      %3325 = vmatpush1.msra.mxu0 0.0
      %3326 = vmatprep.subr.mxu0 0.0
      %3327 = vmatpush1.msra.mxu0 0.0
      %3328 = vmatprep.subr.mxu0 0.0
      %3329 = vmatpush1.msra.mxu0 0.0
      %3330 = vmatprep.subr.mxu0 0.0
      %3331 = vmatpush1.msra.mxu0 0.0
      %3332 = vmatprep.subr.mxu0 0.0
      %3333 = vmatpush1.msra.mxu0 0.0
      %3334 = vmatprep.subr.mxu0 0.0
      %3335 = vmatpush1.msra.mxu0 0.0
      %3336 = vmatprep.subr.mxu0 0.0
      %3337 = vmatpush1.msra.mxu0 0.0
      %3338 = vmatprep.subr.mxu0 0.0
      %3339 = vmatpush1.msra.mxu0 0.0
      %3340 = vmatprep.subr.mxu0 0.0
      %3341 = vmatpush1.msra.mxu0 0.0
      %3342 = vmatprep.subr.mxu0 0.0
      %3343 = vmatpush1.msra.mxu0 0.0
      %3344 = vmatprep.subr.mxu0 0.0
      %3345 = vmatpush1.msra.mxu0 0.0
      %3346 = vmatprep.subr.mxu0 0.0
      %3347 = vmatpush1.msra.mxu0 0.0
      %3348 = vmatprep.subr.mxu0 0.0
      %3349 = vmatpush1.msra.mxu0 0.0
      %3350 = vmatprep.subr.mxu0 0.0
      %3351 = vmatpush1.msra.mxu0 0.0
      %3352 = vmatprep.subr.mxu0 0.0
      %3353 = vmatpush1.msra.mxu0 0.0
      %3354 = vmatprep.subr.mxu0 0.0
      %3355 = vmatpush1.msra.mxu0 0.0
      %3356 = vmatprep.subr.mxu0 0.0
      %3357 = vmatpush1.msra.mxu0 0.0
      %3358 = vmatprep.mubr.f32.mxu0 0.0
      %3359 = vmatmul.mubr.f32.gmra.mrb[0].mxu0 %v3222
      %v3360 = vpop.f32.mrb[0].mxu0
      %v3361 = vadd.f32 0.0, %v3360
      %v3362 = vpop.f32.mrb[0].mxu0
      %3363 = vdwg.mxu0
      %v3365 = vsel %vm394, %v3361, 0
      %3367 = vmatprep.subr.mxu0 0.0
      %3368 = vmatpush1.msra.mxu0 %v3365
      %3369 = vmatprep.subr.mxu0 0.0
      %3370 = vmatpush1.msra.mxu0 0.0
      %3371 = vmatprep.subr.mxu0 0.0
      %3372 = vmatpush1.msra.mxu0 0.0
      %3373 = vmatprep.subr.mxu0 0.0
      %3374 = vmatpush1.msra.mxu0 0.0
      %3375 = vmatprep.subr.mxu0 0.0
      %3376 = vmatpush1.msra.mxu0 0.0
      %3377 = vmatprep.subr.mxu0 0.0
      %3378 = vmatpush1.msra.mxu0 0.0
      %3379 = vmatprep.subr.mxu0 0.0
      %3380 = vmatpush1.msra.mxu0 0.0
      %3381 = vmatprep.subr.mxu0 0.0
      %3382 = vmatpush1.msra.mxu0 0.0
      %3383 = vmatprep.subr.mxu0 0.0
      %3384 = vmatpush1.msra.mxu0 0.0
      %3385 = vmatprep.subr.mxu0 0.0
      %3386 = vmatpush1.msra.mxu0 0.0
      %3387 = vmatprep.subr.mxu0 0.0
      %3388 = vmatpush1.msra.mxu0 0.0
      %3389 = vmatprep.subr.mxu0 0.0
      %3390 = vmatpush1.msra.mxu0 0.0
      %3391 = vmatprep.subr.mxu0 0.0
      %3392 = vmatpush1.msra.mxu0 0.0
      %3393 = vmatprep.subr.mxu0 0.0
      %3394 = vmatpush1.msra.mxu0 0.0
      %3395 = vmatprep.subr.mxu0 0.0
      %3396 = vmatpush1.msra.mxu0 0.0
      %3397 = vmatprep.subr.mxu0 0.0
      %3398 = vmatpush1.msra.mxu0 0.0
      %3399 = vmatprep.subr.mxu0 0.0
      %3400 = vmatpush1.msra.mxu0 0.0
      %3401 = vmatprep.subr.mxu0 0.0
      %3402 = vmatpush1.msra.mxu0 0.0
      %3403 = vmatprep.subr.mxu0 0.0
      %3404 = vmatpush1.msra.mxu0 0.0
      %3405 = vmatprep.subr.mxu0 0.0
      %3406 = vmatpush1.msra.mxu0 0.0
      %3407 = vmatprep.subr.mxu0 0.0
      %3408 = vmatpush1.msra.mxu0 0.0
      %3409 = vmatprep.subr.mxu0 0.0
      %3410 = vmatpush1.msra.mxu0 0.0
      %3411 = vmatprep.subr.mxu0 0.0
      %3412 = vmatpush1.msra.mxu0 0.0
      %3413 = vmatprep.subr.mxu0 0.0
      %3414 = vmatpush1.msra.mxu0 0.0
      %3415 = vmatprep.subr.mxu0 0.0
      %3416 = vmatpush1.msra.mxu0 0.0
      %3417 = vmatprep.subr.mxu0 0.0
      %3418 = vmatpush1.msra.mxu0 0.0
      %3419 = vmatprep.subr.mxu0 0.0
      %3420 = vmatpush1.msra.mxu0 0.0
      %3421 = vmatprep.subr.mxu0 0.0
      %3422 = vmatpush1.msra.mxu0 0.0
      %3423 = vmatprep.subr.mxu0 0.0
      %3424 = vmatpush1.msra.mxu0 0.0
      %3425 = vmatprep.subr.mxu0 0.0
      %3426 = vmatpush1.msra.mxu0 0.0
      %3427 = vmatprep.subr.mxu0 0.0
      %3428 = vmatpush1.msra.mxu0 0.0
      %3429 = vmatprep.subr.mxu0 0.0
      %3430 = vmatpush1.msra.mxu0 0.0
      %3431 = vmatprep.mubr.f32.mxu0 0.0
      %3432 = vmatmul.mubr.f32.gmra.mrb[0].mxu0 %v392
      %v3433 = vpop.f32.mrb[0].mxu0
      %v3434 = vadd.f32 0.0, %v3433
      %v3435 = vpop.f32.mrb[0].mxu0
      %3436 = vdwg.mxu0
      %v3438 = vsel %vm394, %v3291, 0
      %3440 = vmatprep.subr.mxu0 0.0
      %3441 = vmatpush1.msra.mxu0 %v3438
      %3442 = vmatprep.subr.mxu0 0.0
      %3443 = vmatpush1.msra.mxu0 0.0
      %3444 = vmatprep.subr.mxu0 0.0
      %3445 = vmatpush1.msra.mxu0 0.0
      %3446 = vmatprep.subr.mxu0 0.0
      %3447 = vmatpush1.msra.mxu0 0.0
      %3448 = vmatprep.subr.mxu0 0.0
      %3449 = vmatpush1.msra.mxu0 0.0
      %3450 = vmatprep.subr.mxu0 0.0
      %3451 = vmatpush1.msra.mxu0 0.0
      %3452 = vmatprep.subr.mxu0 0.0
      %3453 = vmatpush1.msra.mxu0 0.0
      %3454 = vmatprep.subr.mxu0 0.0
      %3455 = vmatpush1.msra.mxu0 0.0
      %3456 = vmatprep.subr.mxu0 0.0
      %3457 = vmatpush1.msra.mxu0 0.0
      %3458 = vmatprep.subr.mxu0 0.0
      %3459 = vmatpush1.msra.mxu0 0.0
      %3460 = vmatprep.subr.mxu0 0.0
      %3461 = vmatpush1.msra.mxu0 0.0
      %3462 = vmatprep.subr.mxu0 0.0
      %3463 = vmatpush1.msra.mxu0 0.0
      %3464 = vmatprep.subr.mxu0 0.0
      %3465 = vmatpush1.msra.mxu0 0.0
      %3466 = vmatprep.subr.mxu0 0.0
      %3467 = vmatpush1.msra.mxu0 0.0
      %3468 = vmatprep.subr.mxu0 0.0
      %3469 = vmatpush1.msra.mxu0 0.0
      %3470 = vmatprep.subr.mxu0 0.0
      %3471 = vmatpush1.msra.mxu0 0.0
      %3472 = vmatprep.subr.mxu0 0.0
      %3473 = vmatpush1.msra.mxu0 0.0
      %3474 = vmatprep.subr.mxu0 0.0
      %3475 = vmatpush1.msra.mxu0 0.0
      %3476 = vmatprep.subr.mxu0 0.0
      %3477 = vmatpush1.msra.mxu0 0.0
      %3478 = vmatprep.subr.mxu0 0.0
      %3479 = vmatpush1.msra.mxu0 0.0
      %3480 = vmatprep.subr.mxu0 0.0
      %3481 = vmatpush1.msra.mxu0 0.0
      %3482 = vmatprep.subr.mxu0 0.0
      %3483 = vmatpush1.msra.mxu0 0.0
      %3484 = vmatprep.subr.mxu0 0.0
      %3485 = vmatpush1.msra.mxu0 0.0
      %3486 = vmatprep.subr.mxu0 0.0
      %3487 = vmatpush1.msra.mxu0 0.0
      %3488 = vmatprep.subr.mxu0 0.0
      %3489 = vmatpush1.msra.mxu0 0.0
      %3490 = vmatprep.subr.mxu0 0.0
      %3491 = vmatpush1.msra.mxu0 0.0
      %3492 = vmatprep.subr.mxu0 0.0
      %3493 = vmatpush1.msra.mxu0 0.0
      %3494 = vmatprep.subr.mxu0 0.0
      %3495 = vmatpush1.msra.mxu0 0.0
      %3496 = vmatprep.subr.mxu0 0.0
      %3497 = vmatpush1.msra.mxu0 0.0
      %3498 = vmatprep.subr.mxu0 0.0
      %3499 = vmatpush1.msra.mxu0 0.0
      %3500 = vmatprep.subr.mxu0 0.0
      %3501 = vmatpush1.msra.mxu0 0.0
      %3502 = vmatprep.subr.mxu0 0.0
      %3503 = vmatpush1.msra.mxu0 0.0
      %3504 = vmatprep.mubr.f32.mxu0 0.0
      %3505 = vmatmul.mubr.f32.gmra.mrb[0].mxu0 %v469
      %v3506 = vpop.f32.mrb[0].mxu0
      %v3507 = vadd.f32 %v3434, %v3506
      %v3508 = vpop.f32.mrb[0].mxu0
      %3509 = vdwg.mxu0
      %v3510 = vld [vmem:[%s223 + $0x4] sm:$0xf]
      %3512 = vrot.lane.b32.xlu0 %v3510, 80
      %v3513 = vpop.permute.xlu0 %3512
      %v3514 = vsel %vm246, %v3513, 0
      %3516 = vmatprep.subr.mxu0 0.0
      %3517 = vmatpush1.msra.mxu0 %v240
      %3518 = vmatprep.subr.mxu0 0.0
      %3519 = vmatpush1.msra.mxu0 %v241
      %3520 = vmatprep.subr.mxu0 0.0
      %3521 = vmatpush1.msra.mxu0 0.0
      %3522 = vmatprep.subr.mxu0 0.0
      %3523 = vmatpush1.msra.mxu0 0.0
      %3524 = vmatprep.subr.mxu0 0.0
      %3525 = vmatpush1.msra.mxu0 0.0
      %3526 = vmatprep.subr.mxu0 0.0
      %3527 = vmatpush1.msra.mxu0 0.0
      %3528 = vmatprep.subr.mxu0 0.0
      %3529 = vmatpush1.msra.mxu0 0.0
      %3530 = vmatprep.subr.mxu0 0.0
      %3531 = vmatpush1.msra.mxu0 0.0
      %3532 = vmatprep.subr.mxu0 0.0
      %3533 = vmatpush1.msra.mxu0 0.0
      %3534 = vmatprep.subr.mxu0 0.0
      %3535 = vmatpush1.msra.mxu0 0.0
      %3536 = vmatprep.subr.mxu0 0.0
      %3537 = vmatpush1.msra.mxu0 0.0
      %3538 = vmatprep.subr.mxu0 0.0
      %3539 = vmatpush1.msra.mxu0 0.0
      %3540 = vmatprep.subr.mxu0 0.0
      %3541 = vmatpush1.msra.mxu0 0.0
      %3542 = vmatprep.subr.mxu0 0.0
      %3543 = vmatpush1.msra.mxu0 0.0
      %3544 = vmatprep.subr.mxu0 0.0
      %3545 = vmatpush1.msra.mxu0 0.0
      %3546 = vmatprep.subr.mxu0 0.0
      %3547 = vmatpush1.msra.mxu0 0.0
      %3548 = vmatprep.subr.mxu0 0.0
      %3549 = vmatpush1.msra.mxu0 0.0
      %3550 = vmatprep.subr.mxu0 0.0
      %3551 = vmatpush1.msra.mxu0 0.0
      %3552 = vmatprep.subr.mxu0 0.0
      %3553 = vmatpush1.msra.mxu0 0.0
      %3554 = vmatprep.subr.mxu0 0.0
      %3555 = vmatpush1.msra.mxu0 0.0
      %3556 = vmatprep.subr.mxu0 0.0
      %3557 = vmatpush1.msra.mxu0 0.0
      %3558 = vmatprep.subr.mxu0 0.0
      %3559 = vmatpush1.msra.mxu0 0.0
      %3560 = vmatprep.subr.mxu0 0.0
      %3561 = vmatpush1.msra.mxu0 0.0
      %3562 = vmatprep.subr.mxu0 0.0
      %3563 = vmatpush1.msra.mxu0 0.0
      %3564 = vmatprep.subr.mxu0 0.0
      %3565 = vmatpush1.msra.mxu0 0.0
      %3566 = vmatprep.subr.mxu0 0.0
      %3567 = vmatpush1.msra.mxu0 0.0
      %3568 = vmatprep.subr.mxu0 0.0
      %3569 = vmatpush1.msra.mxu0 0.0
      %3570 = vmatprep.subr.mxu0 0.0
      %3571 = vmatpush1.msra.mxu0 0.0
      %3572 = vmatprep.subr.mxu0 0.0
      %3573 = vmatpush1.msra.mxu0 0.0
      %3574 = vmatprep.subr.mxu0 0.0
      %3575 = vmatpush1.msra.mxu0 0.0
      %3576 = vmatprep.subr.mxu0 0.0
      %3577 = vmatpush1.msra.mxu0 0.0
      %3578 = vmatprep.subr.mxu0 0.0
      %3579 = vmatpush1.msra.mxu0 0.0
      %3580 = vmatprep.mubr.f32.mxu0 0.0
      %3581 = vmatmul.mubr.f32.gmra.mrb[0].mxu0 %v3514
      %v3582 = vpop.f32.mrb[0].mxu0
      %v3583 = vadd.f32 0.0, %v3582
      %v3584 = vpop.f32.mrb[0].mxu0
      %3585 = vdwg.mxu0
      %v3587 = vsel %vm394, %v3583, 0
      %3589 = vmatprep.subr.mxu0 0.0
      %3590 = vmatpush1.msra.mxu0 %v3587
      %3591 = vmatprep.subr.mxu0 0.0
      %3592 = vmatpush1.msra.mxu0 0.0
      %3593 = vmatprep.subr.mxu0 0.0
      %3594 = vmatpush1.msra.mxu0 0.0
      %3595 = vmatprep.subr.mxu0 0.0
      %3596 = vmatpush1.msra.mxu0 0.0
      %3597 = vmatprep.subr.mxu0 0.0
      %3598 = vmatpush1.msra.mxu0 0.0
      %3599 = vmatprep.subr.mxu0 0.0
      %3600 = vmatpush1.msra.mxu0 0.0
      %3601 = vmatprep.subr.mxu0 0.0
      %3602 = vmatpush1.msra.mxu0 0.0
      %3603 = vmatprep.subr.mxu0 0.0
      %3604 = vmatpush1.msra.mxu0 0.0
      %3605 = vmatprep.subr.mxu0 0.0
      %3606 = vmatpush1.msra.mxu0 0.0
      %3607 = vmatprep.subr.mxu0 0.0
      %3608 = vmatpush1.msra.mxu0 0.0
      %3609 = vmatprep.subr.mxu0 0.0
      %3610 = vmatpush1.msra.mxu0 0.0
      %3611 = vmatprep.subr.mxu0 0.0
      %3612 = vmatpush1.msra.mxu0 0.0
      %3613 = vmatprep.subr.mxu0 0.0
      %3614 = vmatpush1.msra.mxu0 0.0
      %3615 = vmatprep.subr.mxu0 0.0
      %3616 = vmatpush1.msra.mxu0 0.0
      %3617 = vmatprep.subr.mxu0 0.0
      %3618 = vmatpush1.msra.mxu0 0.0
      %3619 = vmatprep.subr.mxu0 0.0
      %3620 = vmatpush1.msra.mxu0 0.0
      %3621 = vmatprep.subr.mxu0 0.0
      %3622 = vmatpush1.msra.mxu0 0.0
      %3623 = vmatprep.subr.mxu0 0.0
      %3624 = vmatpush1.msra.mxu0 0.0
      %3625 = vmatprep.subr.mxu0 0.0
      %3626 = vmatpush1.msra.mxu0 0.0
      %3627 = vmatprep.subr.mxu0 0.0
      %3628 = vmatpush1.msra.mxu0 0.0
      %3629 = vmatprep.subr.mxu0 0.0
      %3630 = vmatpush1.msra.mxu0 0.0
      %3631 = vmatprep.subr.mxu0 0.0
      %3632 = vmatpush1.msra.mxu0 0.0
      %3633 = vmatprep.subr.mxu0 0.0
      %3634 = vmatpush1.msra.mxu0 0.0
      %3635 = vmatprep.subr.mxu0 0.0
      %3636 = vmatpush1.msra.mxu0 0.0
      %3637 = vmatprep.subr.mxu0 0.0
      %3638 = vmatpush1.msra.mxu0 0.0
      %3639 = vmatprep.subr.mxu0 0.0
      %3640 = vmatpush1.msra.mxu0 0.0
      %3641 = vmatprep.subr.mxu0 0.0
      %3642 = vmatpush1.msra.mxu0 0.0
      %3643 = vmatprep.subr.mxu0 0.0
      %3644 = vmatpush1.msra.mxu0 0.0
      %3645 = vmatprep.subr.mxu0 0.0
      %3646 = vmatpush1.msra.mxu0 0.0
      %3647 = vmatprep.subr.mxu0 0.0
      %3648 = vmatpush1.msra.mxu0 0.0
      %3649 = vmatprep.subr.mxu0 0.0
      %3650 = vmatpush1.msra.mxu0 0.0
      %3651 = vmatprep.subr.mxu0 0.0
      %3652 = vmatpush1.msra.mxu0 0.0
      %3653 = vmatprep.mubr.f32.mxu0 0.0
      %3654 = vmatmul.mubr.f32.gmra.mrb[0].mxu0 %v619
      %v3655 = vpop.f32.mrb[0].mxu0
      %v3656 = vadd.f32 0.0, %v3655
      %v3657 = vpop.f32.mrb[0].mxu0
      %3658 = vdwg.mxu0
      %v3659 = vadd.f32 %v3507, %v3656
      %3660 = vmatprep.subr.mxu0 0.0
      %3661 = vmatpush1.msra.mxu0 %v243
      %3662 = vmatprep.subr.mxu0 0.0
      %3663 = vmatpush1.msra.mxu0 %v244
      %3664 = vmatprep.subr.mxu0 0.0
      %3665 = vmatpush1.msra.mxu0 0.0
      %3666 = vmatprep.subr.mxu0 0.0
      %3667 = vmatpush1.msra.mxu0 0.0
      %3668 = vmatprep.subr.mxu0 0.0
      %3669 = vmatpush1.msra.mxu0 0.0
      %3670 = vmatprep.subr.mxu0 0.0
      %3671 = vmatpush1.msra.mxu0 0.0
      %3672 = vmatprep.subr.mxu0 0.0
      %3673 = vmatpush1.msra.mxu0 0.0
      %3674 = vmatprep.subr.mxu0 0.0
      %3675 = vmatpush1.msra.mxu0 0.0
      %3676 = vmatprep.subr.mxu0 0.0
      %3677 = vmatpush1.msra.mxu0 0.0
      %3678 = vmatprep.subr.mxu0 0.0
      %3679 = vmatpush1.msra.mxu0 0.0
      %3680 = vmatprep.subr.mxu0 0.0
      %3681 = vmatpush1.msra.mxu0 0.0
      %3682 = vmatprep.subr.mxu0 0.0
      %3683 = vmatpush1.msra.mxu0 0.0
      %3684 = vmatprep.subr.mxu0 0.0
      %3685 = vmatpush1.msra.mxu0 0.0
      %3686 = vmatprep.subr.mxu0 0.0
      %3687 = vmatpush1.msra.mxu0 0.0
      %3688 = vmatprep.subr.mxu0 0.0
      %3689 = vmatpush1.msra.mxu0 0.0
      %3690 = vmatprep.subr.mxu0 0.0
      %3691 = vmatpush1.msra.mxu0 0.0
      %3692 = vmatprep.subr.mxu0 0.0
      %3693 = vmatpush1.msra.mxu0 0.0
      %3694 = vmatprep.subr.mxu0 0.0
      %3695 = vmatpush1.msra.mxu0 0.0
      %3696 = vmatprep.subr.mxu0 0.0
      %3697 = vmatpush1.msra.mxu0 0.0
      %3698 = vmatprep.subr.mxu0 0.0
      %3699 = vmatpush1.msra.mxu0 0.0
      %3700 = vmatprep.subr.mxu0 0.0
      %3701 = vmatpush1.msra.mxu0 0.0
      %3702 = vmatprep.subr.mxu0 0.0
      %3703 = vmatpush1.msra.mxu0 0.0
      %3704 = vmatprep.subr.mxu0 0.0
      %3705 = vmatpush1.msra.mxu0 0.0
      %3706 = vmatprep.subr.mxu0 0.0
      %3707 = vmatpush1.msra.mxu0 0.0
      %3708 = vmatprep.subr.mxu0 0.0
      %3709 = vmatpush1.msra.mxu0 0.0
      %3710 = vmatprep.subr.mxu0 0.0
      %3711 = vmatpush1.msra.mxu0 0.0
      %3712 = vmatprep.subr.mxu0 0.0
      %3713 = vmatpush1.msra.mxu0 0.0
      %3714 = vmatprep.subr.mxu0 0.0
      %3715 = vmatpush1.msra.mxu0 0.0
      %3716 = vmatprep.subr.mxu0 0.0
      %3717 = vmatpush1.msra.mxu0 0.0
      %3718 = vmatprep.subr.mxu0 0.0
      %3719 = vmatpush1.msra.mxu0 0.0
      %3720 = vmatprep.subr.mxu0 0.0
      %3721 = vmatpush1.msra.mxu0 0.0
      %3722 = vmatprep.subr.mxu0 0.0
      %3723 = vmatpush1.msra.mxu0 0.0
      %3724 = vmatprep.mubr.f32.mxu0 0.0
      %3725 = vmatmul.mubr.f32.gmra.mrb[0].mxu0 %v3514
      %v3726 = vpop.f32.mrb[0].mxu0
      %v3727 = vadd.f32 0.0, %v3726
      %v3728 = vpop.f32.mrb[0].mxu0
      %3729 = vdwg.mxu0
      %v3731 = vsel %vm394, %v3727, 0
      %3733 = vmatprep.subr.mxu0 0.0
      %3734 = vmatpush1.msra.mxu0 %v3731
      %3735 = vmatprep.subr.mxu0 0.0
      %3736 = vmatpush1.msra.mxu0 0.0
      %3737 = vmatprep.subr.mxu0 0.0
      %3738 = vmatpush1.msra.mxu0 0.0
      %3739 = vmatprep.subr.mxu0 0.0
      %3740 = vmatpush1.msra.mxu0 0.0
      %3741 = vmatprep.subr.mxu0 0.0
      %3742 = vmatpush1.msra.mxu0 0.0
      %3743 = vmatprep.subr.mxu0 0.0
      %3744 = vmatpush1.msra.mxu0 0.0
      %3745 = vmatprep.subr.mxu0 0.0
      %3746 = vmatpush1.msra.mxu0 0.0
      %3747 = vmatprep.subr.mxu0 0.0
      %3748 = vmatpush1.msra.mxu0 0.0
      %3749 = vmatprep.subr.mxu0 0.0
      %3750 = vmatpush1.msra.mxu0 0.0
      %3751 = vmatprep.subr.mxu0 0.0
      %3752 = vmatpush1.msra.mxu0 0.0
      %3753 = vmatprep.subr.mxu0 0.0
      %3754 = vmatpush1.msra.mxu0 0.0
      %3755 = vmatprep.subr.mxu0 0.0
      %3756 = vmatpush1.msra.mxu0 0.0
      %3757 = vmatprep.subr.mxu0 0.0
      %3758 = vmatpush1.msra.mxu0 0.0
      %3759 = vmatprep.subr.mxu0 0.0
      %3760 = vmatpush1.msra.mxu0 0.0
      %3761 = vmatprep.subr.mxu0 0.0
      %3762 = vmatpush1.msra.mxu0 0.0
      %3763 = vmatprep.subr.mxu0 0.0
      %3764 = vmatpush1.msra.mxu0 0.0
      %3765 = vmatprep.subr.mxu0 0.0
      %3766 = vmatpush1.msra.mxu0 0.0
      %3767 = vmatprep.subr.mxu0 0.0
      %3768 = vmatpush1.msra.mxu0 0.0
      %3769 = vmatprep.subr.mxu0 0.0
      %3770 = vmatpush1.msra.mxu0 0.0
      %3771 = vmatprep.subr.mxu0 0.0
      %3772 = vmatpush1.msra.mxu0 0.0
      %3773 = vmatprep.subr.mxu0 0.0
      %3774 = vmatpush1.msra.mxu0 0.0
      %3775 = vmatprep.subr.mxu0 0.0
      %3776 = vmatpush1.msra.mxu0 0.0
      %3777 = vmatprep.subr.mxu0 0.0
      %3778 = vmatpush1.msra.mxu0 0.0
      %3779 = vmatprep.subr.mxu0 0.0
      %3780 = vmatpush1.msra.mxu0 0.0
      %3781 = vmatprep.subr.mxu0 0.0
      %3782 = vmatpush1.msra.mxu0 0.0
      %3783 = vmatprep.subr.mxu0 0.0
      %3784 = vmatpush1.msra.mxu0 0.0
      %3785 = vmatprep.subr.mxu0 0.0
      %3786 = vmatpush1.msra.mxu0 0.0
      %3787 = vmatprep.subr.mxu0 0.0
      %3788 = vmatpush1.msra.mxu0 0.0
      %3789 = vmatprep.subr.mxu0 0.0
      %3790 = vmatpush1.msra.mxu0 0.0
      %3791 = vmatprep.subr.mxu0 0.0
      %3792 = vmatpush1.msra.mxu0 0.0
      %3793 = vmatprep.subr.mxu0 0.0
      %3794 = vmatpush1.msra.mxu0 0.0
      %3795 = vmatprep.subr.mxu0 0.0
      %3796 = vmatpush1.msra.mxu0 0.0
      %3797 = vmatprep.mubr.f32.mxu0 0.0
      %3798 = vmatmul.mubr.f32.gmra.mrb[0].mxu0 %v766
      %v3799 = vpop.f32.mrb[0].mxu0
      %v3800 = vadd.f32 0.0, %v3799
      %v3801 = vpop.f32.mrb[0].mxu0
      %3802 = vdwg.mxu0
      %v3803 = vadd.f32 %v3659, %v3800
      %v3804 = vadd.f32 %v3803, %v845
      %3806 = vrot.lane.b32.xlu0 %v3804, 40
      %v3807 = vpop.permute.xlu0 %3806
      %vm3809 = vcmask 392512
      %3810 = vst.msk [vmem:[%s231] sm:$0xff] %vm3809, %v3807
      %v3811 = vld [vmem:[%s223 + $0x4] sm:$0xf]
      %3813 = vrot.lane.b32.xlu0 %v3811, 64
      %v3814 = vpop.permute.xlu0 %3813
      %v3815 = vsel %vm246, %v3814, 0
      %3817 = vmatprep.subr.mxu0 0.0
      %3818 = vmatpush1.msra.mxu0 %v240
      %3819 = vmatprep.subr.mxu0 0.0
      %3820 = vmatpush1.msra.mxu0 %v241
      %3821 = vmatprep.subr.mxu0 0.0
      %3822 = vmatpush1.msra.mxu0 0.0
      %3823 = vmatprep.subr.mxu0 0.0
      %3824 = vmatpush1.msra.mxu0 0.0
      %3825 = vmatprep.subr.mxu0 0.0
      %3826 = vmatpush1.msra.mxu0 0.0
      %3827 = vmatprep.subr.mxu0 0.0
      %3828 = vmatpush1.msra.mxu0 0.0
      %3829 = vmatprep.subr.mxu0 0.0
      %3830 = vmatpush1.msra.mxu0 0.0
      %3831 = vmatprep.subr.mxu0 0.0
      %3832 = vmatpush1.msra.mxu0 0.0
      %3833 = vmatprep.subr.mxu0 0.0
      %3834 = vmatpush1.msra.mxu0 0.0
      %3835 = vmatprep.subr.mxu0 0.0
      %3836 = vmatpush1.msra.mxu0 0.0
      %3837 = vmatprep.subr.mxu0 0.0
      %3838 = vmatpush1.msra.mxu0 0.0
      %3839 = vmatprep.subr.mxu0 0.0
      %3840 = vmatpush1.msra.mxu0 0.0
      %3841 = vmatprep.subr.mxu0 0.0
      %3842 = vmatpush1.msra.mxu0 0.0
      %3843 = vmatprep.subr.mxu0 0.0
      %3844 = vmatpush1.msra.mxu0 0.0
      %3845 = vmatprep.subr.mxu0 0.0
      %3846 = vmatpush1.msra.mxu0 0.0
      %3847 = vmatprep.subr.mxu0 0.0
      %3848 = vmatpush1.msra.mxu0 0.0
      %3849 = vmatprep.subr.mxu0 0.0
      %3850 = vmatpush1.msra.mxu0 0.0
      %3851 = vmatprep.subr.mxu0 0.0
      %3852 = vmatpush1.msra.mxu0 0.0
      %3853 = vmatprep.subr.mxu0 0.0
      %3854 = vmatpush1.msra.mxu0 0.0
      %3855 = vmatprep.subr.mxu0 0.0
      %3856 = vmatpush1.msra.mxu0 0.0
      %3857 = vmatprep.subr.mxu0 0.0
      %3858 = vmatpush1.msra.mxu0 0.0
      %3859 = vmatprep.subr.mxu0 0.0
      %3860 = vmatpush1.msra.mxu0 0.0
      %3861 = vmatprep.subr.mxu0 0.0
      %3862 = vmatpush1.msra.mxu0 0.0
      %3863 = vmatprep.subr.mxu0 0.0
      %3864 = vmatpush1.msra.mxu0 0.0
      %3865 = vmatprep.subr.mxu0 0.0
      %3866 = vmatpush1.msra.mxu0 0.0
      %3867 = vmatprep.subr.mxu0 0.0
      %3868 = vmatpush1.msra.mxu0 0.0
      %3869 = vmatprep.subr.mxu0 0.0
      %3870 = vmatpush1.msra.mxu0 0.0
      %3871 = vmatprep.subr.mxu0 0.0
      %3872 = vmatpush1.msra.mxu0 0.0
      %3873 = vmatprep.subr.mxu0 0.0
      %3874 = vmatpush1.msra.mxu0 0.0
      %3875 = vmatprep.subr.mxu0 0.0
      %3876 = vmatpush1.msra.mxu0 0.0
      %3877 = vmatprep.subr.mxu0 0.0
      %3878 = vmatpush1.msra.mxu0 0.0
      %3879 = vmatprep.subr.mxu0 0.0
      %3880 = vmatpush1.msra.mxu0 0.0
      %3881 = vmatprep.mubr.f32.mxu0 0.0
      %3882 = vmatmul.mubr.f32.gmra.mrb[0].mxu0 %v3815
      %v3883 = vpop.f32.mrb[0].mxu0
      %v3884 = vadd.f32 0.0, %v3883
      %v3885 = vpop.f32.mrb[0].mxu0
      %3886 = vdwg.mxu0
      %3887 = vmatprep.subr.mxu0 0.0
      %3888 = vmatpush1.msra.mxu0 %v243
      %3889 = vmatprep.subr.mxu0 0.0
      %3890 = vmatpush1.msra.mxu0 %v244
      %3891 = vmatprep.subr.mxu0 0.0
      %3892 = vmatpush1.msra.mxu0 0.0
      %3893 = vmatprep.subr.mxu0 0.0
      %3894 = vmatpush1.msra.mxu0 0.0
      %3895 = vmatprep.subr.mxu0 0.0
      %3896 = vmatpush1.msra.mxu0 0.0
      %3897 = vmatprep.subr.mxu0 0.0
      %3898 = vmatpush1.msra.mxu0 0.0
      %3899 = vmatprep.subr.mxu0 0.0
      %3900 = vmatpush1.msra.mxu0 0.0
      %3901 = vmatprep.subr.mxu0 0.0
      %3902 = vmatpush1.msra.mxu0 0.0
      %3903 = vmatprep.subr.mxu0 0.0
      %3904 = vmatpush1.msra.mxu0 0.0
      %3905 = vmatprep.subr.mxu0 0.0
      %3906 = vmatpush1.msra.mxu0 0.0
      %3907 = vmatprep.subr.mxu0 0.0
      %3908 = vmatpush1.msra.mxu0 0.0
      %3909 = vmatprep.subr.mxu0 0.0
      %3910 = vmatpush1.msra.mxu0 0.0
      %3911 = vmatprep.subr.mxu0 0.0
      %3912 = vmatpush1.msra.mxu0 0.0
      %3913 = vmatprep.subr.mxu0 0.0
      %3914 = vmatpush1.msra.mxu0 0.0
      %3915 = vmatprep.subr.mxu0 0.0
      %3916 = vmatpush1.msra.mxu0 0.0
      %3917 = vmatprep.subr.mxu0 0.0
      %3918 = vmatpush1.msra.mxu0 0.0
      %3919 = vmatprep.subr.mxu0 0.0
      %3920 = vmatpush1.msra.mxu0 0.0
      %3921 = vmatprep.subr.mxu0 0.0
      %3922 = vmatpush1.msra.mxu0 0.0
      %3923 = vmatprep.subr.mxu0 0.0
      %3924 = vmatpush1.msra.mxu0 0.0
      %3925 = vmatprep.subr.mxu0 0.0
      %3926 = vmatpush1.msra.mxu0 0.0
      %3927 = vmatprep.subr.mxu0 0.0
      %3928 = vmatpush1.msra.mxu0 0.0
      %3929 = vmatprep.subr.mxu0 0.0
      %3930 = vmatpush1.msra.mxu0 0.0
      %3931 = vmatprep.subr.mxu0 0.0
      %3932 = vmatpush1.msra.mxu0 0.0
      %3933 = vmatprep.subr.mxu0 0.0
      %3934 = vmatpush1.msra.mxu0 0.0
      %3935 = vmatprep.subr.mxu0 0.0
      %3936 = vmatpush1.msra.mxu0 0.0
      %3937 = vmatprep.subr.mxu0 0.0
      %3938 = vmatpush1.msra.mxu0 0.0
      %3939 = vmatprep.subr.mxu0 0.0
      %3940 = vmatpush1.msra.mxu0 0.0
      %3941 = vmatprep.subr.mxu0 0.0
      %3942 = vmatpush1.msra.mxu0 0.0
      %3943 = vmatprep.subr.mxu0 0.0
      %3944 = vmatpush1.msra.mxu0 0.0
      %3945 = vmatprep.subr.mxu0 0.0
      %3946 = vmatpush1.msra.mxu0 0.0
      %3947 = vmatprep.subr.mxu0 0.0
      %3948 = vmatpush1.msra.mxu0 0.0
      %3949 = vmatprep.subr.mxu0 0.0
      %3950 = vmatpush1.msra.mxu0 0.0
      %3951 = vmatprep.mubr.f32.mxu0 0.0
      %3952 = vmatmul.mubr.f32.gmra.mrb[0].mxu0 %v3815
      %v3953 = vpop.f32.mrb[0].mxu0
      %v3954 = vadd.f32 0.0, %v3953
      %v3955 = vpop.f32.mrb[0].mxu0
      %3956 = vdwg.mxu0
      %v3958 = vsel %vm394, %v3954, 0
      %3960 = vmatprep.subr.mxu0 0.0
      %3961 = vmatpush1.msra.mxu0 %v3958
      %3962 = vmatprep.subr.mxu0 0.0
      %3963 = vmatpush1.msra.mxu0 0.0
      %3964 = vmatprep.subr.mxu0 0.0
      %3965 = vmatpush1.msra.mxu0 0.0
      %3966 = vmatprep.subr.mxu0 0.0
      %3967 = vmatpush1.msra.mxu0 0.0
      %3968 = vmatprep.subr.mxu0 0.0
      %3969 = vmatpush1.msra.mxu0 0.0
      %3970 = vmatprep.subr.mxu0 0.0
      %3971 = vmatpush1.msra.mxu0 0.0
      %3972 = vmatprep.subr.mxu0 0.0
      %3973 = vmatpush1.msra.mxu0 0.0
      %3974 = vmatprep.subr.mxu0 0.0
      %3975 = vmatpush1.msra.mxu0 0.0
      %3976 = vmatprep.subr.mxu0 0.0
      %3977 = vmatpush1.msra.mxu0 0.0
      %3978 = vmatprep.subr.mxu0 0.0
      %3979 = vmatpush1.msra.mxu0 0.0
      %3980 = vmatprep.subr.mxu0 0.0
      %3981 = vmatpush1.msra.mxu0 0.0
      %3982 = vmatprep.subr.mxu0 0.0
      %3983 = vmatpush1.msra.mxu0 0.0
      %3984 = vmatprep.subr.mxu0 0.0
      %3985 = vmatpush1.msra.mxu0 0.0
      %3986 = vmatprep.subr.mxu0 0.0
      %3987 = vmatpush1.msra.mxu0 0.0
      %3988 = vmatprep.subr.mxu0 0.0
      %3989 = vmatpush1.msra.mxu0 0.0
      %3990 = vmatprep.subr.mxu0 0.0
      %3991 = vmatpush1.msra.mxu0 0.0
      %3992 = vmatprep.subr.mxu0 0.0
      %3993 = vmatpush1.msra.mxu0 0.0
      %3994 = vmatprep.subr.mxu0 0.0
      %3995 = vmatpush1.msra.mxu0 0.0
      %3996 = vmatprep.subr.mxu0 0.0
      %3997 = vmatpush1.msra.mxu0 0.0
      %3998 = vmatprep.subr.mxu0 0.0
      %3999 = vmatpush1.msra.mxu0 0.0
      %4000 = vmatprep.subr.mxu0 0.0
      %4001 = vmatpush1.msra.mxu0 0.0
      %4002 = vmatprep.subr.mxu0 0.0
      %4003 = vmatpush1.msra.mxu0 0.0
      %4004 = vmatprep.subr.mxu0 0.0
      %4005 = vmatpush1.msra.mxu0 0.0
      %4006 = vmatprep.subr.mxu0 0.0
      %4007 = vmatpush1.msra.mxu0 0.0
      %4008 = vmatprep.subr.mxu0 0.0
      %4009 = vmatpush1.msra.mxu0 0.0
      %4010 = vmatprep.subr.mxu0 0.0
      %4011 = vmatpush1.msra.mxu0 0.0
      %4012 = vmatprep.subr.mxu0 0.0
      %4013 = vmatpush1.msra.mxu0 0.0
      %4014 = vmatprep.subr.mxu0 0.0
      %4015 = vmatpush1.msra.mxu0 0.0
      %4016 = vmatprep.subr.mxu0 0.0
      %4017 = vmatpush1.msra.mxu0 0.0
      %4018 = vmatprep.subr.mxu0 0.0
      %4019 = vmatpush1.msra.mxu0 0.0
      %4020 = vmatprep.subr.mxu0 0.0
      %4021 = vmatpush1.msra.mxu0 0.0
      %4022 = vmatprep.subr.mxu0 0.0
      %4023 = vmatpush1.msra.mxu0 0.0
      %4024 = vmatprep.mubr.f32.mxu0 0.0
      %4025 = vmatmul.mubr.f32.gmra.mrb[0].mxu0 %v392
      %v4026 = vpop.f32.mrb[0].mxu0
      %v4027 = vadd.f32 0.0, %v4026
      %v4028 = vpop.f32.mrb[0].mxu0
      %4029 = vdwg.mxu0
      %v4031 = vsel %vm394, %v3884, 0
      %4033 = vmatprep.subr.mxu0 0.0
      %4034 = vmatpush1.msra.mxu0 %v4031
      %4035 = vmatprep.subr.mxu0 0.0
      %4036 = vmatpush1.msra.mxu0 0.0
      %4037 = vmatprep.subr.mxu0 0.0
      %4038 = vmatpush1.msra.mxu0 0.0
      %4039 = vmatprep.subr.mxu0 0.0
      %4040 = vmatpush1.msra.mxu0 0.0
      %4041 = vmatprep.subr.mxu0 0.0
      %4042 = vmatpush1.msra.mxu0 0.0
      %4043 = vmatprep.subr.mxu0 0.0
      %4044 = vmatpush1.msra.mxu0 0.0
      %4045 = vmatprep.subr.mxu0 0.0
      %4046 = vmatpush1.msra.mxu0 0.0
      %4047 = vmatprep.subr.mxu0 0.0
      %4048 = vmatpush1.msra.mxu0 0.0
      %4049 = vmatprep.subr.mxu0 0.0
      %4050 = vmatpush1.msra.mxu0 0.0
      %4051 = vmatprep.subr.mxu0 0.0
      %4052 = vmatpush1.msra.mxu0 0.0
      %4053 = vmatprep.subr.mxu0 0.0
      %4054 = vmatpush1.msra.mxu0 0.0
      %4055 = vmatprep.subr.mxu0 0.0
      %4056 = vmatpush1.msra.mxu0 0.0
      %4057 = vmatprep.subr.mxu0 0.0
      %4058 = vmatpush1.msra.mxu0 0.0
      %4059 = vmatprep.subr.mxu0 0.0
      %4060 = vmatpush1.msra.mxu0 0.0
      %4061 = vmatprep.subr.mxu0 0.0
      %4062 = vmatpush1.msra.mxu0 0.0
      %4063 = vmatprep.subr.mxu0 0.0
      %4064 = vmatpush1.msra.mxu0 0.0
      %4065 = vmatprep.subr.mxu0 0.0
      %4066 = vmatpush1.msra.mxu0 0.0
      %4067 = vmatprep.subr.mxu0 0.0
      %4068 = vmatpush1.msra.mxu0 0.0
      %4069 = vmatprep.subr.mxu0 0.0
      %4070 = vmatpush1.msra.mxu0 0.0
      %4071 = vmatprep.subr.mxu0 0.0
      %4072 = vmatpush1.msra.mxu0 0.0
      %4073 = vmatprep.subr.mxu0 0.0
      %4074 = vmatpush1.msra.mxu0 0.0
      %4075 = vmatprep.subr.mxu0 0.0
      %4076 = vmatpush1.msra.mxu0 0.0
      %4077 = vmatprep.subr.mxu0 0.0
      %4078 = vmatpush1.msra.mxu0 0.0
      %4079 = vmatprep.subr.mxu0 0.0
      %4080 = vmatpush1.msra.mxu0 0.0
      %4081 = vmatprep.subr.mxu0 0.0
      %4082 = vmatpush1.msra.mxu0 0.0
      %4083 = vmatprep.subr.mxu0 0.0
      %4084 = vmatpush1.msra.mxu0 0.0
      %4085 = vmatprep.subr.mxu0 0.0
      %4086 = vmatpush1.msra.mxu0 0.0
      %4087 = vmatprep.subr.mxu0 0.0
      %4088 = vmatpush1.msra.mxu0 0.0
      %4089 = vmatprep.subr.mxu0 0.0
      %4090 = vmatpush1.msra.mxu0 0.0
      %4091 = vmatprep.subr.mxu0 0.0
      %4092 = vmatpush1.msra.mxu0 0.0
      %4093 = vmatprep.subr.mxu0 0.0
      %4094 = vmatpush1.msra.mxu0 0.0
      %4095 = vmatprep.subr.mxu0 0.0
      %4096 = vmatpush1.msra.mxu0 0.0
      %4097 = vmatprep.mubr.f32.mxu0 0.0
      %4098 = vmatmul.mubr.f32.gmra.mrb[0].mxu0 %v469
      %v4099 = vpop.f32.mrb[0].mxu0
      %v4100 = vadd.f32 %v4027, %v4099
      %v4101 = vpop.f32.mrb[0].mxu0
      %4102 = vdwg.mxu0
      %v4103 = vld [vmem:[%s223 + $0x4] sm:$0xf]
      %4105 = vrot.lane.b32.xlu0 %v4103, 48
      %v4106 = vpop.permute.xlu0 %4105
      %v4107 = vsel %vm246, %v4106, 0
      %4109 = vmatprep.subr.mxu0 0.0
      %4110 = vmatpush1.msra.mxu0 %v240
      %4111 = vmatprep.subr.mxu0 0.0
      %4112 = vmatpush1.msra.mxu0 %v241
      %4113 = vmatprep.subr.mxu0 0.0
      %4114 = vmatpush1.msra.mxu0 0.0
      %4115 = vmatprep.subr.mxu0 0.0
      %4116 = vmatpush1.msra.mxu0 0.0
      %4117 = vmatprep.subr.mxu0 0.0
      %4118 = vmatpush1.msra.mxu0 0.0
      %4119 = vmatprep.subr.mxu0 0.0
      %4120 = vmatpush1.msra.mxu0 0.0
      %4121 = vmatprep.subr.mxu0 0.0
      %4122 = vmatpush1.msra.mxu0 0.0
      %4123 = vmatprep.subr.mxu0 0.0
      %4124 = vmatpush1.msra.mxu0 0.0
      %4125 = vmatprep.subr.mxu0 0.0
      %4126 = vmatpush1.msra.mxu0 0.0
      %4127 = vmatprep.subr.mxu0 0.0
      %4128 = vmatpush1.msra.mxu0 0.0
      %4129 = vmatprep.subr.mxu0 0.0
      %4130 = vmatpush1.msra.mxu0 0.0
      %4131 = vmatprep.subr.mxu0 0.0
      %4132 = vmatpush1.msra.mxu0 0.0
      %4133 = vmatprep.subr.mxu0 0.0
      %4134 = vmatpush1.msra.mxu0 0.0
      %4135 = vmatprep.subr.mxu0 0.0
      %4136 = vmatpush1.msra.mxu0 0.0
      %4137 = vmatprep.subr.mxu0 0.0
      %4138 = vmatpush1.msra.mxu0 0.0
      %4139 = vmatprep.subr.mxu0 0.0
      %4140 = vmatpush1.msra.mxu0 0.0
      %4141 = vmatprep.subr.mxu0 0.0
      %4142 = vmatpush1.msra.mxu0 0.0
      %4143 = vmatprep.subr.mxu0 0.0
      %4144 = vmatpush1.msra.mxu0 0.0
      %4145 = vmatprep.subr.mxu0 0.0
      %4146 = vmatpush1.msra.mxu0 0.0
      %4147 = vmatprep.subr.mxu0 0.0
      %4148 = vmatpush1.msra.mxu0 0.0
      %4149 = vmatprep.subr.mxu0 0.0
      %4150 = vmatpush1.msra.mxu0 0.0
      %4151 = vmatprep.subr.mxu0 0.0
      %4152 = vmatpush1.msra.mxu0 0.0
      %4153 = vmatprep.subr.mxu0 0.0
      %4154 = vmatpush1.msra.mxu0 0.0
      %4155 = vmatprep.subr.mxu0 0.0
      %4156 = vmatpush1.msra.mxu0 0.0
      %4157 = vmatprep.subr.mxu0 0.0
      %4158 = vmatpush1.msra.mxu0 0.0
      %4159 = vmatprep.subr.mxu0 0.0
      %4160 = vmatpush1.msra.mxu0 0.0
      %4161 = vmatprep.subr.mxu0 0.0
      %4162 = vmatpush1.msra.mxu0 0.0
      %4163 = vmatprep.subr.mxu0 0.0
      %4164 = vmatpush1.msra.mxu0 0.0
      %4165 = vmatprep.subr.mxu0 0.0
      %4166 = vmatpush1.msra.mxu0 0.0
      %4167 = vmatprep.subr.mxu0 0.0
      %4168 = vmatpush1.msra.mxu0 0.0
      %4169 = vmatprep.subr.mxu0 0.0
      %4170 = vmatpush1.msra.mxu0 0.0
      %4171 = vmatprep.subr.mxu0 0.0
      %4172 = vmatpush1.msra.mxu0 0.0
      %4173 = vmatprep.mubr.f32.mxu0 0.0
      %4174 = vmatmul.mubr.f32.gmra.mrb[0].mxu0 %v4107
      %v4175 = vpop.f32.mrb[0].mxu0
      %v4176 = vadd.f32 0.0, %v4175
      %v4177 = vpop.f32.mrb[0].mxu0
      %4178 = vdwg.mxu0
      %v4180 = vsel %vm394, %v4176, 0
      %4182 = vmatprep.subr.mxu0 0.0
      %4183 = vmatpush1.msra.mxu0 %v4180
      %4184 = vmatprep.subr.mxu0 0.0
      %4185 = vmatpush1.msra.mxu0 0.0
      %4186 = vmatprep.subr.mxu0 0.0
      %4187 = vmatpush1.msra.mxu0 0.0
      %4188 = vmatprep.subr.mxu0 0.0
      %4189 = vmatpush1.msra.mxu0 0.0
      %4190 = vmatprep.subr.mxu0 0.0
      %4191 = vmatpush1.msra.mxu0 0.0
      %4192 = vmatprep.subr.mxu0 0.0
      %4193 = vmatpush1.msra.mxu0 0.0
      %4194 = vmatprep.subr.mxu0 0.0
      %4195 = vmatpush1.msra.mxu0 0.0
      %4196 = vmatprep.subr.mxu0 0.0
      %4197 = vmatpush1.msra.mxu0 0.0
      %4198 = vmatprep.subr.mxu0 0.0
      %4199 = vmatpush1.msra.mxu0 0.0
      %4200 = vmatprep.subr.mxu0 0.0
      %4201 = vmatpush1.msra.mxu0 0.0
      %4202 = vmatprep.subr.mxu0 0.0
      %4203 = vmatpush1.msra.mxu0 0.0
      %4204 = vmatprep.subr.mxu0 0.0
      %4205 = vmatpush1.msra.mxu0 0.0
      %4206 = vmatprep.subr.mxu0 0.0
      %4207 = vmatpush1.msra.mxu0 0.0
      %4208 = vmatprep.subr.mxu0 0.0
      %4209 = vmatpush1.msra.mxu0 0.0
      %4210 = vmatprep.subr.mxu0 0.0
      %4211 = vmatpush1.msra.mxu0 0.0
      %4212 = vmatprep.subr.mxu0 0.0
      %4213 = vmatpush1.msra.mxu0 0.0
      %4214 = vmatprep.subr.mxu0 0.0
      %4215 = vmatpush1.msra.mxu0 0.0
      %4216 = vmatprep.subr.mxu0 0.0
      %4217 = vmatpush1.msra.mxu0 0.0
      %4218 = vmatprep.subr.mxu0 0.0
      %4219 = vmatpush1.msra.mxu0 0.0
      %4220 = vmatprep.subr.mxu0 0.0
      %4221 = vmatpush1.msra.mxu0 0.0
      %4222 = vmatprep.subr.mxu0 0.0
      %4223 = vmatpush1.msra.mxu0 0.0
      %4224 = vmatprep.subr.mxu0 0.0
      %4225 = vmatpush1.msra.mxu0 0.0
      %4226 = vmatprep.subr.mxu0 0.0
      %4227 = vmatpush1.msra.mxu0 0.0
      %4228 = vmatprep.subr.mxu0 0.0
      %4229 = vmatpush1.msra.mxu0 0.0
      %4230 = vmatprep.subr.mxu0 0.0
      %4231 = vmatpush1.msra.mxu0 0.0
      %4232 = vmatprep.subr.mxu0 0.0
      %4233 = vmatpush1.msra.mxu0 0.0
      %4234 = vmatprep.subr.mxu0 0.0
      %4235 = vmatpush1.msra.mxu0 0.0
      %4236 = vmatprep.subr.mxu0 0.0
      %4237 = vmatpush1.msra.mxu0 0.0
      %4238 = vmatprep.subr.mxu0 0.0
      %4239 = vmatpush1.msra.mxu0 0.0
      %4240 = vmatprep.subr.mxu0 0.0
      %4241 = vmatpush1.msra.mxu0 0.0
      %4242 = vmatprep.subr.mxu0 0.0
      %4243 = vmatpush1.msra.mxu0 0.0
      %4244 = vmatprep.subr.mxu0 0.0
      %4245 = vmatpush1.msra.mxu0 0.0
      %4246 = vmatprep.mubr.f32.mxu0 0.0
      %4247 = vmatmul.mubr.f32.gmra.mrb[0].mxu0 %v619
      %v4248 = vpop.f32.mrb[0].mxu0
      %v4249 = vadd.f32 0.0, %v4248
      %v4250 = vpop.f32.mrb[0].mxu0
      %4251 = vdwg.mxu0
      %v4252 = vadd.f32 %v4100, %v4249
      %4253 = vmatprep.subr.mxu0 0.0
      %4254 = vmatpush1.msra.mxu0 %v243
      %4255 = vmatprep.subr.mxu0 0.0
      %4256 = vmatpush1.msra.mxu0 %v244
      %4257 = vmatprep.subr.mxu0 0.0
      %4258 = vmatpush1.msra.mxu0 0.0
      %4259 = vmatprep.subr.mxu0 0.0
      %4260 = vmatpush1.msra.mxu0 0.0
      %4261 = vmatprep.subr.mxu0 0.0
      %4262 = vmatpush1.msra.mxu0 0.0
      %4263 = vmatprep.subr.mxu0 0.0
      %4264 = vmatpush1.msra.mxu0 0.0
      %4265 = vmatprep.subr.mxu0 0.0
      %4266 = vmatpush1.msra.mxu0 0.0
      %4267 = vmatprep.subr.mxu0 0.0
      %4268 = vmatpush1.msra.mxu0 0.0
      %4269 = vmatprep.subr.mxu0 0.0
      %4270 = vmatpush1.msra.mxu0 0.0
      %4271 = vmatprep.subr.mxu0 0.0
      %4272 = vmatpush1.msra.mxu0 0.0
      %4273 = vmatprep.subr.mxu0 0.0
      %4274 = vmatpush1.msra.mxu0 0.0
      %4275 = vmatprep.subr.mxu0 0.0
      %4276 = vmatpush1.msra.mxu0 0.0
      %4277 = vmatprep.subr.mxu0 0.0
      %4278 = vmatpush1.msra.mxu0 0.0
      %4279 = vmatprep.subr.mxu0 0.0
      %4280 = vmatpush1.msra.mxu0 0.0
      %4281 = vmatprep.subr.mxu0 0.0
      %4282 = vmatpush1.msra.mxu0 0.0
      %4283 = vmatprep.subr.mxu0 0.0
      %4284 = vmatpush1.msra.mxu0 0.0
      %4285 = vmatprep.subr.mxu0 0.0
      %4286 = vmatpush1.msra.mxu0 0.0
      %4287 = vmatprep.subr.mxu0 0.0
      %4288 = vmatpush1.msra.mxu0 0.0
      %4289 = vmatprep.subr.mxu0 0.0
      %4290 = vmatpush1.msra.mxu0 0.0
      %4291 = vmatprep.subr.mxu0 0.0
      %4292 = vmatpush1.msra.mxu0 0.0
      %4293 = vmatprep.subr.mxu0 0.0
      %4294 = vmatpush1.msra.mxu0 0.0
      %4295 = vmatprep.subr.mxu0 0.0
      %4296 = vmatpush1.msra.mxu0 0.0
      %4297 = vmatprep.subr.mxu0 0.0
      %4298 = vmatpush1.msra.mxu0 0.0
      %4299 = vmatprep.subr.mxu0 0.0
      %4300 = vmatpush1.msra.mxu0 0.0
      %4301 = vmatprep.subr.mxu0 0.0
      %4302 = vmatpush1.msra.mxu0 0.0
      %4303 = vmatprep.subr.mxu0 0.0
      %4304 = vmatpush1.msra.mxu0 0.0
      %4305 = vmatprep.subr.mxu0 0.0
      %4306 = vmatpush1.msra.mxu0 0.0
      %4307 = vmatprep.subr.mxu0 0.0
      %4308 = vmatpush1.msra.mxu0 0.0
      %4309 = vmatprep.subr.mxu0 0.0
      %4310 = vmatpush1.msra.mxu0 0.0
      %4311 = vmatprep.subr.mxu0 0.0
      %4312 = vmatpush1.msra.mxu0 0.0
      %4313 = vmatprep.subr.mxu0 0.0
      %4314 = vmatpush1.msra.mxu0 0.0
      %4315 = vmatprep.subr.mxu0 0.0
      %4316 = vmatpush1.msra.mxu0 0.0
      %4317 = vmatprep.mubr.f32.mxu0 0.0
      %4318 = vmatmul.mubr.f32.gmra.mrb[0].mxu0 %v4107
      %v4319 = vpop.f32.mrb[0].mxu0
      %v4320 = vadd.f32 0.0, %v4319
      %v4321 = vpop.f32.mrb[0].mxu0
      %4322 = vdwg.mxu0
      %v4324 = vsel %vm394, %v4320, 0
      %4326 = vmatprep.subr.mxu0 0.0
      %4327 = vmatpush1.msra.mxu0 %v4324
      %4328 = vmatprep.subr.mxu0 0.0
      %4329 = vmatpush1.msra.mxu0 0.0
      %4330 = vmatprep.subr.mxu0 0.0
      %4331 = vmatpush1.msra.mxu0 0.0
      %4332 = vmatprep.subr.mxu0 0.0
      %4333 = vmatpush1.msra.mxu0 0.0
      %4334 = vmatprep.subr.mxu0 0.0
      %4335 = vmatpush1.msra.mxu0 0.0
      %4336 = vmatprep.subr.mxu0 0.0
      %4337 = vmatpush1.msra.mxu0 0.0
      %4338 = vmatprep.subr.mxu0 0.0
      %4339 = vmatpush1.msra.mxu0 0.0
      %4340 = vmatprep.subr.mxu0 0.0
      %4341 = vmatpush1.msra.mxu0 0.0
      %4342 = vmatprep.subr.mxu0 0.0
      %4343 = vmatpush1.msra.mxu0 0.0
      %4344 = vmatprep.subr.mxu0 0.0
      %4345 = vmatpush1.msra.mxu0 0.0
      %4346 = vmatprep.subr.mxu0 0.0
      %4347 = vmatpush1.msra.mxu0 0.0
      %4348 = vmatprep.subr.mxu0 0.0
      %4349 = vmatpush1.msra.mxu0 0.0
      %4350 = vmatprep.subr.mxu0 0.0
      %4351 = vmatpush1.msra.mxu0 0.0
      %4352 = vmatprep.subr.mxu0 0.0
      %4353 = vmatpush1.msra.mxu0 0.0
      %4354 = vmatprep.subr.mxu0 0.0
      %4355 = vmatpush1.msra.mxu0 0.0
      %4356 = vmatprep.subr.mxu0 0.0
      %4357 = vmatpush1.msra.mxu0 0.0
      %4358 = vmatprep.subr.mxu0 0.0
      %4359 = vmatpush1.msra.mxu0 0.0
      %4360 = vmatprep.subr.mxu0 0.0
      %4361 = vmatpush1.msra.mxu0 0.0
      %4362 = vmatprep.subr.mxu0 0.0
      %4363 = vmatpush1.msra.mxu0 0.0
      %4364 = vmatprep.subr.mxu0 0.0
      %4365 = vmatpush1.msra.mxu0 0.0
      %4366 = vmatprep.subr.mxu0 0.0
      %4367 = vmatpush1.msra.mxu0 0.0
      %4368 = vmatprep.subr.mxu0 0.0
      %4369 = vmatpush1.msra.mxu0 0.0
      %4370 = vmatprep.subr.mxu0 0.0
      %4371 = vmatpush1.msra.mxu0 0.0
      %4372 = vmatprep.subr.mxu0 0.0
      %4373 = vmatpush1.msra.mxu0 0.0
      %4374 = vmatprep.subr.mxu0 0.0
      %4375 = vmatpush1.msra.mxu0 0.0
      %4376 = vmatprep.subr.mxu0 0.0
      %4377 = vmatpush1.msra.mxu0 0.0
      %4378 = vmatprep.subr.mxu0 0.0
      %4379 = vmatpush1.msra.mxu0 0.0
      %4380 = vmatprep.subr.mxu0 0.0
      %4381 = vmatpush1.msra.mxu0 0.0
      %4382 = vmatprep.subr.mxu0 0.0
      %4383 = vmatpush1.msra.mxu0 0.0
      %4384 = vmatprep.subr.mxu0 0.0
      %4385 = vmatpush1.msra.mxu0 0.0
      %4386 = vmatprep.subr.mxu0 0.0
      %4387 = vmatpush1.msra.mxu0 0.0
      %4388 = vmatprep.subr.mxu0 0.0
      %4389 = vmatpush1.msra.mxu0 0.0
      %4390 = vmatprep.mubr.f32.mxu0 0.0
      %4391 = vmatmul.mubr.f32.gmra.mrb[0].mxu0 %v766
      %v4392 = vpop.f32.mrb[0].mxu0
      %v4393 = vadd.f32 0.0, %v4392
      %v4394 = vpop.f32.mrb[0].mxu0
      %4395 = vdwg.mxu0
      %v4396 = vadd.f32 %v4252, %v4393
      %v4397 = vadd.f32 %v4396, %v845
      %4399 = vrot.lane.b32.xlu0 %v4397, 48
      %v4400 = vpop.permute.xlu0 %4399
      %vm4402 = vcmask 458112
      %4403 = vst.msk [vmem:[%s231] sm:$0xff] %vm4402, %v4400
      %v4404 = vld [vmem:[%s223 + $0x4] sm:$0xf]
      %4406 = vrot.lane.b32.xlu0 %v4404, 32
      %v4407 = vpop.permute.xlu0 %4406
      %v4408 = vsel %vm246, %v4407, 0
      %4410 = vmatprep.subr.mxu0 0.0
      %4411 = vmatpush1.msra.mxu0 %v240
      %4412 = vmatprep.subr.mxu0 0.0
      %4413 = vmatpush1.msra.mxu0 %v241
      %4414 = vmatprep.subr.mxu0 0.0
      %4415 = vmatpush1.msra.mxu0 0.0
      %4416 = vmatprep.subr.mxu0 0.0
      %4417 = vmatpush1.msra.mxu0 0.0
      %4418 = vmatprep.subr.mxu0 0.0
      %4419 = vmatpush1.msra.mxu0 0.0
      %4420 = vmatprep.subr.mxu0 0.0
      %4421 = vmatpush1.msra.mxu0 0.0
      %4422 = vmatprep.subr.mxu0 0.0
      %4423 = vmatpush1.msra.mxu0 0.0
      %4424 = vmatprep.subr.mxu0 0.0
      %4425 = vmatpush1.msra.mxu0 0.0
      %4426 = vmatprep.subr.mxu0 0.0
      %4427 = vmatpush1.msra.mxu0 0.0
      %4428 = vmatprep.subr.mxu0 0.0
      %4429 = vmatpush1.msra.mxu0 0.0
      %4430 = vmatprep.subr.mxu0 0.0
      %4431 = vmatpush1.msra.mxu0 0.0
      %4432 = vmatprep.subr.mxu0 0.0
      %4433 = vmatpush1.msra.mxu0 0.0
      %4434 = vmatprep.subr.mxu0 0.0
      %4435 = vmatpush1.msra.mxu0 0.0
      %4436 = vmatprep.subr.mxu0 0.0
      %4437 = vmatpush1.msra.mxu0 0.0
      %4438 = vmatprep.subr.mxu0 0.0
      %4439 = vmatpush1.msra.mxu0 0.0
      %4440 = vmatprep.subr.mxu0 0.0
      %4441 = vmatpush1.msra.mxu0 0.0
      %4442 = vmatprep.subr.mxu0 0.0
      %4443 = vmatpush1.msra.mxu0 0.0
      %4444 = vmatprep.subr.mxu0 0.0
      %4445 = vmatpush1.msra.mxu0 0.0
      %4446 = vmatprep.subr.mxu0 0.0
      %4447 = vmatpush1.msra.mxu0 0.0
      %4448 = vmatprep.subr.mxu0 0.0
      %4449 = vmatpush1.msra.mxu0 0.0
      %4450 = vmatprep.subr.mxu0 0.0
      %4451 = vmatpush1.msra.mxu0 0.0
      %4452 = vmatprep.subr.mxu0 0.0
      %4453 = vmatpush1.msra.mxu0 0.0
      %4454 = vmatprep.subr.mxu0 0.0
      %4455 = vmatpush1.msra.mxu0 0.0
      %4456 = vmatprep.subr.mxu0 0.0
      %4457 = vmatpush1.msra.mxu0 0.0
      %4458 = vmatprep.subr.mxu0 0.0
      %4459 = vmatpush1.msra.mxu0 0.0
      %4460 = vmatprep.subr.mxu0 0.0
      %4461 = vmatpush1.msra.mxu0 0.0
      %4462 = vmatprep.subr.mxu0 0.0
      %4463 = vmatpush1.msra.mxu0 0.0
      %4464 = vmatprep.subr.mxu0 0.0
      %4465 = vmatpush1.msra.mxu0 0.0
      %4466 = vmatprep.subr.mxu0 0.0
      %4467 = vmatpush1.msra.mxu0 0.0
      %4468 = vmatprep.subr.mxu0 0.0
      %4469 = vmatpush1.msra.mxu0 0.0
      %4470 = vmatprep.subr.mxu0 0.0
      %4471 = vmatpush1.msra.mxu0 0.0
      %4472 = vmatprep.subr.mxu0 0.0
      %4473 = vmatpush1.msra.mxu0 0.0
      %4474 = vmatprep.mubr.f32.mxu0 0.0
      %4475 = vmatmul.mubr.f32.gmra.mrb[0].mxu0 %v4408
      %v4476 = vpop.f32.mrb[0].mxu0
      %v4477 = vadd.f32 0.0, %v4476
      %v4478 = vpop.f32.mrb[0].mxu0
      %4479 = vdwg.mxu0
      %4480 = vmatprep.subr.mxu0 0.0
      %4481 = vmatpush1.msra.mxu0 %v243
      %4482 = vmatprep.subr.mxu0 0.0
      %4483 = vmatpush1.msra.mxu0 %v244
      %4484 = vmatprep.subr.mxu0 0.0
      %4485 = vmatpush1.msra.mxu0 0.0
      %4486 = vmatprep.subr.mxu0 0.0
      %4487 = vmatpush1.msra.mxu0 0.0
      %4488 = vmatprep.subr.mxu0 0.0
      %4489 = vmatpush1.msra.mxu0 0.0
      %4490 = vmatprep.subr.mxu0 0.0
      %4491 = vmatpush1.msra.mxu0 0.0
      %4492 = vmatprep.subr.mxu0 0.0
      %4493 = vmatpush1.msra.mxu0 0.0
      %4494 = vmatprep.subr.mxu0 0.0
      %4495 = vmatpush1.msra.mxu0 0.0
      %4496 = vmatprep.subr.mxu0 0.0
      %4497 = vmatpush1.msra.mxu0 0.0
      %4498 = vmatprep.subr.mxu0 0.0
      %4499 = vmatpush1.msra.mxu0 0.0
      %4500 = vmatprep.subr.mxu0 0.0
      %4501 = vmatpush1.msra.mxu0 0.0
      %4502 = vmatprep.subr.mxu0 0.0
      %4503 = vmatpush1.msra.mxu0 0.0
      %4504 = vmatprep.subr.mxu0 0.0
      %4505 = vmatpush1.msra.mxu0 0.0
      %4506 = vmatprep.subr.mxu0 0.0
      %4507 = vmatpush1.msra.mxu0 0.0
      %4508 = vmatprep.subr.mxu0 0.0
      %4509 = vmatpush1.msra.mxu0 0.0
      %4510 = vmatprep.subr.mxu0 0.0
      %4511 = vmatpush1.msra.mxu0 0.0
      %4512 = vmatprep.subr.mxu0 0.0
      %4513 = vmatpush1.msra.mxu0 0.0
      %4514 = vmatprep.subr.mxu0 0.0
      %4515 = vmatpush1.msra.mxu0 0.0
      %4516 = vmatprep.subr.mxu0 0.0
      %4517 = vmatpush1.msra.mxu0 0.0
      %4518 = vmatprep.subr.mxu0 0.0
      %4519 = vmatpush1.msra.mxu0 0.0
      %4520 = vmatprep.subr.mxu0 0.0
      %4521 = vmatpush1.msra.mxu0 0.0
      %4522 = vmatprep.subr.mxu0 0.0
      %4523 = vmatpush1.msra.mxu0 0.0
      %4524 = vmatprep.subr.mxu0 0.0
      %4525 = vmatpush1.msra.mxu0 0.0
      %4526 = vmatprep.subr.mxu0 0.0
      %4527 = vmatpush1.msra.mxu0 0.0
      %4528 = vmatprep.subr.mxu0 0.0
      %4529 = vmatpush1.msra.mxu0 0.0
      %4530 = vmatprep.subr.mxu0 0.0
      %4531 = vmatpush1.msra.mxu0 0.0
      %4532 = vmatprep.subr.mxu0 0.0
      %4533 = vmatpush1.msra.mxu0 0.0
      %4534 = vmatprep.subr.mxu0 0.0
      %4535 = vmatpush1.msra.mxu0 0.0
      %4536 = vmatprep.subr.mxu0 0.0
      %4537 = vmatpush1.msra.mxu0 0.0
      %4538 = vmatprep.subr.mxu0 0.0
      %4539 = vmatpush1.msra.mxu0 0.0
      %4540 = vmatprep.subr.mxu0 0.0
      %4541 = vmatpush1.msra.mxu0 0.0
      %4542 = vmatprep.subr.mxu0 0.0
      %4543 = vmatpush1.msra.mxu0 0.0
      %4544 = vmatprep.mubr.f32.mxu0 0.0
      %4545 = vmatmul.mubr.f32.gmra.mrb[0].mxu0 %v4408
      %v4546 = vpop.f32.mrb[0].mxu0
      %v4547 = vadd.f32 0.0, %v4546
      %v4548 = vpop.f32.mrb[0].mxu0
      %4549 = vdwg.mxu0
      %v4551 = vsel %vm394, %v4547, 0
      %4553 = vmatprep.subr.mxu0 0.0
      %4554 = vmatpush1.msra.mxu0 %v4551
      %4555 = vmatprep.subr.mxu0 0.0
      %4556 = vmatpush1.msra.mxu0 0.0
      %4557 = vmatprep.subr.mxu0 0.0
      %4558 = vmatpush1.msra.mxu0 0.0
      %4559 = vmatprep.subr.mxu0 0.0
      %4560 = vmatpush1.msra.mxu0 0.0
      %4561 = vmatprep.subr.mxu0 0.0
      %4562 = vmatpush1.msra.mxu0 0.0
      %4563 = vmatprep.subr.mxu0 0.0
      %4564 = vmatpush1.msra.mxu0 0.0
      %4565 = vmatprep.subr.mxu0 0.0
      %4566 = vmatpush1.msra.mxu0 0.0
      %4567 = vmatprep.subr.mxu0 0.0
      %4568 = vmatpush1.msra.mxu0 0.0
      %4569 = vmatprep.subr.mxu0 0.0
      %4570 = vmatpush1.msra.mxu0 0.0
      %4571 = vmatprep.subr.mxu0 0.0
      %4572 = vmatpush1.msra.mxu0 0.0
      %4573 = vmatprep.subr.mxu0 0.0
      %4574 = vmatpush1.msra.mxu0 0.0
      %4575 = vmatprep.subr.mxu0 0.0
      %4576 = vmatpush1.msra.mxu0 0.0
      %4577 = vmatprep.subr.mxu0 0.0
      %4578 = vmatpush1.msra.mxu0 0.0
      %4579 = vmatprep.subr.mxu0 0.0
      %4580 = vmatpush1.msra.mxu0 0.0
      %4581 = vmatprep.subr.mxu0 0.0
      %4582 = vmatpush1.msra.mxu0 0.0
      %4583 = vmatprep.subr.mxu0 0.0
      %4584 = vmatpush1.msra.mxu0 0.0
      %4585 = vmatprep.subr.mxu0 0.0
      %4586 = vmatpush1.msra.mxu0 0.0
      %4587 = vmatprep.subr.mxu0 0.0
      %4588 = vmatpush1.msra.mxu0 0.0
      %4589 = vmatprep.subr.mxu0 0.0
      %4590 = vmatpush1.msra.mxu0 0.0
      %4591 = vmatprep.subr.mxu0 0.0
      %4592 = vmatpush1.msra.mxu0 0.0
      %4593 = vmatprep.subr.mxu0 0.0
      %4594 = vmatpush1.msra.mxu0 0.0
      %4595 = vmatprep.subr.mxu0 0.0
      %4596 = vmatpush1.msra.mxu0 0.0
      %4597 = vmatprep.subr.mxu0 0.0
      %4598 = vmatpush1.msra.mxu0 0.0
      %4599 = vmatprep.subr.mxu0 0.0
      %4600 = vmatpush1.msra.mxu0 0.0
      %4601 = vmatprep.subr.mxu0 0.0
      %4602 = vmatpush1.msra.mxu0 0.0
      %4603 = vmatprep.subr.mxu0 0.0
      %4604 = vmatpush1.msra.mxu0 0.0
      %4605 = vmatprep.subr.mxu0 0.0
      %4606 = vmatpush1.msra.mxu0 0.0
      %4607 = vmatprep.subr.mxu0 0.0
      %4608 = vmatpush1.msra.mxu0 0.0
      %4609 = vmatprep.subr.mxu0 0.0
      %4610 = vmatpush1.msra.mxu0 0.0
      %4611 = vmatprep.subr.mxu0 0.0
      %4612 = vmatpush1.msra.mxu0 0.0
      %4613 = vmatprep.subr.mxu0 0.0
      %4614 = vmatpush1.msra.mxu0 0.0
      %4615 = vmatprep.subr.mxu0 0.0
      %4616 = vmatpush1.msra.mxu0 0.0
      %4617 = vmatprep.mubr.f32.mxu0 0.0
      %4618 = vmatmul.mubr.f32.gmra.mrb[0].mxu0 %v392
      %v4619 = vpop.f32.mrb[0].mxu0
      %v4620 = vadd.f32 0.0, %v4619
      %v4621 = vpop.f32.mrb[0].mxu0
      %4622 = vdwg.mxu0
      %v4624 = vsel %vm394, %v4477, 0
      %4626 = vmatprep.subr.mxu0 0.0
      %4627 = vmatpush1.msra.mxu0 %v4624
      %4628 = vmatprep.subr.mxu0 0.0
      %4629 = vmatpush1.msra.mxu0 0.0
      %4630 = vmatprep.subr.mxu0 0.0
      %4631 = vmatpush1.msra.mxu0 0.0
      %4632 = vmatprep.subr.mxu0 0.0
      %4633 = vmatpush1.msra.mxu0 0.0
      %4634 = vmatprep.subr.mxu0 0.0
      %4635 = vmatpush1.msra.mxu0 0.0
      %4636 = vmatprep.subr.mxu0 0.0
      %4637 = vmatpush1.msra.mxu0 0.0
      %4638 = vmatprep.subr.mxu0 0.0
      %4639 = vmatpush1.msra.mxu0 0.0
      %4640 = vmatprep.subr.mxu0 0.0
      %4641 = vmatpush1.msra.mxu0 0.0
      %4642 = vmatprep.subr.mxu0 0.0
      %4643 = vmatpush1.msra.mxu0 0.0
      %4644 = vmatprep.subr.mxu0 0.0
      %4645 = vmatpush1.msra.mxu0 0.0
      %4646 = vmatprep.subr.mxu0 0.0
      %4647 = vmatpush1.msra.mxu0 0.0
      %4648 = vmatprep.subr.mxu0 0.0
      %4649 = vmatpush1.msra.mxu0 0.0
      %4650 = vmatprep.subr.mxu0 0.0
      %4651 = vmatpush1.msra.mxu0 0.0
      %4652 = vmatprep.subr.mxu0 0.0
      %4653 = vmatpush1.msra.mxu0 0.0
      %4654 = vmatprep.subr.mxu0 0.0
      %4655 = vmatpush1.msra.mxu0 0.0
      %4656 = vmatprep.subr.mxu0 0.0
      %4657 = vmatpush1.msra.mxu0 0.0
      %4658 = vmatprep.subr.mxu0 0.0
      %4659 = vmatpush1.msra.mxu0 0.0
      %4660 = vmatprep.subr.mxu0 0.0
      %4661 = vmatpush1.msra.mxu0 0.0
      %4662 = vmatprep.subr.mxu0 0.0
      %4663 = vmatpush1.msra.mxu0 0.0
      %4664 = vmatprep.subr.mxu0 0.0
      %4665 = vmatpush1.msra.mxu0 0.0
      %4666 = vmatprep.subr.mxu0 0.0
      %4667 = vmatpush1.msra.mxu0 0.0
      %4668 = vmatprep.subr.mxu0 0.0
      %4669 = vmatpush1.msra.mxu0 0.0
      %4670 = vmatprep.subr.mxu0 0.0
      %4671 = vmatpush1.msra.mxu0 0.0
      %4672 = vmatprep.subr.mxu0 0.0
      %4673 = vmatpush1.msra.mxu0 0.0
      %4674 = vmatprep.subr.mxu0 0.0
      %4675 = vmatpush1.msra.mxu0 0.0
      %4676 = vmatprep.subr.mxu0 0.0
      %4677 = vmatpush1.msra.mxu0 0.0
      %4678 = vmatprep.subr.mxu0 0.0
      %4679 = vmatpush1.msra.mxu0 0.0
      %4680 = vmatprep.subr.mxu0 0.0
      %4681 = vmatpush1.msra.mxu0 0.0
      %4682 = vmatprep.subr.mxu0 0.0
      %4683 = vmatpush1.msra.mxu0 0.0
      %4684 = vmatprep.subr.mxu0 0.0
      %4685 = vmatpush1.msra.mxu0 0.0
      %4686 = vmatprep.subr.mxu0 0.0
      %4687 = vmatpush1.msra.mxu0 0.0
      %4688 = vmatprep.subr.mxu0 0.0
      %4689 = vmatpush1.msra.mxu0 0.0
      %4690 = vmatprep.mubr.f32.mxu0 0.0
      %4691 = vmatmul.mubr.f32.gmra.mrb[0].mxu0 %v469
      %v4692 = vpop.f32.mrb[0].mxu0
      %v4693 = vadd.f32 %v4620, %v4692
      %v4694 = vpop.f32.mrb[0].mxu0
      %4695 = vdwg.mxu0
      %v4696 = vld [vmem:[%s223 + $0x4] sm:$0xf]
      %4698 = vrot.lane.b32.xlu0 %v4696, 16
      %v4699 = vpop.permute.xlu0 %4698
      %v4700 = vsel %vm246, %v4699, 0
      %4702 = vmatprep.subr.mxu0 0.0
      %4703 = vmatpush1.msra.mxu0 %v240
      %4704 = vmatprep.subr.mxu0 0.0
      %4705 = vmatpush1.msra.mxu0 %v241
      %4706 = vmatprep.subr.mxu0 0.0
      %4707 = vmatpush1.msra.mxu0 0.0
      %4708 = vmatprep.subr.mxu0 0.0
      %4709 = vmatpush1.msra.mxu0 0.0
      %4710 = vmatprep.subr.mxu0 0.0
      %4711 = vmatpush1.msra.mxu0 0.0
      %4712 = vmatprep.subr.mxu0 0.0
      %4713 = vmatpush1.msra.mxu0 0.0
      %4714 = vmatprep.subr.mxu0 0.0
      %4715 = vmatpush1.msra.mxu0 0.0
      %4716 = vmatprep.subr.mxu0 0.0
      %4717 = vmatpush1.msra.mxu0 0.0
      %4718 = vmatprep.subr.mxu0 0.0
      %4719 = vmatpush1.msra.mxu0 0.0
      %4720 = vmatprep.subr.mxu0 0.0
      %4721 = vmatpush1.msra.mxu0 0.0
      %4722 = vmatprep.subr.mxu0 0.0
      %4723 = vmatpush1.msra.mxu0 0.0
      %4724 = vmatprep.subr.mxu0 0.0
      %4725 = vmatpush1.msra.mxu0 0.0
      %4726 = vmatprep.subr.mxu0 0.0
      %4727 = vmatpush1.msra.mxu0 0.0
      %4728 = vmatprep.subr.mxu0 0.0
      %4729 = vmatpush1.msra.mxu0 0.0
      %4730 = vmatprep.subr.mxu0 0.0
      %4731 = vmatpush1.msra.mxu0 0.0
      %4732 = vmatprep.subr.mxu0 0.0
      %4733 = vmatpush1.msra.mxu0 0.0
      %4734 = vmatprep.subr.mxu0 0.0
      %4735 = vmatpush1.msra.mxu0 0.0
      %4736 = vmatprep.subr.mxu0 0.0
      %4737 = vmatpush1.msra.mxu0 0.0
      %4738 = vmatprep.subr.mxu0 0.0
      %4739 = vmatpush1.msra.mxu0 0.0
      %4740 = vmatprep.subr.mxu0 0.0
      %4741 = vmatpush1.msra.mxu0 0.0
      %4742 = vmatprep.subr.mxu0 0.0
      %4743 = vmatpush1.msra.mxu0 0.0
      %4744 = vmatprep.subr.mxu0 0.0
      %4745 = vmatpush1.msra.mxu0 0.0
      %4746 = vmatprep.subr.mxu0 0.0
      %4747 = vmatpush1.msra.mxu0 0.0
      %4748 = vmatprep.subr.mxu0 0.0
      %4749 = vmatpush1.msra.mxu0 0.0
      %4750 = vmatprep.subr.mxu0 0.0
      %4751 = vmatpush1.msra.mxu0 0.0
      %4752 = vmatprep.subr.mxu0 0.0
      %4753 = vmatpush1.msra.mxu0 0.0
      %4754 = vmatprep.subr.mxu0 0.0
      %4755 = vmatpush1.msra.mxu0 0.0
      %4756 = vmatprep.subr.mxu0 0.0
      %4757 = vmatpush1.msra.mxu0 0.0
      %4758 = vmatprep.subr.mxu0 0.0
      %4759 = vmatpush1.msra.mxu0 0.0
      %4760 = vmatprep.subr.mxu0 0.0
      %4761 = vmatpush1.msra.mxu0 0.0
      %4762 = vmatprep.subr.mxu0 0.0
      %4763 = vmatpush1.msra.mxu0 0.0
      %4764 = vmatprep.subr.mxu0 0.0
      %4765 = vmatpush1.msra.mxu0 0.0
      %4766 = vmatprep.mubr.f32.mxu0 0.0
      %4767 = vmatmul.mubr.f32.gmra.mrb[0].mxu0 %v4700
      %v4768 = vpop.f32.mrb[0].mxu0
      %v4769 = vadd.f32 0.0, %v4768
      %v4770 = vpop.f32.mrb[0].mxu0
      %4771 = vdwg.mxu0
      %v4773 = vsel %vm394, %v4769, 0
      %4775 = vmatprep.subr.mxu0 0.0
      %4776 = vmatpush1.msra.mxu0 %v4773
      %4777 = vmatprep.subr.mxu0 0.0
      %4778 = vmatpush1.msra.mxu0 0.0
      %4779 = vmatprep.subr.mxu0 0.0
      %4780 = vmatpush1.msra.mxu0 0.0
      %4781 = vmatprep.subr.mxu0 0.0
      %4782 = vmatpush1.msra.mxu0 0.0
      %4783 = vmatprep.subr.mxu0 0.0
      %4784 = vmatpush1.msra.mxu0 0.0
      %4785 = vmatprep.subr.mxu0 0.0
      %4786 = vmatpush1.msra.mxu0 0.0
      %4787 = vmatprep.subr.mxu0 0.0
      %4788 = vmatpush1.msra.mxu0 0.0
      %4789 = vmatprep.subr.mxu0 0.0
      %4790 = vmatpush1.msra.mxu0 0.0
      %4791 = vmatprep.subr.mxu0 0.0
      %4792 = vmatpush1.msra.mxu0 0.0
      %4793 = vmatprep.subr.mxu0 0.0
      %4794 = vmatpush1.msra.mxu0 0.0
      %4795 = vmatprep.subr.mxu0 0.0
      %4796 = vmatpush1.msra.mxu0 0.0
      %4797 = vmatprep.subr.mxu0 0.0
      %4798 = vmatpush1.msra.mxu0 0.0
      %4799 = vmatprep.subr.mxu0 0.0
      %4800 = vmatpush1.msra.mxu0 0.0
      %4801 = vmatprep.subr.mxu0 0.0
      %4802 = vmatpush1.msra.mxu0 0.0
      %4803 = vmatprep.subr.mxu0 0.0
      %4804 = vmatpush1.msra.mxu0 0.0
      %4805 = vmatprep.subr.mxu0 0.0
      %4806 = vmatpush1.msra.mxu0 0.0
      %4807 = vmatprep.subr.mxu0 0.0
      %4808 = vmatpush1.msra.mxu0 0.0
      %4809 = vmatprep.subr.mxu0 0.0
      %4810 = vmatpush1.msra.mxu0 0.0
      %4811 = vmatprep.subr.mxu0 0.0
      %4812 = vmatpush1.msra.mxu0 0.0
      %4813 = vmatprep.subr.mxu0 0.0
      %4814 = vmatpush1.msra.mxu0 0.0
      %4815 = vmatprep.subr.mxu0 0.0
      %4816 = vmatpush1.msra.mxu0 0.0
      %4817 = vmatprep.subr.mxu0 0.0
      %4818 = vmatpush1.msra.mxu0 0.0
      %4819 = vmatprep.subr.mxu0 0.0
      %4820 = vmatpush1.msra.mxu0 0.0
      %4821 = vmatprep.subr.mxu0 0.0
      %4822 = vmatpush1.msra.mxu0 0.0
      %4823 = vmatprep.subr.mxu0 0.0
      %4824 = vmatpush1.msra.mxu0 0.0
      %4825 = vmatprep.subr.mxu0 0.0
      %4826 = vmatpush1.msra.mxu0 0.0
      %4827 = vmatprep.subr.mxu0 0.0
      %4828 = vmatpush1.msra.mxu0 0.0
      %4829 = vmatprep.subr.mxu0 0.0
      %4830 = vmatpush1.msra.mxu0 0.0
      %4831 = vmatprep.subr.mxu0 0.0
      %4832 = vmatpush1.msra.mxu0 0.0
      %4833 = vmatprep.subr.mxu0 0.0
      %4834 = vmatpush1.msra.mxu0 0.0
      %4835 = vmatprep.subr.mxu0 0.0
      %4836 = vmatpush1.msra.mxu0 0.0
      %4837 = vmatprep.subr.mxu0 0.0
      %4838 = vmatpush1.msra.mxu0 0.0
      %4839 = vmatprep.mubr.f32.mxu0 0.0
      %4840 = vmatmul.mubr.f32.gmra.mrb[0].mxu0 %v619
      %v4841 = vpop.f32.mrb[0].mxu0
      %v4842 = vadd.f32 0.0, %v4841
      %v4843 = vpop.f32.mrb[0].mxu0
      %4844 = vdwg.mxu0
      %v4845 = vadd.f32 %v4693, %v4842
      %4846 = vmatprep.subr.mxu0 0.0
      %4847 = vmatpush1.msra.mxu0 %v243
      %4848 = vmatprep.subr.mxu0 0.0
      %4849 = vmatpush1.msra.mxu0 %v244
      %4850 = vmatprep.subr.mxu0 0.0
      %4851 = vmatpush1.msra.mxu0 0.0
      %4852 = vmatprep.subr.mxu0 0.0
      %4853 = vmatpush1.msra.mxu0 0.0
      %4854 = vmatprep.subr.mxu0 0.0
      %4855 = vmatpush1.msra.mxu0 0.0
      %4856 = vmatprep.subr.mxu0 0.0
      %4857 = vmatpush1.msra.mxu0 0.0
      %4858 = vmatprep.subr.mxu0 0.0
      %4859 = vmatpush1.msra.mxu0 0.0
      %4860 = vmatprep.subr.mxu0 0.0
      %4861 = vmatpush1.msra.mxu0 0.0
      %4862 = vmatprep.subr.mxu0 0.0
      %4863 = vmatpush1.msra.mxu0 0.0
      %4864 = vmatprep.subr.mxu0 0.0
      %4865 = vmatpush1.msra.mxu0 0.0
      %4866 = vmatprep.subr.mxu0 0.0
      %4867 = vmatpush1.msra.mxu0 0.0
      %4868 = vmatprep.subr.mxu0 0.0
      %4869 = vmatpush1.msra.mxu0 0.0
      %4870 = vmatprep.subr.mxu0 0.0
      %4871 = vmatpush1.msra.mxu0 0.0
      %4872 = vmatprep.subr.mxu0 0.0
      %4873 = vmatpush1.msra.mxu0 0.0
      %4874 = vmatprep.subr.mxu0 0.0
      %4875 = vmatpush1.msra.mxu0 0.0
      %4876 = vmatprep.subr.mxu0 0.0
      %4877 = vmatpush1.msra.mxu0 0.0
      %4878 = vmatprep.subr.mxu0 0.0
      %4879 = vmatpush1.msra.mxu0 0.0
      %4880 = vmatprep.subr.mxu0 0.0
      %4881 = vmatpush1.msra.mxu0 0.0
      %4882 = vmatprep.subr.mxu0 0.0
      %4883 = vmatpush1.msra.mxu0 0.0
      %4884 = vmatprep.subr.mxu0 0.0
      %4885 = vmatpush1.msra.mxu0 0.0
      %4886 = vmatprep.subr.mxu0 0.0
      %4887 = vmatpush1.msra.mxu0 0.0
      %4888 = vmatprep.subr.mxu0 0.0
      %4889 = vmatpush1.msra.mxu0 0.0
      %4890 = vmatprep.subr.mxu0 0.0
      %4891 = vmatpush1.msra.mxu0 0.0
      %4892 = vmatprep.subr.mxu0 0.0
      %4893 = vmatpush1.msra.mxu0 0.0
      %4894 = vmatprep.subr.mxu0 0.0
      %4895 = vmatpush1.msra.mxu0 0.0
      %4896 = vmatprep.subr.mxu0 0.0
      %4897 = vmatpush1.msra.mxu0 0.0
      %4898 = vmatprep.subr.mxu0 0.0
      %4899 = vmatpush1.msra.mxu0 0.0
      %4900 = vmatprep.subr.mxu0 0.0
      %4901 = vmatpush1.msra.mxu0 0.0
      %4902 = vmatprep.subr.mxu0 0.0
      %4903 = vmatpush1.msra.mxu0 0.0
      %4904 = vmatprep.subr.mxu0 0.0
      %4905 = vmatpush1.msra.mxu0 0.0
      %4906 = vmatprep.subr.mxu0 0.0
      %4907 = vmatpush1.msra.mxu0 0.0
      %4908 = vmatprep.subr.mxu0 0.0
      %4909 = vmatpush1.msra.mxu0 0.0
      %4910 = vmatprep.mubr.f32.mxu0 0.0
      %4911 = vmatmul.mubr.f32.gmra.mrb[0].mxu0 %v4700
      %v4912 = vpop.f32.mrb[0].mxu0
      %v4913 = vadd.f32 0.0, %v4912
      %v4914 = vpop.f32.mrb[0].mxu0
      %4915 = vdwg.mxu0
      %v4917 = vsel %vm394, %v4913, 0
      %4919 = vmatprep.subr.mxu0 0.0
      %4920 = vmatpush1.msra.mxu0 %v4917
      %4921 = vmatprep.subr.mxu0 0.0
      %4922 = vmatpush1.msra.mxu0 0.0
      %4923 = vmatprep.subr.mxu0 0.0
      %4924 = vmatpush1.msra.mxu0 0.0
      %4925 = vmatprep.subr.mxu0 0.0
      %4926 = vmatpush1.msra.mxu0 0.0
      %4927 = vmatprep.subr.mxu0 0.0
      %4928 = vmatpush1.msra.mxu0 0.0
      %4929 = vmatprep.subr.mxu0 0.0
      %4930 = vmatpush1.msra.mxu0 0.0
      %4931 = vmatprep.subr.mxu0 0.0
      %4932 = vmatpush1.msra.mxu0 0.0
      %4933 = vmatprep.subr.mxu0 0.0
      %4934 = vmatpush1.msra.mxu0 0.0
      %4935 = vmatprep.subr.mxu0 0.0
      %4936 = vmatpush1.msra.mxu0 0.0
      %4937 = vmatprep.subr.mxu0 0.0
      %4938 = vmatpush1.msra.mxu0 0.0
      %4939 = vmatprep.subr.mxu0 0.0
      %4940 = vmatpush1.msra.mxu0 0.0
      %4941 = vmatprep.subr.mxu0 0.0
      %4942 = vmatpush1.msra.mxu0 0.0
      %4943 = vmatprep.subr.mxu0 0.0
      %4944 = vmatpush1.msra.mxu0 0.0
      %4945 = vmatprep.subr.mxu0 0.0
      %4946 = vmatpush1.msra.mxu0 0.0
      %4947 = vmatprep.subr.mxu0 0.0
      %4948 = vmatpush1.msra.mxu0 0.0
      %4949 = vmatprep.subr.mxu0 0.0
      %4950 = vmatpush1.msra.mxu0 0.0
      %4951 = vmatprep.subr.mxu0 0.0
      %4952 = vmatpush1.msra.mxu0 0.0
      %4953 = vmatprep.subr.mxu0 0.0
      %4954 = vmatpush1.msra.mxu0 0.0
      %4955 = vmatprep.subr.mxu0 0.0
      %4956 = vmatpush1.msra.mxu0 0.0
      %4957 = vmatprep.subr.mxu0 0.0
      %4958 = vmatpush1.msra.mxu0 0.0
      %4959 = vmatprep.subr.mxu0 0.0
      %4960 = vmatpush1.msra.mxu0 0.0
      %4961 = vmatprep.subr.mxu0 0.0
      %4962 = vmatpush1.msra.mxu0 0.0
      %4963 = vmatprep.subr.mxu0 0.0
      %4964 = vmatpush1.msra.mxu0 0.0
      %4965 = vmatprep.subr.mxu0 0.0
      %4966 = vmatpush1.msra.mxu0 0.0
      %4967 = vmatprep.subr.mxu0 0.0
      %4968 = vmatpush1.msra.mxu0 0.0
      %4969 = vmatprep.subr.mxu0 0.0
      %4970 = vmatpush1.msra.mxu0 0.0
      %4971 = vmatprep.subr.mxu0 0.0
      %4972 = vmatpush1.msra.mxu0 0.0
      %4973 = vmatprep.subr.mxu0 0.0
      %4974 = vmatpush1.msra.mxu0 0.0
      %4975 = vmatprep.subr.mxu0 0.0
      %4976 = vmatpush1.msra.mxu0 0.0
      %4977 = vmatprep.subr.mxu0 0.0
      %4978 = vmatpush1.msra.mxu0 0.0
      %4979 = vmatprep.subr.mxu0 0.0
      %4980 = vmatpush1.msra.mxu0 0.0
      %4981 = vmatprep.subr.mxu0 0.0
      %4982 = vmatpush1.msra.mxu0 0.0
      %4983 = vmatprep.mubr.f32.mxu0 0.0
      %4984 = vmatmul.mubr.f32.gmra.mrb[0].mxu0 %v766
      %v4985 = vpop.f32.mrb[0].mxu0
      %v4986 = vadd.f32 0.0, %v4985
      %v4987 = vpop.f32.mrb[0].mxu0
      %4988 = vdwg.mxu0
      %v4989 = vadd.f32 %v4845, %v4986
      %v4990 = vadd.f32 %v4989, %v845
      %4992 = vrot.lane.b32.xlu0 %v4990, 56
      %v4993 = vpop.permute.xlu0 %4992
      %vm4995 = vcmask 523712
      %4996 = vst.msk [vmem:[%s231] sm:$0xff] %vm4995, %v4993
      %p4997 = scmp.lt.s32.totalorder %s19, 1
      %s4998 = scalar_select %p4997, %s19, 1
      %p4999 = scmp.lt.s32.totalorder %s20, 0
      %s5000 = scalar_select %p4999, %s20, 0
      %s5001 = sadd.s32 %s5000, %s4998
      %s5002 = smul.addr %s5001, 8
      %s5003 = scalar_lea.vmem %s4, %s5002
      // Predicated region
      $region37: #{downsample_forward.1} parent=35 // pred_check
        %p5004 = pneg %p138
      $region38: #{downsample_forward.1} parent=35 // pred_check_branch
        %5006 = sbr.rel (%p5004) target = $region40
      $region39: #{downsample_forward.1} parent=35 // pred_region
        _
      $region40: #{downsample_forward.1} parent=35 // pred_fallthru
        _
    $region36: #{downsample_forward.1} parent=5 // pred_fallthru
      _
    %p5007 = scmp.le.s32.totalorder 2, %s10
    // Predicated region
    $region41: #{downsample_forward.1} parent=5 // pred_check
      %p5008 = pneg %p5007
    $region42: #{downsample_forward.1} parent=5 // pred_check_branch
      %5010 = sbr.rel (%p5008) target = $region44
    $region43: #{downsample_forward.1} parent=5 // pred_region
      %s5011 = ssub.s32 %s10, 2
      // Predicated region
      $region45: #{downsample_forward.1} parent=43 // pred_check
        %p5012 = pneg %p144
      $region46: #{downsample_forward.1} parent=43 // pred_check_branch
        %5014 = sbr.rel (%p5012) target = $region48
      $region47: #{downsample_forward.1} parent=43 // pred_region
        %p5015 = scmp.lt.s32.totalorder %s21, 1
        %s5016 = scalar_select %p5015, %s21, 1
        %p5017 = scmp.lt.s32.totalorder %s22, 0
        %s5018 = scalar_select %p5017, %s22, 0
        %s5019 = sadd.s32 %s5018, %s5016
        %s5020 = smul.addr %s5019, 8
        %s5021 = scalar_lea.vmem %s4, %s5020
      $region48: #{downsample_forward.1} parent=43 // pred_fallthru
        _
    $region44: #{downsample_forward.1} parent=5 // pred_fallthru
      _
  $region6: #{downsample_forward.1} parent=0 // loop_footer
    %s14 = sadd.s32 1, %s10
  $region7: #{downsample_forward.1} parent=0 // loop_footer_branch
    %9 = sbr.rel target = $region3
  $region8: #{downsample_forward.1} parent=0 // loop_exit
    _

</llo_original>
